<compile_context>
chip_gen: v6e
topology: v6e:2x2x1
jax: 0.10.0
libtpu: 0.0.40
codegen_flags: <defaults>
</compile_context>

<pallas_src>
import functools
import math

import jax
import jax.numpy as jnp
from jax.experimental import pallas as pl
from jax.experimental.pallas import tpu as pltpu

_VMEM_LIMIT = 32 * 1024 * 1024  # explicit scoped-VMEM cap, safe on v5e/v6e/v7x


# ----------------------------------------------------------------------------
# Kernels
# ----------------------------------------------------------------------------
def _mha_ln_kernel(*refs, num_heads, head_dim, eps, self_attn):
    """Fused MHA + output projection + residual + LayerNorm on a (Bt,Sq,D) tile.

    Projections are full-width matmuls on the flattened (Bt*Sq, D) row tile;
    per-head attention is dot_general batched over Bt; per-head contexts are
    concatenated once and hit the MXU with a single full-K output projection.
    """
    if self_attn:
        (q_ref, wqkv_ref, bqkv_ref, wo_ref, bo_ref, g_ref, beta_ref,
         o_ref) = refs
        kv_ref = q_ref
    else:
        (q_ref, kv_ref, wqkv_ref, bqkv_ref, wo_ref, bo_ref, g_ref, beta_ref,
         o_ref) = refs

    bt, sq, d_model = q_ref.shape
    sk = kv_ref.shape[1]
    hd = num_heads * head_dim

    xq = q_ref[...].reshape(bt * sq, d_model)        # activation dtype (bf16)
    xq_b = xq.astype(jnp.bfloat16)
    wqkv = wqkv_ref[...]                             # (D, 3*HD) bf16
    bqkv = bqkv_ref[...]                             # (1, 3*HD) f32

    if self_attn:
        # Single fused QKV projection (N = 3*HD, lane dense).
        qkv = jnp.dot(xq_b, wqkv, preferred_element_type=jnp.float32) + bqkv
        Q = qkv[:, :hd]
        K = qkv[:, hd:2 * hd].reshape(bt, sk, hd)
        V = qkv[:, 2 * hd:].reshape(bt, sk, hd)
    else:
        Q = (jnp.dot(xq_b, wqkv[:, :hd],
                     preferred_element_type=jnp.float32) + bqkv[:, :hd])
        kv_b = kv_ref[...].reshape(bt * sk, d_model).astype(jnp.bfloat16)
        KV = (jnp.dot(kv_b, wqkv[:, hd:],
                      preferred_element_type=jnp.float32) + bqkv[:, hd:])
        K = KV[:, :hd].reshape(bt, sk, hd)
        V = KV[:, hd:].reshape(bt, sk, hd)

    # Fold the 1/sqrt(dk) score scale into Q once (single elementwise pass).
    inv_scale = 1.0 / math.sqrt(float(head_dim))
    Q = (Q * inv_scale).reshape(bt, sq, hd).astype(jnp.bfloat16)
    K = K.astype(jnp.bfloat16)
    V = V.astype(jnp.bfloat16)

    heads = []
    for h in range(num_heads):
        lo = h * head_dim
        hi = lo + head_dim
        qh = Q[:, :, lo:hi]                                   # (Bt, Sq, dk)
        kh = K[:, :, lo:hi]                                   # (Bt, Sk, dk)
        vh = V[:, :, lo:hi]                                   # (Bt, Sk, dk)
        s = jax.lax.dot_general(qh, kh, (((2,), (2,)), ((0,), (0,))),
                                preferred_element_type=jnp.float32)  # (Bt,Sq,Sk)
        m = jnp.max(s, axis=-1, keepdims=True)
        e = jnp.exp(s - m)
        p = e * pl.reciprocal(jnp.sum(e, axis=-1, keepdims=True), approx=True)
        oh = jax.lax.dot_general(p.astype(jnp.bfloat16), vh,
                                 (((2,), (1,)), ((0,), (0,))),
                                 preferred_element_type=jnp.float32)  # (Bt,Sq,dk)
        heads.append(oh.astype(jnp.bfloat16))

    # One full-K output projection instead of H partial-K matmuls + fp32 adds.
    ctx = jnp.concatenate(heads, axis=-1).reshape(bt * sq, hd)   # (rows, HD)
    proj = (jnp.dot(ctx, wo_ref[...], preferred_element_type=jnp.float32)
            + bo_ref[...])

    # Residual + LayerNorm epilogue (fp32 stats, biased variance, eps=1e-5).
    s = xq.astype(jnp.float32) + proj
    mean = jnp.mean(s, axis=-1, keepdims=True)
    var = jnp.mean(jnp.square(s - mean), axis=-1, keepdims=True)
    y = (s - mean) * jax.lax.rsqrt(var + eps) * g_ref[...] + beta_ref[...]
    o_ref[...] = y.reshape(bt, sq, d_model).astype(o_ref.dtype)


def _ffn_ln_kernel(x_ref, w1_ref, b1_ref, w2_ref, b2_ref, g_ref, beta_ref,
                   o_ref, *, eps):
    """Fused feed-forward + residual + LayerNorm on one (TM, D) row tile."""
    x = x_ref[...]                                            # (TM, D) bf16
    h = jnp.dot(x.astype(jnp.bfloat16), w1_ref[...],
                preferred_element_type=jnp.float32) + b1_ref[...]
    h = jnp.maximum(h, 0.0)                                   # ReLU
    y = jnp.dot(h.astype(jnp.bfloat16), w2_ref[...],
                preferred_element_type=jnp.float32) + b2_ref[...]
    s = x.astype(jnp.float32) + y
    mean = jnp.mean(s, axis=-1, keepdims=True)
    var = jnp.mean(jnp.square(s - mean), axis=-1, keepdims=True)
    out = (s - mean) * jax.lax.rsqrt(var + eps) * g_ref[...] + beta_ref[...]
    o_ref[...] = out.astype(o_ref.dtype)


def _linear_softmax_kernel(x_ref, w_ref, b_ref, o_ref):
    """Fused final linear + softmax(last axis) on one (TM, D) row tile."""
    y = jnp.dot(x_ref[...].astype(jnp.bfloat16), w_ref[...],
                preferred_element_type=jnp.float32) + b_ref[...]
    m = jnp.max(y, axis=-1, keepdims=True)
    e = jnp.exp(y - m)
    # exact fp32 divide so output rows sum to 1
    o_ref[...] = (e / jnp.sum(e, axis=-1, keepdims=True)).astype(o_ref.dtype)


# ----------------------------------------------------------------------------
# Tiling helpers
# ----------------------------------------------------------------------------
def _pick_batch_tile(batch, seq, target_rows=256):
    """Largest divisor Bt of `batch` with Bt*seq <= target_rows, keeping at
    least two grid steps when possible (pipeline overlap / v7x megacore)."""
    best = 1
    for cand in range(1, batch + 1):
        if batch % cand:
            continue
        if cand * seq > target_rows:
            break
        if cand == 1 or batch // cand >= 2:
            best = cand
    return best


def _tile_m(m, target=512):
    """Largest row tile <= target that divides m (multiple of 8 if possible)."""
    if m <= target:
        return m
    for cand in range(target, 7, -8):
        if m % cand == 0:
            return cand
    return m  # TODO(synk): no divisor <= target; whole-M tile (VMEM risk for huge M)


# ----------------------------------------------------------------------------
# pallas_call wrappers
# ----------------------------------------------------------------------------
def fused_mha_layernorm(q, kv, p, gamma, beta, num_heads, eps=1e-5):
    B, Sq, D = q.shape
    Sk = kv.shape[1]
    HD3 = p["w_qkv"].shape[1]
    HD = HD3 // 3
    dk = HD // num_heads
    self_attn = q is kv
    Bt = _pick_batch_tile(B, max(Sq, Sk))

    kernel = functools.partial(_mha_ln_kernel, num_heads=num_heads,
                               head_dim=dk, eps=eps, self_attn=self_attn)

    q_spec = pl.BlockSpec((Bt, Sq, D), lambda b: (b, 0, 0))
    kv_spec = pl.BlockSpec((Bt, Sk, D), lambda b: (b, 0, 0))
    wqkv_spec = pl.BlockSpec((D, HD3), lambda b: (0, 0))
    bqkv_spec = pl.BlockSpec((1, HD3), lambda b: (0, 0))
    wo_spec = pl.BlockSpec((HD, D), lambda b: (0, 0))
    vec_spec = pl.BlockSpec((1, D), lambda b: (0, 0))

    if self_attn:
        in_specs = [q_spec, wqkv_spec, bqkv_spec, wo_spec, vec_spec,
                    vec_spec, vec_spec]
        args = (q, p["w_qkv"], p["b_qkv"], p["wo"], p["bo"], gamma, beta)
    else:
        in_specs = [q_spec, kv_spec, wqkv_spec, bqkv_spec, wo_spec, vec_spec,
                    vec_spec, vec_spec]
        args = (q, kv, p["w_qkv"], p["b_qkv"], p["wo"], p["bo"], gamma, beta)

    # Advisory cost estimate for the XLA scheduler.
    flops = 4.0 * B * num_heads * Sq * Sk * dk + 2.0 * B * Sq * HD * D
    if self_attn:
        flops += 2.0 * B * Sq * D * HD3
    else:
        flops += 2.0 * B * Sq * D * HD + 4.0 * B * Sk * D * HD
    trans = B * num_heads * Sq * Sk + B * Sq
    bytes_acc = (q.size * q.dtype.itemsize
                 + (0 if self_attn else kv.size * kv.dtype.itemsize)
                 + B * Sq * D * q.dtype.itemsize
                 + sum(int(a.size) * a.dtype.itemsize
                       for a in (p["w_qkv"], p["b_qkv"], p["wo"], p["bo"],
                                 gamma, beta)))

    return pl.pallas_call(
        kernel,
        out_shape=jax.ShapeDtypeStruct((B, Sq, D), q.dtype),
        grid=(B // Bt,),
        in_specs=in_specs,
        out_specs=pl.BlockSpec((Bt, Sq, D), lambda b: (b, 0, 0)),
        compiler_params=pltpu.CompilerParams(
            dimension_semantics=("parallel",),
            vmem_limit_bytes=_VMEM_LIMIT),
        cost_estimate=pl.CostEstimate(flops=int(flops),
                                      transcendentals=int(trans),
                                      bytes_accessed=int(bytes_acc)),
    )(*args)


def fused_ffn_layernorm(x, p, gamma, beta, eps=1e-5):
    B, S, D = x.shape
    M = B * S
    F = p["w1"].shape[1]
    TM = _tile_m(M)

    flops = 4.0 * M * D * F
    bytes_acc = (2 * M * D * x.dtype.itemsize
                 + sum(int(a.size) * a.dtype.itemsize
                       for a in (p["w1"], p["b1"], p["w2"], p["b2"],
                                 gamma, beta)))

    out = pl.pallas_call(
        functools.partial(_ffn_ln_kernel, eps=eps),
        out_shape=jax.ShapeDtypeStruct((M, D), x.dtype),
        grid=(M // TM,),
        in_specs=[
            pl.BlockSpec((TM, D), lambda i: (i, 0)),
            pl.BlockSpec((D, F), lambda i: (0, 0)),
            pl.BlockSpec((1, F), lambda i: (0, 0)),
            pl.BlockSpec((F, D), lambda i: (0, 0)),
            pl.BlockSpec((1, D), lambda i: (0, 0)),
            pl.BlockSpec((1, D), lambda i: (0, 0)),
            pl.BlockSpec((1, D), lambda i: (0, 0)),
        ],
        out_specs=pl.BlockSpec((TM, D), lambda i: (i, 0)),
        compiler_params=pltpu.CompilerParams(
            dimension_semantics=("parallel",),
            vmem_limit_bytes=_VMEM_LIMIT),
        cost_estimate=pl.CostEstimate(flops=int(flops), transcendentals=0,
                                      bytes_accessed=int(bytes_acc)),
    )(x.reshape(M, D), p["w1"], p["b1"], p["w2"], p["b2"], gamma, beta)
    return out.reshape(B, S, D)


def fused_linear_softmax(x, w, b):
    B, S, D = x.shape
    M = B * S
    N = w.shape[1]
    TM = _tile_m(M)

    flops = 2.0 * M * D * N
    trans = M * N
    bytes_acc = (M * D * x.dtype.itemsize + M * N * 4
                 + int(w.size) * w.dtype.itemsize
                 + int(b.size) * b.dtype.itemsize)

    out = pl.pallas_call(
        _linear_softmax_kernel,
        out_shape=jax.ShapeDtypeStruct((M, N), jnp.float32),
        grid=(M // TM,),
        in_specs=[
            pl.BlockSpec((TM, D), lambda i: (i, 0)),
            pl.BlockSpec((D, N), lambda i: (0, 0)),
            pl.BlockSpec((1, N), lambda i: (0, 0)),
        ],
        out_specs=pl.BlockSpec((TM, N), lambda i: (i, 0)),
        compiler_params=pltpu.CompilerParams(
            dimension_semantics=("parallel",),
            vmem_limit_bytes=_VMEM_LIMIT),
        cost_estimate=pl.CostEstimate(flops=int(flops),
                                      transcendentals=int(trans),
                                      bytes_accessed=int(bytes_acc)),
    )(x.reshape(M, D), w, b)
    return out.reshape(B, S, N)


# ----------------------------------------------------------------------------
# Model glue (plain JAX): positional encoding, layer stacking
# ----------------------------------------------------------------------------
def position_encoding(seq_len, dim_model):
    pos = jnp.arange(seq_len, dtype=jnp.float32).reshape(1, -1, 1)
    dim = jnp.arange(dim_model, dtype=jnp.float32).reshape(1, 1, -1)
    phase = pos / (1e4 ** (dim / dim_model))
    even = (jnp.arange(dim_model).reshape(1, 1, -1) % 2) == 0
    return jnp.where(even, jnp.sin(phase), jnp.cos(phase))


def encoder_layer(x, p, num_heads):
    x = fused_mha_layernorm(x, x, p["attn"], p["ln1_g"], p["ln1_b"], num_heads)
    x = fused_ffn_layernorm(x, p["ffn"], p["ln2_g"], p["ln2_b"])
    return x


def decoder_layer(x, mem, p, num_heads):
    # TODO(synk): no causal mask in decoder self-attention (matches reference).
    x = fused_mha_layernorm(x, x, p["self_attn"], p["ln1_g"], p["ln1_b"],
                            num_heads)
    x = fused_mha_layernorm(x, mem, p["cross_attn"], p["ln2_g"], p["ln2_b"],
                            num_heads)
    x = fused_ffn_layernorm(x, p["ffn"], p["ln3_g"], p["ln3_b"])
    return x


def transformer_forward(src, tgt, params, *, num_heads):
    _, Ss, D = src.shape
    St = tgt.shape[1]
    # Inter-layer activations are carried in bf16 (halves HBM traffic);
    # matmul accumulation / LN stats / softmax stay fp32 inside the kernels.
    x = (src + position_encoding(Ss, D)).astype(jnp.bfloat16)
    for p in params["encoder"]:
        x = encoder_layer(x, p, num_heads)
    memory = x
    y = (tgt + position_encoding(St, D)).astype(jnp.bfloat16)
    for p in params["decoder"]:
        y = decoder_layer(y, memory, p, num_heads)
    return fused_linear_softmax(y, params["final_w"], params["final_b"])


# ----------------------------------------------------------------------------
# Deterministic parameter initialization
# (matmul weights stored in bf16; biases / LayerNorm params in fp32)
# ----------------------------------------------------------------------------
def _attn_params(key, D, H, dk, scale=0.05):
    HD = H * dk
    k = jax.random.split(key, 8)
    w = lambda kk, shp: (jax.random.normal(kk, shp, jnp.float32)
                         * scale).astype(jnp.bfloat16)
    b = lambda kk, shp: jax.random.normal(kk, shp, jnp.float32) * scale
    wq, wk, wv = w(k[0], (D, HD)), w(k[2], (D, HD)), w(k[4], (D, HD))
    bq, bk, bv = b(k[1], (1, HD)), b(k[3], (1, HD)), b(k[5], (1, HD))
    return {
        "w_qkv": jnp.concatenate([wq, wk, wv], axis=1),   # (D, 3*HD)
        "b_qkv": jnp.concatenate([bq, bk, bv], axis=1),   # (1, 3*HD)
        "wo": w(k[6], (HD, D)), "bo": b(k[7], (1, D)),
    }


def _ffn_params(key, D, F, scale=0.05):
    k = jax.random.split(key, 4)
    return {
        "w1": (jax.random.normal(k[0], (D, F), jnp.float32)
               * scale).astype(jnp.bfloat16),
        "b1": jax.random.normal(k[1], (1, F), jnp.float32) * scale,
        "w2": (jax.random.normal(k[2], (F, D), jnp.float32)
               * scale).astype(jnp.bfloat16),
        "b2": jax.random.normal(k[3], (1, D), jnp.float32) * scale,
    }


def init_params(key, num_enc, num_dec, D, H, F):
    dk = max(D // H, 1)
    params = {"encoder": [], "decoder": []}
    keys = jax.random.split(key, num_enc + num_dec + 1)
    ones = lambda: jnp.ones((1, D), jnp.float32)
    zeros = lambda: jnp.zeros((1, D), jnp.float32)
    for i in range(num_enc):
        k = jax.random.split(keys[i], 2)
        params["encoder"].append({
            "attn": _attn_params(k[0], D, H, dk),
            "ffn": _ffn_params(k[1], D, F),
            "ln1_g": ones(), "ln1_b": zeros(),
            "ln2_g": ones(), "ln2_b": zeros(),
        })
    for i in range(num_dec):
        k = jax.random.split(keys[num_enc + i], 3)
        params["decoder"].append({
            "self_attn": _attn_params(k[0], D, H, dk),
            "cross_attn": _attn_params(k[1], D, H, dk),
            "ffn": _ffn_params(k[2], D, F),
            "ln1_g": ones(), "ln1_b": zeros(),
            "ln2_g": ones(), "ln2_b": zeros(),
            "ln3_g": ones(), "ln3_b": zeros(),
        })
    kf = jax.random.split(keys[-1], 2)
    params["final_w"] = (jax.random.normal(kf[0], (D, D), jnp.float32)
                         * 0.05).astype(jnp.bfloat16)
    params["final_b"] = jax.random.normal(kf[1], (1, D), jnp.float32) * 0.05
    return params


# ----------------------------------------------------------------------------
if __name__ == "__main__":
    # Small, forward-consistent shapes (reference used (64,32,512)/(64,16,512)).
    B, S_SRC, S_TGT = 2, 8, 4
    D, H, F = 32, 4, 64
    NUM_ENC, NUM_DEC = 2, 2

    key = jax.random.PRNGKey(0)
    k_src, k_tgt, k_par = jax.random.split(key, 3)
    src = jax.random.uniform(k_src, (B, S_SRC, D), jnp.float32)
    tgt = jax.random.uniform(k_tgt, (B, S_TGT, D), jnp.float32)
    params = init_params(k_par, NUM_ENC, NUM_DEC, D, H, F)

    fwd = jax.jit(functools.partial(transformer_forward, num_heads=H))
    out = jax.block_until_ready(fwd(src, tgt, params))

    assert out.shape == (B, S_TGT, D)
    # decoder output is softmax over the last dim -> rows sum to 1
    assert bool(jnp.allclose(jnp.sum(out, axis=-1), 1.0, atol=1e-4))
    print("KERNEL_OK")
</pallas_src>

<mosaic_0001>
module attributes {stable_mosaic.version = 11 : i64} {
  func.func @_ffn_ln_kernel(%arg0: i32, %arg1: memref<16x32xbf16, #tpu.memory_space<vmem>>, %arg2: memref<32x64xbf16, #tpu.memory_space<vmem>>, %arg3: memref<1x64xf32, #tpu.memory_space<vmem>>, %arg4: memref<64x32xbf16, #tpu.memory_space<vmem>>, %arg5: memref<1x32xf32, #tpu.memory_space<vmem>>, %arg6: memref<1x32xf32, #tpu.memory_space<vmem>>, %arg7: memref<1x32xf32, #tpu.memory_space<vmem>>, %arg8: memref<16x32xbf16, #tpu.memory_space<vmem>>) attributes {dimension_semantics = [#tpu.dimension_semantics<parallel>], iteration_bounds = array<i64: 1>, scalar_prefetch = 0 : i64, scratch_operands = 0 : i64, tpu.core_type = #tpu.core_type<tc>, window_params = [{transform_indices = @transform_0, window_bounds = array<i64: 16, 32>}, {pipeline_mode = #tpu.pipeline_mode<synchronous>, transform_indices = @transform_1, window_bounds = array<i64: 32, 64>}, {pipeline_mode = #tpu.pipeline_mode<synchronous>, transform_indices = @transform_2, window_bounds = array<i64: 1, 64>}, {pipeline_mode = #tpu.pipeline_mode<synchronous>, transform_indices = @transform_3, window_bounds = array<i64: 64, 32>}, {pipeline_mode = #tpu.pipeline_mode<synchronous>, transform_indices = @transform_4, window_bounds = array<i64: 1, 32>}, {pipeline_mode = #tpu.pipeline_mode<synchronous>, transform_indices = @transform_5, window_bounds = array<i64: 1, 32>}, {pipeline_mode = #tpu.pipeline_mode<synchronous>, transform_indices = @transform_6, window_bounds = array<i64: 1, 32>}, {transform_indices = @transform_7, window_bounds = array<i64: 16, 32>}]} {
    %c0 = arith.constant 0 : index
    %c0_0 = arith.constant 0 : index
    %0 = vector.load %arg1[%c0, %c0_0] : memref<16x32xbf16, #tpu.memory_space<vmem>>, vector<16x32xbf16>
    %c0_1 = arith.constant 0 : index
    %c0_2 = arith.constant 0 : index
    %1 = vector.load %arg2[%c0_1, %c0_2] : memref<32x64xbf16, #tpu.memory_space<vmem>>, vector<32x64xbf16>
    %cst = arith.constant dense<0.000000e+00> : vector<16x64xf32>
    %2 = tpu.matmul %0, %1, %cst {dimension_numbers = #tpu.dot_dimension_numbers<[1], [0], [0], [1], [0, 0, 1, 1], [], []>} : vector<16x32xbf16>, vector<32x64xbf16>, vector<16x64xf32> -> vector<16x64xf32>
    %c0_3 = arith.constant 0 : index
    %c0_4 = arith.constant 0 : index
    %3 = vector.load %arg3[%c0_3, %c0_4] : memref<1x64xf32, #tpu.memory_space<vmem>>, vector<1x64xf32>
    %4 = vector.broadcast %3 : vector<1x64xf32> to vector<16x64xf32>
    %5 = arith.addf %2, %4 : vector<16x64xf32>
    %cst_5 = arith.constant 0.000000e+00 : f32
    %6 = vector.broadcast %cst_5 : f32 to vector<16x64xf32>
    %7 = arith.maximumf %5, %6 : vector<16x64xf32>
    %8 = arith.truncf %7 : vector<16x64xf32> to vector<16x64xbf16>
    %c0_6 = arith.constant 0 : index
    %c0_7 = arith.constant 0 : index
    %9 = vector.load %arg4[%c0_6, %c0_7] : memref<64x32xbf16, #tpu.memory_space<vmem>>, vector<64x32xbf16>
    %cst_8 = arith.constant dense<0.000000e+00> : vector<16x32xf32>
    %10 = tpu.matmul %8, %9, %cst_8 {dimension_numbers = #tpu.dot_dimension_numbers<[1], [0], [0], [1], [0, 0, 1, 1], [], []>} : vector<16x64xbf16>, vector<64x32xbf16>, vector<16x32xf32> -> vector<16x32xf32>
    %c0_9 = arith.constant 0 : index
    %c0_10 = arith.constant 0 : index
    %11 = vector.load %arg5[%c0_9, %c0_10] : memref<1x32xf32, #tpu.memory_space<vmem>>, vector<1x32xf32>
    %12 = vector.broadcast %11 : vector<1x32xf32> to vector<16x32xf32>
    %13 = arith.addf %10, %12 : vector<16x32xf32>
    %14 = arith.extf %0 : vector<16x32xbf16> to vector<16x32xf32>
    %15 = arith.addf %14, %13 : vector<16x32xf32>
    %cst_11 = arith.constant dense<0.000000e+00> : vector<16xf32>
    %16 = vector.multi_reduction <add>, %15, %cst_11 [1] : vector<16x32xf32> to vector<16xf32>
    %17 = vector.shape_cast %16 : vector<16xf32> to vector<16x1xf32>
    %cst_12 = arith.constant 3.200000e+01 : f32
    %18 = vector.broadcast %cst_12 : f32 to vector<16x1xf32>
    %19 = arith.divf %17, %18 : vector<16x1xf32>
    %20 = vector.broadcast %19 : vector<16x1xf32> to vector<16x32xf32>
    %21 = arith.subf %15, %20 : vector<16x32xf32>
    %22 = arith.mulf %21, %21 : vector<16x32xf32>
    %cst_13 = arith.constant dense<0.000000e+00> : vector<16xf32>
    %23 = vector.multi_reduction <add>, %22, %cst_13 [1] : vector<16x32xf32> to vector<16xf32>
    %24 = vector.shape_cast %23 : vector<16xf32> to vector<16x1xf32>
    %cst_14 = arith.constant 3.200000e+01 : f32
    %25 = vector.broadcast %cst_14 : f32 to vector<16x1xf32>
    %26 = arith.divf %24, %25 : vector<16x1xf32>
    %27 = vector.broadcast %19 : vector<16x1xf32> to vector<16x32xf32>
    %28 = arith.subf %15, %27 : vector<16x32xf32>
    %cst_15 = arith.constant 9.99999974E-6 : f32
    %29 = vector.broadcast %cst_15 : f32 to vector<16x1xf32>
    %30 = arith.addf %26, %29 : vector<16x1xf32>
    %31 = math.rsqrt %30 : vector<16x1xf32>
    %32 = vector.broadcast %31 : vector<16x1xf32> to vector<16x32xf32>
    %33 = arith.mulf %28, %32 : vector<16x32xf32>
    %c0_16 = arith.constant 0 : index
    %c0_17 = arith.constant 0 : index
    %34 = vector.load %arg6[%c0_16, %c0_17] : memref<1x32xf32, #tpu.memory_space<vmem>>, vector<1x32xf32>
    %35 = vector.broadcast %34 : vector<1x32xf32> to vector<16x32xf32>
    %36 = arith.mulf %33, %35 : vector<16x32xf32>
    %c0_18 = arith.constant 0 : index
    %c0_19 = arith.constant 0 : index
    %37 = vector.load %arg7[%c0_18, %c0_19] : memref<1x32xf32, #tpu.memory_space<vmem>>, vector<1x32xf32>
    %38 = vector.broadcast %37 : vector<1x32xf32> to vector<16x32xf32>
    %39 = arith.addf %36, %38 : vector<16x32xf32>
    %40 = arith.truncf %39 : vector<16x32xf32> to vector<16x32xbf16>
    %c0_20 = arith.constant 0 : index
    %c0_21 = arith.constant 0 : index
    %41 = vector.load %arg8[%c0_20, %c0_21] : memref<16x32xbf16, #tpu.memory_space<vmem>>, vector<16x32xbf16>
    tpu.vector_store %arg8[%c0_20, %c0_21], %40 {strides = array<i32>} : memref<16x32xbf16, #tpu.memory_space<vmem>>, vector<16x32xbf16>,
    return
  }
  func.func @transform_0(%arg0: i32) -> (i32, i32) {
    %c0_i32 = arith.constant 0 : i32
    %c0_i32_0 = arith.constant 0 : i32
    return %arg0, %c0_i32 : i32, i32
  }
  func.func @transform_1(%arg0: i32) -> (i32, i32) {
    %c0_i32 = arith.constant 0 : i32
    %c0_i32_0 = arith.constant 0 : i32
    %c0_i32_1 = arith.constant 0 : i32
    return %c0_i32, %c0_i32_0 : i32, i32
  }
  func.func @transform_2(%arg0: i32) -> (i32, i32) {
    %c0_i32 = arith.constant 0 : i32
    %c0_i32_0 = arith.constant 0 : i32
    %c0_i32_1 = arith.constant 0 : i32
    return %c0_i32, %c0_i32_0 : i32, i32
  }
  func.func @transform_3(%arg0: i32) -> (i32, i32) {
    %c0_i32 = arith.constant 0 : i32
    %c0_i32_0 = arith.constant 0 : i32
    %c0_i32_1 = arith.constant 0 : i32
    return %c0_i32, %c0_i32_0 : i32, i32
  }
  func.func @transform_4(%arg0: i32) -> (i32, i32) {
    %c0_i32 = arith.constant 0 : i32
    %c0_i32_0 = arith.constant 0 : i32
    %c0_i32_1 = arith.constant 0 : i32
    return %c0_i32, %c0_i32_0 : i32, i32
  }
  func.func @transform_5(%arg0: i32) -> (i32, i32) {
    %c0_i32 = arith.constant 0 : i32
    %c0_i32_0 = arith.constant 0 : i32
    %c0_i32_1 = arith.constant 0 : i32
    return %c0_i32, %c0_i32_0 : i32, i32
  }
  func.func @transform_6(%arg0: i32) -> (i32, i32) {
    %c0_i32 = arith.constant 0 : i32
    %c0_i32_0 = arith.constant 0 : i32
    %c0_i32_1 = arith.constant 0 : i32
    return %c0_i32, %c0_i32_0 : i32, i32
  }
  func.func @transform_7(%arg0: i32) -> (i32, i32) {
    %c0_i32 = arith.constant 0 : i32
    %c0_i32_0 = arith.constant 0 : i32
    return %arg0, %c0_i32 : i32, i32
  }
}

module attributes {stable_mosaic.version = 11 : i64} {
  func.func @_mha_ln_kernel(%arg0: i32, %arg1: memref<1x8x32xbf16, #tpu.memory_space<vmem>>, %arg2: memref<32x96xbf16, #tpu.memory_space<vmem>>, %arg3: memref<1x96xf32, #tpu.memory_space<vmem>>, %arg4: memref<32x32xbf16, #tpu.memory_space<vmem>>, %arg5: memref<1x32xf32, #tpu.memory_space<vmem>>, %arg6: memref<1x32xf32, #tpu.memory_space<vmem>>, %arg7: memref<1x32xf32, #tpu.memory_space<vmem>>, %arg8: memref<1x8x32xbf16, #tpu.memory_space<vmem>>) attributes {dimension_semantics = [#tpu.dimension_semantics<parallel>], iteration_bounds = array<i64: 2>, scalar_prefetch = 0 : i64, scratch_operands = 0 : i64, tpu.core_type = #tpu.core_type<tc>, window_params = [{transform_indices = @transform_0, window_bounds = array<i64: 1, 8, 32>}, {pipeline_mode = #tpu.pipeline_mode<synchronous>, transform_indices = @transform_1, window_bounds = array<i64: 32, 96>}, {pipeline_mode = #tpu.pipeline_mode<synchronous>, transform_indices = @transform_2, window_bounds = array<i64: 1, 96>}, {pipeline_mode = #tpu.pipeline_mode<synchronous>, transform_indices = @transform_3, window_bounds = array<i64: 32, 32>}, {pipeline_mode = #tpu.pipeline_mode<synchronous>, transform_indices = @transform_4, window_bounds = array<i64: 1, 32>}, {pipeline_mode = #tpu.pipeline_mode<synchronous>, transform_indices = @transform_5, window_bounds = array<i64: 1, 32>}, {pipeline_mode = #tpu.pipeline_mode<synchronous>, transform_indices = @transform_6, window_bounds = array<i64: 1, 32>}, {transform_indices = @transform_7, window_bounds = array<i64: 1, 8, 32>}]} {
    %c0 = arith.constant 0 : index
    %c0_0 = arith.constant 0 : index
    %c0_1 = arith.constant 0 : index
    %0 = vector.load %arg1[%c0, %c0_0, %c0_1] : memref<1x8x32xbf16, #tpu.memory_space<vmem>>, vector<1x8x32xbf16>
    %1 = vector.shape_cast %0 : vector<1x8x32xbf16> to vector<8x32xbf16>
    %c0_2 = arith.constant 0 : index
    %c0_3 = arith.constant 0 : index
    %2 = vector.load %arg2[%c0_2, %c0_3] : memref<32x96xbf16, #tpu.memory_space<vmem>>, vector<32x96xbf16>
    %c0_4 = arith.constant 0 : index
    %c0_5 = arith.constant 0 : index
    %3 = vector.load %arg3[%c0_4, %c0_5] : memref<1x96xf32, #tpu.memory_space<vmem>>, vector<1x96xf32>
    %cst = arith.constant dense<0.000000e+00> : vector<8x96xf32>
    %4 = tpu.matmul %1, %2, %cst {dimension_numbers = #tpu.dot_dimension_numbers<[1], [0], [0], [1], [0, 0, 1, 1], [], []>} : vector<8x32xbf16>, vector<32x96xbf16>, vector<8x96xf32> -> vector<8x96xf32>
    %5 = vector.broadcast %3 : vector<1x96xf32> to vector<8x96xf32>
    %6 = arith.addf %4, %5 : vector<8x96xf32>
    %7 = vector.extract_strided_slice %6 {offsets = [0, 0], sizes = [8, 32], strides = [1, 1]} : vector<8x96xf32> to vector<8x32xf32>
    %8 = vector.extract_strided_slice %6 {offsets = [0, 32], sizes = [8, 32], strides = [1, 1]} : vector<8x96xf32> to vector<8x32xf32>
    %9 = vector.shape_cast %8 : vector<8x32xf32> to vector<1x8x32xf32>
    %10 = vector.extract_strided_slice %6 {offsets = [0, 64], sizes = [8, 32], strides = [1, 1]} : vector<8x96xf32> to vector<8x32xf32>
    %11 = vector.shape_cast %10 : vector<8x32xf32> to vector<1x8x32xf32>
    %cst_6 = arith.constant 0.353553385 : f32
    %12 = vector.broadcast %cst_6 : f32 to vector<8x32xf32>
    %13 = arith.mulf %7, %12 : vector<8x32xf32>
    %14 = vector.shape_cast %13 : vector<8x32xf32> to vector<1x8x32xf32>
    %15 = arith.truncf %14 : vector<1x8x32xf32> to vector<1x8x32xbf16>
    %16 = arith.truncf %9 : vector<1x8x32xf32> to vector<1x8x32xbf16>
    %17 = arith.truncf %11 : vector<1x8x32xf32> to vector<1x8x32xbf16>
    %18 = vector.extract_strided_slice %15 {offsets = [0, 0, 0], sizes = [1, 8, 8], strides = [1, 1, 1]} : vector<1x8x32xbf16> to vector<1x8x8xbf16>
    %19 = vector.extract_strided_slice %16 {offsets = [0, 0, 0], sizes = [1, 8, 8], strides = [1, 1, 1]} : vector<1x8x32xbf16> to vector<1x8x8xbf16>
    %20 = vector.extract_strided_slice %17 {offsets = [0, 0, 0], sizes = [1, 8, 8], strides = [1, 1, 1]} : vector<1x8x32xbf16> to vector<1x8x8xbf16>
    %cst_7 = arith.constant dense<0.000000e+00> : vector<1x8x8xf32>
    %21 = tpu.matmul %18, %19, %cst_7 {dimension_numbers = #tpu.dot_dimension_numbers<[2], [2], [1], [1], [0, 0, 0, 1, 1, 1], [0], [0]>} : vector<1x8x8xbf16>, vector<1x8x8xbf16>, vector<1x8x8xf32> -> vector<1x8x8xf32>
    %cst_8 = arith.constant dense<0xFF800000> : vector<1x8xf32>
    %22 = vector.multi_reduction <maximumf>, %21, %cst_8 [2] : vector<1x8x8xf32> to vector<1x8xf32>
    %23 = vector.shape_cast %22 : vector<1x8xf32> to vector<1x8x1xf32>
    %24 = vector.broadcast %23 : vector<1x8x1xf32> to vector<1x8x8xf32>
    %25 = arith.subf %21, %24 : vector<1x8x8xf32>
    %26 = math.exp %25 : vector<1x8x8xf32>
    %cst_9 = arith.constant dense<0.000000e+00> : vector<1x8xf32>
    %27 = vector.multi_reduction <add>, %26, %cst_9 [2] : vector<1x8x8xf32> to vector<1x8xf32>
    %28 = vector.shape_cast %27 : vector<1x8xf32> to vector<1x8x1xf32>
    %29 = tpu.reciprocal %28 {approx = true} : vector<1x8x1xf32> -> vector<1x8x1xf32>
    %30 = vector.broadcast %29 : vector<1x8x1xf32> to vector<1x8x8xf32>
    %31 = arith.mulf %26, %30 : vector<1x8x8xf32>
    %32 = arith.truncf %31 : vector<1x8x8xf32> to vector<1x8x8xbf16>
    %cst_10 = arith.constant dense<0.000000e+00> : vector<1x8x8xf32>
    %33 = tpu.matmul %32, %20, %cst_10 {dimension_numbers = #tpu.dot_dimension_numbers<[2], [1], [1], [2], [0, 0, 0, 1, 1, 2], [0], [0]>} : vector<1x8x8xbf16>, vector<1x8x8xbf16>, vector<1x8x8xf32> -> vector<1x8x8xf32>
    %34 = arith.truncf %33 : vector<1x8x8xf32> to vector<1x8x8xbf16>
    %35 = vector.extract_strided_slice %15 {offsets = [0, 0, 8], sizes = [1, 8, 8], strides = [1, 1, 1]} : vector<1x8x32xbf16> to vector<1x8x8xbf16>
    %36 = vector.extract_strided_slice %16 {offsets = [0, 0, 8], sizes = [1, 8, 8], strides = [1, 1, 1]} : vector<1x8x32xbf16> to vector<1x8x8xbf16>
    %37 = vector.extract_strided_slice %17 {offsets = [0, 0, 8], sizes = [1, 8, 8], strides = [1, 1, 1]} : vector<1x8x32xbf16> to vector<1x8x8xbf16>
    %cst_11 = arith.constant dense<0.000000e+00> : vector<1x8x8xf32>
    %38 = tpu.matmul %35, %36, %cst_11 {dimension_numbers = #tpu.dot_dimension_numbers<[2], [2], [1], [1], [0, 0, 0, 1, 1, 1], [0], [0]>} : vector<1x8x8xbf16>, vector<1x8x8xbf16>, vector<1x8x8xf32> -> vector<1x8x8xf32>
    %cst_12 = arith.constant dense<0xFF800000> : vector<1x8xf32>
    %39 = vector.multi_reduction <maximumf>, %38, %cst_12 [2] : vector<1x8x8xf32> to vector<1x8xf32>
    %40 = vector.shape_cast %39 : vector<1x8xf32> to vector<1x8x1xf32>
    %41 = vector.broadcast %40 : vector<1x8x1xf32> to vector<1x8x8xf32>
    %42 = arith.subf %38, %41 : vector<1x8x8xf32>
    %43 = math.exp %42 : vector<1x8x8xf32>
    %cst_13 = arith.constant dense<0.000000e+00> : vector<1x8xf32>
    %44 = vector.multi_reduction <add>, %43, %cst_13 [2] : vector<1x8x8xf32> to vector<1x8xf32>
    %45 = vector.shape_cast %44 : vector<1x8xf32> to vector<1x8x1xf32>
    %46 = tpu.reciprocal %45 {approx = true} : vector<1x8x1xf32> -> vector<1x8x1xf32>
    %47 = vector.broadcast %46 : vector<1x8x1xf32> to vector<1x8x8xf32>
    %48 = arith.mulf %43, %47 : vector<1x8x8xf32>
    %49 = arith.truncf %48 : vector<1x8x8xf32> to vector<1x8x8xbf16>
    %cst_14 = arith.constant dense<0.000000e+00> : vector<1x8x8xf32>
    %50 = tpu.matmul %49, %37, %cst_14 {dimension_numbers = #tpu.dot_dimension_numbers<[2], [1], [1], [2], [0, 0, 0, 1, 1, 2], [0], [0]>} : vector<1x8x8xbf16>, vector<1x8x8xbf16>, vector<1x8x8xf32> -> vector<1x8x8xf32>
    %51 = arith.truncf %50 : vector<1x8x8xf32> to vector<1x8x8xbf16>
    %52 = vector.extract_strided_slice %15 {offsets = [0, 0, 16], sizes = [1, 8, 8], strides = [1, 1, 1]} : vector<1x8x32xbf16> to vector<1x8x8xbf16>
    %53 = vector.extract_strided_slice %16 {offsets = [0, 0, 16], sizes = [1, 8, 8], strides = [1, 1, 1]} : vector<1x8x32xbf16> to vector<1x8x8xbf16>
    %54 = vector.extract_strided_slice %17 {offsets = [0, 0, 16], sizes = [1, 8, 8], strides = [1, 1, 1]} : vector<1x8x32xbf16> to vector<1x8x8xbf16>
    %cst_15 = arith.constant dense<0.000000e+00> : vector<1x8x8xf32>
    %55 = tpu.matmul %52, %53, %cst_15 {dimension_numbers = #tpu.dot_dimension_numbers<[2], [2], [1], [1], [0, 0, 0, 1, 1, 1], [0], [0]>} : vector<1x8x8xbf16>, vector<1x8x8xbf16>, vector<1x8x8xf32> -> vector<1x8x8xf32>
    %cst_16 = arith.constant dense<0xFF800000> : vector<1x8xf32>
    %56 = vector.multi_reduction <maximumf>, %55, %cst_16 [2] : vector<1x8x8xf32> to vector<1x8xf32>
    %57 = vector.shape_cast %56 : vector<1x8xf32> to vector<1x8x1xf32>
    %58 = vector.broadcast %57 : vector<1x8x1xf32> to vector<1x8x8xf32>
    %59 = arith.subf %55, %58 : vector<1x8x8xf32>
    %60 = math.exp %59 : vector<1x8x8xf32>
    %cst_17 = arith.constant dense<0.000000e+00> : vector<1x8xf32>
    %61 = vector.multi_reduction <add>, %60, %cst_17 [2] : vector<1x8x8xf32> to vector<1x8xf32>
    %62 = vector.shape_cast %61 : vector<1x8xf32> to vector<1x8x1xf32>
    %63 = tpu.reciprocal %62 {approx = true} : vector<1x8x1xf32> -> vector<1x8x1xf32>
    %64 = vector.broadcast %63 : vector<1x8x1xf32> to vector<1x8x8xf32>
    %65 = arith.mulf %60, %64 : vector<1x8x8xf32>
    %66 = arith.truncf %65 : vector<1x8x8xf32> to vector<1x8x8xbf16>
    %cst_18 = arith.constant dense<0.000000e+00> : vector<1x8x8xf32>
    %67 = tpu.matmul %66, %54, %cst_18 {dimension_numbers = #tpu.dot_dimension_numbers<[2], [1], [1], [2], [0, 0, 0, 1, 1, 2], [0], [0]>} : vector<1x8x8xbf16>, vector<1x8x8xbf16>, vector<1x8x8xf32> -> vector<1x8x8xf32>
    %68 = arith.truncf %67 : vector<1x8x8xf32> to vector<1x8x8xbf16>
    %69 = vector.extract_strided_slice %15 {offsets = [0, 0, 24], sizes = [1, 8, 8], strides = [1, 1, 1]} : vector<1x8x32xbf16> to vector<1x8x8xbf16>
    %70 = vector.extract_strided_slice %16 {offsets = [0, 0, 24], sizes = [1, 8, 8], strides = [1, 1, 1]} : vector<1x8x32xbf16> to vector<1x8x8xbf16>
    %71 = vector.extract_strided_slice %17 {offsets = [0, 0, 24], sizes = [1, 8, 8], strides = [1, 1, 1]} : vector<1x8x32xbf16> to vector<1x8x8xbf16>
    %cst_19 = arith.constant dense<0.000000e+00> : vector<1x8x8xf32>
    %72 = tpu.matmul %69, %70, %cst_19 {dimension_numbers = #tpu.dot_dimension_numbers<[2], [2], [1], [1], [0, 0, 0, 1, 1, 1], [0], [0]>} : vector<1x8x8xbf16>, vector<1x8x8xbf16>, vector<1x8x8xf32> -> vector<1x8x8xf32>
    %cst_20 = arith.constant dense<0xFF800000> : vector<1x8xf32>
    %73 = vector.multi_reduction <maximumf>, %72, %cst_20 [2] : vector<1x8x8xf32> to vector<1x8xf32>
    %74 = vector.shape_cast %73 : vector<1x8xf32> to vector<1x8x1xf32>
    %75 = vector.broadcast %74 : vector<1x8x1xf32> to vector<1x8x8xf32>
    %76 = arith.subf %72, %75 : vector<1x8x8xf32>
    %77 = math.exp %76 : vector<1x8x8xf32>
    %cst_21 = arith.constant dense<0.000000e+00> : vector<1x8xf32>
    %78 = vector.multi_reduction <add>, %77, %cst_21 [2] : vector<1x8x8xf32> to vector<1x8xf32>
    %79 = vector.shape_cast %78 : vector<1x8xf32> to vector<1x8x1xf32>
    %80 = tpu.reciprocal %79 {approx = true} : vector<1x8x1xf32> -> vector<1x8x1xf32>
    %81 = vector.broadcast %80 : vector<1x8x1xf32> to vector<1x8x8xf32>
    %82 = arith.mulf %77, %81 : vector<1x8x8xf32>
    %83 = arith.truncf %82 : vector<1x8x8xf32> to vector<1x8x8xbf16>
    %cst_22 = arith.constant dense<0.000000e+00> : vector<1x8x8xf32>
    %84 = tpu.matmul %83, %71, %cst_22 {dimension_numbers = #tpu.dot_dimension_numbers<[2], [1], [1], [2], [0, 0, 0, 1, 1, 2], [0], [0]>} : vector<1x8x8xbf16>, vector<1x8x8xbf16>, vector<1x8x8xf32> -> vector<1x8x8xf32>
    %85 = arith.truncf %84 : vector<1x8x8xf32> to vector<1x8x8xbf16>
    %86 = tpu.concatenate %34, %51, %68, %85 in 2 : vector<1x8x8xbf16>, vector<1x8x8xbf16>, vector<1x8x8xbf16>, vector<1x8x8xbf16> -> vector<1x8x32xbf16>
    %87 = vector.shape_cast %86 : vector<1x8x32xbf16> to vector<8x32xbf16>
    %c0_23 = arith.constant 0 : index
    %c0_24 = arith.constant 0 : index
    %88 = vector.load %arg4[%c0_23, %c0_24] : memref<32x32xbf16, #tpu.memory_space<vmem>>, vector<32x32xbf16>
    %cst_25 = arith.constant dense<0.000000e+00> : vector<8x32xf32>
    %89 = tpu.matmul %87, %88, %cst_25 {dimension_numbers = #tpu.dot_dimension_numbers<[1], [0], [0], [1], [0, 0, 1, 1], [], []>} : vector<8x32xbf16>, vector<32x32xbf16>, vector<8x32xf32> -> vector<8x32xf32>
    %c0_26 = arith.constant 0 : index
    %c0_27 = arith.constant 0 : index
    %90 = vector.load %arg5[%c0_26, %c0_27] : memref<1x32xf32, #tpu.memory_space<vmem>>, vector<1x32xf32>
    %91 = vector.broadcast %90 : vector<1x32xf32> to vector<8x32xf32>
    %92 = arith.addf %89, %91 : vector<8x32xf32>
    %93 = arith.extf %1 : vector<8x32xbf16> to vector<8x32xf32>
    %94 = arith.addf %93, %92 : vector<8x32xf32>
    %cst_28 = arith.constant dense<0.000000e+00> : vector<8xf32>
    %95 = vector.multi_reduction <add>, %94, %cst_28 [1] : vector<8x32xf32> to vector<8xf32>
    %96 = vector.shape_cast %95 : vector<8xf32> to vector<8x1xf32>
    %cst_29 = arith.constant 3.200000e+01 : f32
    %97 = vector.broadcast %cst_29 : f32 to vector<8x1xf32>
    %98 = arith.divf %96, %97 : vector<8x1xf32>
    %99 = vector.broadcast %98 : vector<8x1xf32> to vector<8x32xf32>
    %100 = arith.subf %94, %99 : vector<8x32xf32>
    %101 = arith.mulf %100, %100 : vector<8x32xf32>
    %cst_30 = arith.constant dense<0.000000e+00> : vector<8xf32>
    %102 = vector.multi_reduction <add>, %101, %cst_30 [1] : vector<8x32xf32> to vector<8xf32>
    %103 = vector.shape_cast %102 : vector<8xf32> to vector<8x1xf32>
    %cst_31 = arith.constant 3.200000e+01 : f32
    %104 = vector.broadcast %cst_31 : f32 to vector<8x1xf32>
    %105 = arith.divf %103, %104 : vector<8x1xf32>
    %106 = vector.broadcast %98 : vector<8x1xf32> to vector<8x32xf32>
    %107 = arith.subf %94, %106 : vector<8x32xf32>
    %cst_32 = arith.constant 9.99999974E-6 : f32
    %108 = vector.broadcast %cst_32 : f32 to vector<8x1xf32>
    %109 = arith.addf %105, %108 : vector<8x1xf32>
    %110 = math.rsqrt %109 : vector<8x1xf32>
    %111 = vector.broadcast %110 : vector<8x1xf32> to vector<8x32xf32>
    %112 = arith.mulf %107, %111 : vector<8x32xf32>
    %c0_33 = arith.constant 0 : index
    %c0_34 = arith.constant 0 : index
    %113 = vector.load %arg6[%c0_33, %c0_34] : memref<1x32xf32, #tpu.memory_space<vmem>>, vector<1x32xf32>
    %114 = vector.broadcast %113 : vector<1x32xf32> to vector<8x32xf32>
    %115 = arith.mulf %112, %114 : vector<8x32xf32>
    %c0_35 = arith.constant 0 : index
    %c0_36 = arith.constant 0 : index
    %116 = vector.load %arg7[%c0_35, %c0_36] : memref<1x32xf32, #tpu.memory_space<vmem>>, vector<1x32xf32>
    %117 = vector.broadcast %116 : vector<1x32xf32> to vector<8x32xf32>
    %118 = arith.addf %115, %117 : vector<8x32xf32>
    %119 = vector.shape_cast %118 : vector<8x32xf32> to vector<1x8x32xf32>
    %120 = arith.truncf %119 : vector<1x8x32xf32> to vector<1x8x32xbf16>
    %c0_37 = arith.constant 0 : index
    %c0_38 = arith.constant 0 : index
    %c0_39 = arith.constant 0 : index
    %121 = vector.load %arg8[%c0_37, %c0_38, %c0_39] : memref<1x8x32xbf16, #tpu.memory_space<vmem>>, vector<1x8x32xbf16>
    tpu.vector_store %arg8[%c0_37, %c0_38, %c0_39], %120 {strides = array<i32>} : memref<1x8x32xbf16, #tpu.memory_space<vmem>>, vector<1x8x32xbf16>,
    return
  }
  func.func @transform_0(%arg0: i32) -> (i32, i32, i32) {
    %c0_i32 = arith.constant 0 : i32
    %c0_i32_0 = arith.constant 0 : i32
    %c0_i32_1 = arith.constant 0 : i32
    return %arg0, %c0_i32, %c0_i32_0 : i32, i32, i32
  }
  func.func @transform_1(%arg0: i32) -> (i32, i32) {
    %c0_i32 = arith.constant 0 : i32
    %c0_i32_0 = arith.constant 0 : i32
    %c0_i32_1 = arith.constant 0 : i32
    return %c0_i32, %c0_i32_0 : i32, i32
  }
  func.func @transform_2(%arg0: i32) -> (i32, i32) {
    %c0_i32 = arith.constant 0 : i32
    %c0_i32_0 = arith.constant 0 : i32
    %c0_i32_1 = arith.constant 0 : i32
    return %c0_i32, %c0_i32_0 : i32, i32
  }
  func.func @transform_3(%arg0: i32) -> (i32, i32) {
    %c0_i32 = arith.constant 0 : i32
    %c0_i32_0 = arith.constant 0 : i32
    %c0_i32_1 = arith.constant 0 : i32
    return %c0_i32, %c0_i32_0 : i32, i32
  }
  func.func @transform_4(%arg0: i32) -> (i32, i32) {
    %c0_i32 = arith.constant 0 : i32
    %c0_i32_0 = arith.constant 0 : i32
    %c0_i32_1 = arith.constant 0 : i32
    return %c0_i32, %c0_i32_0 : i32, i32
  }
  func.func @transform_5(%arg0: i32) -> (i32, i32) {
    %c0_i32 = arith.constant 0 : i32
    %c0_i32_0 = arith.constant 0 : i32
    %c0_i32_1 = arith.constant 0 : i32
    return %c0_i32, %c0_i32_0 : i32, i32
  }
  func.func @transform_6(%arg0: i32) -> (i32, i32) {
    %c0_i32 = arith.constant 0 : i32
    %c0_i32_0 = arith.constant 0 : i32
    %c0_i32_1 = arith.constant 0 : i32
    return %c0_i32, %c0_i32_0 : i32, i32
  }
  func.func @transform_7(%arg0: i32) -> (i32, i32, i32) {
    %c0_i32 = arith.constant 0 : i32
    %c0_i32_0 = arith.constant 0 : i32
    %c0_i32_1 = arith.constant 0 : i32
    return %arg0, %c0_i32, %c0_i32_0 : i32, i32, i32
  }
}

module attributes {stable_mosaic.version = 11 : i64} {
  func.func @_mha_ln_kernel(%arg0: i32, %arg1: memref<1x4x32xbf16, #tpu.memory_space<vmem>>, %arg2: memref<32x96xbf16, #tpu.memory_space<vmem>>, %arg3: memref<1x96xf32, #tpu.memory_space<vmem>>, %arg4: memref<32x32xbf16, #tpu.memory_space<vmem>>, %arg5: memref<1x32xf32, #tpu.memory_space<vmem>>, %arg6: memref<1x32xf32, #tpu.memory_space<vmem>>, %arg7: memref<1x32xf32, #tpu.memory_space<vmem>>, %arg8: memref<1x4x32xbf16, #tpu.memory_space<vmem>>) attributes {dimension_semantics = [#tpu.dimension_semantics<parallel>], iteration_bounds = array<i64: 2>, scalar_prefetch = 0 : i64, scratch_operands = 0 : i64, tpu.core_type = #tpu.core_type<tc>, window_params = [{transform_indices = @transform_0, window_bounds = array<i64: 1, 4, 32>}, {pipeline_mode = #tpu.pipeline_mode<synchronous>, transform_indices = @transform_1, window_bounds = array<i64: 32, 96>}, {pipeline_mode = #tpu.pipeline_mode<synchronous>, transform_indices = @transform_2, window_bounds = array<i64: 1, 96>}, {pipeline_mode = #tpu.pipeline_mode<synchronous>, transform_indices = @transform_3, window_bounds = array<i64: 32, 32>}, {pipeline_mode = #tpu.pipeline_mode<synchronous>, transform_indices = @transform_4, window_bounds = array<i64: 1, 32>}, {pipeline_mode = #tpu.pipeline_mode<synchronous>, transform_indices = @transform_5, window_bounds = array<i64: 1, 32>}, {pipeline_mode = #tpu.pipeline_mode<synchronous>, transform_indices = @transform_6, window_bounds = array<i64: 1, 32>}, {transform_indices = @transform_7, window_bounds = array<i64: 1, 4, 32>}]} {
    %c0 = arith.constant 0 : index
    %c0_0 = arith.constant 0 : index
    %c0_1 = arith.constant 0 : index
    %0 = vector.load %arg1[%c0, %c0_0, %c0_1] : memref<1x4x32xbf16, #tpu.memory_space<vmem>>, vector<1x4x32xbf16>
    %1 = vector.shape_cast %0 : vector<1x4x32xbf16> to vector<4x32xbf16>
    %c0_2 = arith.constant 0 : index
    %c0_3 = arith.constant 0 : index
    %2 = vector.load %arg2[%c0_2, %c0_3] : memref<32x96xbf16, #tpu.memory_space<vmem>>, vector<32x96xbf16>
    %c0_4 = arith.constant 0 : index
    %c0_5 = arith.constant 0 : index
    %3 = vector.load %arg3[%c0_4, %c0_5] : memref<1x96xf32, #tpu.memory_space<vmem>>, vector<1x96xf32>
    %cst = arith.constant dense<0.000000e+00> : vector<4x96xf32>
    %4 = tpu.matmul %1, %2, %cst {dimension_numbers = #tpu.dot_dimension_numbers<[1], [0], [0], [1], [0, 0, 1, 1], [], []>} : vector<4x32xbf16>, vector<32x96xbf16>, vector<4x96xf32> -> vector<4x96xf32>
    %5 = vector.broadcast %3 : vector<1x96xf32> to vector<4x96xf32>
    %6 = arith.addf %4, %5 : vector<4x96xf32>
    %7 = vector.extract_strided_slice %6 {offsets = [0, 0], sizes = [4, 32], strides = [1, 1]} : vector<4x96xf32> to vector<4x32xf32>
    %8 = vector.extract_strided_slice %6 {offsets = [0, 32], sizes = [4, 32], strides = [1, 1]} : vector<4x96xf32> to vector<4x32xf32>
    %9 = vector.shape_cast %8 : vector<4x32xf32> to vector<1x4x32xf32>
    %10 = vector.extract_strided_slice %6 {offsets = [0, 64], sizes = [4, 32], strides = [1, 1]} : vector<4x96xf32> to vector<4x32xf32>
    %11 = vector.shape_cast %10 : vector<4x32xf32> to vector<1x4x32xf32>
    %cst_6 = arith.constant 0.353553385 : f32
    %12 = vector.broadcast %cst_6 : f32 to vector<4x32xf32>
    %13 = arith.mulf %7, %12 : vector<4x32xf32>
    %14 = vector.shape_cast %13 : vector<4x32xf32> to vector<1x4x32xf32>
    %15 = arith.truncf %14 : vector<1x4x32xf32> to vector<1x4x32xbf16>
    %16 = arith.truncf %9 : vector<1x4x32xf32> to vector<1x4x32xbf16>
    %17 = arith.truncf %11 : vector<1x4x32xf32> to vector<1x4x32xbf16>
    %18 = vector.extract_strided_slice %15 {offsets = [0, 0, 0], sizes = [1, 4, 8], strides = [1, 1, 1]} : vector<1x4x32xbf16> to vector<1x4x8xbf16>
    %19 = vector.extract_strided_slice %16 {offsets = [0, 0, 0], sizes = [1, 4, 8], strides = [1, 1, 1]} : vector<1x4x32xbf16> to vector<1x4x8xbf16>
    %20 = vector.extract_strided_slice %17 {offsets = [0, 0, 0], sizes = [1, 4, 8], strides = [1, 1, 1]} : vector<1x4x32xbf16> to vector<1x4x8xbf16>
    %cst_7 = arith.constant dense<0.000000e+00> : vector<1x4x4xf32>
    %21 = tpu.matmul %18, %19, %cst_7 {dimension_numbers = #tpu.dot_dimension_numbers<[2], [2], [1], [1], [0, 0, 0, 1, 1, 1], [0], [0]>} : vector<1x4x8xbf16>, vector<1x4x8xbf16>, vector<1x4x4xf32> -> vector<1x4x4xf32>
    %cst_8 = arith.constant dense<0xFF800000> : vector<1x4xf32>
    %22 = vector.multi_reduction <maximumf>, %21, %cst_8 [2] : vector<1x4x4xf32> to vector<1x4xf32>
    %23 = vector.shape_cast %22 : vector<1x4xf32> to vector<1x4x1xf32>
    %24 = vector.broadcast %23 : vector<1x4x1xf32> to vector<1x4x4xf32>
    %25 = arith.subf %21, %24 : vector<1x4x4xf32>
    %26 = math.exp %25 : vector<1x4x4xf32>
    %cst_9 = arith.constant dense<0.000000e+00> : vector<1x4xf32>
    %27 = vector.multi_reduction <add>, %26, %cst_9 [2] : vector<1x4x4xf32> to vector<1x4xf32>
    %28 = vector.shape_cast %27 : vector<1x4xf32> to vector<1x4x1xf32>
    %29 = tpu.reciprocal %28 {approx = true} : vector<1x4x1xf32> -> vector<1x4x1xf32>
    %30 = vector.broadcast %29 : vector<1x4x1xf32> to vector<1x4x4xf32>
    %31 = arith.mulf %26, %30 : vector<1x4x4xf32>
    %32 = arith.truncf %31 : vector<1x4x4xf32> to vector<1x4x4xbf16>
    %cst_10 = arith.constant dense<0.000000e+00> : vector<1x4x8xf32>
    %33 = tpu.matmul %32, %20, %cst_10 {dimension_numbers = #tpu.dot_dimension_numbers<[2], [1], [1], [2], [0, 0, 0, 1, 1, 2], [0], [0]>} : vector<1x4x4xbf16>, vector<1x4x8xbf16>, vector<1x4x8xf32> -> vector<1x4x8xf32>
    %34 = arith.truncf %33 : vector<1x4x8xf32> to vector<1x4x8xbf16>
    %35 = vector.extract_strided_slice %15 {offsets = [0, 0, 8], sizes = [1, 4, 8], strides = [1, 1, 1]} : vector<1x4x32xbf16> to vector<1x4x8xbf16>
    %36 = vector.extract_strided_slice %16 {offsets = [0, 0, 8], sizes = [1, 4, 8], strides = [1, 1, 1]} : vector<1x4x32xbf16> to vector<1x4x8xbf16>
    %37 = vector.extract_strided_slice %17 {offsets = [0, 0, 8], sizes = [1, 4, 8], strides = [1, 1, 1]} : vector<1x4x32xbf16> to vector<1x4x8xbf16>
    %cst_11 = arith.constant dense<0.000000e+00> : vector<1x4x4xf32>
    %38 = tpu.matmul %35, %36, %cst_11 {dimension_numbers = #tpu.dot_dimension_numbers<[2], [2], [1], [1], [0, 0, 0, 1, 1, 1], [0], [0]>} : vector<1x4x8xbf16>, vector<1x4x8xbf16>, vector<1x4x4xf32> -> vector<1x4x4xf32>
    %cst_12 = arith.constant dense<0xFF800000> : vector<1x4xf32>
    %39 = vector.multi_reduction <maximumf>, %38, %cst_12 [2] : vector<1x4x4xf32> to vector<1x4xf32>
    %40 = vector.shape_cast %39 : vector<1x4xf32> to vector<1x4x1xf32>
    %41 = vector.broadcast %40 : vector<1x4x1xf32> to vector<1x4x4xf32>
    %42 = arith.subf %38, %41 : vector<1x4x4xf32>
    %43 = math.exp %42 : vector<1x4x4xf32>
    %cst_13 = arith.constant dense<0.000000e+00> : vector<1x4xf32>
    %44 = vector.multi_reduction <add>, %43, %cst_13 [2] : vector<1x4x4xf32> to vector<1x4xf32>
    %45 = vector.shape_cast %44 : vector<1x4xf32> to vector<1x4x1xf32>
    %46 = tpu.reciprocal %45 {approx = true} : vector<1x4x1xf32> -> vector<1x4x1xf32>
    %47 = vector.broadcast %46 : vector<1x4x1xf32> to vector<1x4x4xf32>
    %48 = arith.mulf %43, %47 : vector<1x4x4xf32>
    %49 = arith.truncf %48 : vector<1x4x4xf32> to vector<1x4x4xbf16>
    %cst_14 = arith.constant dense<0.000000e+00> : vector<1x4x8xf32>
    %50 = tpu.matmul %49, %37, %cst_14 {dimension_numbers = #tpu.dot_dimension_numbers<[2], [1], [1], [2], [0, 0, 0, 1, 1, 2], [0], [0]>} : vector<1x4x4xbf16>, vector<1x4x8xbf16>, vector<1x4x8xf32> -> vector<1x4x8xf32>
    %51 = arith.truncf %50 : vector<1x4x8xf32> to vector<1x4x8xbf16>
    %52 = vector.extract_strided_slice %15 {offsets = [0, 0, 16], sizes = [1, 4, 8], strides = [1, 1, 1]} : vector<1x4x32xbf16> to vector<1x4x8xbf16>
    %53 = vector.extract_strided_slice %16 {offsets = [0, 0, 16], sizes = [1, 4, 8], strides = [1, 1, 1]} : vector<1x4x32xbf16> to vector<1x4x8xbf16>
    %54 = vector.extract_strided_slice %17 {offsets = [0, 0, 16], sizes = [1, 4, 8], strides = [1, 1, 1]} : vector<1x4x32xbf16> to vector<1x4x8xbf16>
    %cst_15 = arith.constant dense<0.000000e+00> : vector<1x4x4xf32>
    %55 = tpu.matmul %52, %53, %cst_15 {dimension_numbers = #tpu.dot_dimension_numbers<[2], [2], [1], [1], [0, 0, 0, 1, 1, 1], [0], [0]>} : vector<1x4x8xbf16>, vector<1x4x8xbf16>, vector<1x4x4xf32> -> vector<1x4x4xf32>
    %cst_16 = arith.constant dense<0xFF800000> : vector<1x4xf32>
    %56 = vector.multi_reduction <maximumf>, %55, %cst_16 [2] : vector<1x4x4xf32> to vector<1x4xf32>
    %57 = vector.shape_cast %56 : vector<1x4xf32> to vector<1x4x1xf32>
    %58 = vector.broadcast %57 : vector<1x4x1xf32> to vector<1x4x4xf32>
    %59 = arith.subf %55, %58 : vector<1x4x4xf32>
    %60 = math.exp %59 : vector<1x4x4xf32>
    %cst_17 = arith.constant dense<0.000000e+00> : vector<1x4xf32>
    %61 = vector.multi_reduction <add>, %60, %cst_17 [2] : vector<1x4x4xf32> to vector<1x4xf32>
    %62 = vector.shape_cast %61 : vector<1x4xf32> to vector<1x4x1xf32>
    %63 = tpu.reciprocal %62 {approx = true} : vector<1x4x1xf32> -> vector<1x4x1xf32>
    %64 = vector.broadcast %63 : vector<1x4x1xf32> to vector<1x4x4xf32>
    %65 = arith.mulf %60, %64 : vector<1x4x4xf32>
    %66 = arith.truncf %65 : vector<1x4x4xf32> to vector<1x4x4xbf16>
    %cst_18 = arith.constant dense<0.000000e+00> : vector<1x4x8xf32>
    %67 = tpu.matmul %66, %54, %cst_18 {dimension_numbers = #tpu.dot_dimension_numbers<[2], [1], [1], [2], [0, 0, 0, 1, 1, 2], [0], [0]>} : vector<1x4x4xbf16>, vector<1x4x8xbf16>, vector<1x4x8xf32> -> vector<1x4x8xf32>
    %68 = arith.truncf %67 : vector<1x4x8xf32> to vector<1x4x8xbf16>
    %69 = vector.extract_strided_slice %15 {offsets = [0, 0, 24], sizes = [1, 4, 8], strides = [1, 1, 1]} : vector<1x4x32xbf16> to vector<1x4x8xbf16>
    %70 = vector.extract_strided_slice %16 {offsets = [0, 0, 24], sizes = [1, 4, 8], strides = [1, 1, 1]} : vector<1x4x32xbf16> to vector<1x4x8xbf16>
    %71 = vector.extract_strided_slice %17 {offsets = [0, 0, 24], sizes = [1, 4, 8], strides = [1, 1, 1]} : vector<1x4x32xbf16> to vector<1x4x8xbf16>
    %cst_19 = arith.constant dense<0.000000e+00> : vector<1x4x4xf32>
    %72 = tpu.matmul %69, %70, %cst_19 {dimension_numbers = #tpu.dot_dimension_numbers<[2], [2], [1], [1], [0, 0, 0, 1, 1, 1], [0], [0]>} : vector<1x4x8xbf16>, vector<1x4x8xbf16>, vector<1x4x4xf32> -> vector<1x4x4xf32>
    %cst_20 = arith.constant dense<0xFF800000> : vector<1x4xf32>
    %73 = vector.multi_reduction <maximumf>, %72, %cst_20 [2] : vector<1x4x4xf32> to vector<1x4xf32>
    %74 = vector.shape_cast %73 : vector<1x4xf32> to vector<1x4x1xf32>
    %75 = vector.broadcast %74 : vector<1x4x1xf32> to vector<1x4x4xf32>
    %76 = arith.subf %72, %75 : vector<1x4x4xf32>
    %77 = math.exp %76 : vector<1x4x4xf32>
    %cst_21 = arith.constant dense<0.000000e+00> : vector<1x4xf32>
    %78 = vector.multi_reduction <add>, %77, %cst_21 [2] : vector<1x4x4xf32> to vector<1x4xf32>
    %79 = vector.shape_cast %78 : vector<1x4xf32> to vector<1x4x1xf32>
    %80 = tpu.reciprocal %79 {approx = true} : vector<1x4x1xf32> -> vector<1x4x1xf32>
    %81 = vector.broadcast %80 : vector<1x4x1xf32> to vector<1x4x4xf32>
    %82 = arith.mulf %77, %81 : vector<1x4x4xf32>
    %83 = arith.truncf %82 : vector<1x4x4xf32> to vector<1x4x4xbf16>
    %cst_22 = arith.constant dense<0.000000e+00> : vector<1x4x8xf32>
    %84 = tpu.matmul %83, %71, %cst_22 {dimension_numbers = #tpu.dot_dimension_numbers<[2], [1], [1], [2], [0, 0, 0, 1, 1, 2], [0], [0]>} : vector<1x4x4xbf16>, vector<1x4x8xbf16>, vector<1x4x8xf32> -> vector<1x4x8xf32>
    %85 = arith.truncf %84 : vector<1x4x8xf32> to vector<1x4x8xbf16>
    %86 = tpu.concatenate %34, %51, %68, %85 in 2 : vector<1x4x8xbf16>, vector<1x4x8xbf16>, vector<1x4x8xbf16>, vector<1x4x8xbf16> -> vector<1x4x32xbf16>
    %87 = vector.shape_cast %86 : vector<1x4x32xbf16> to vector<4x32xbf16>
    %c0_23 = arith.constant 0 : index
    %c0_24 = arith.constant 0 : index
    %88 = vector.load %arg4[%c0_23, %c0_24] : memref<32x32xbf16, #tpu.memory_space<vmem>>, vector<32x32xbf16>
    %cst_25 = arith.constant dense<0.000000e+00> : vector<4x32xf32>
    %89 = tpu.matmul %87, %88, %cst_25 {dimension_numbers = #tpu.dot_dimension_numbers<[1], [0], [0], [1], [0, 0, 1, 1], [], []>} : vector<4x32xbf16>, vector<32x32xbf16>, vector<4x32xf32> -> vector<4x32xf32>
    %c0_26 = arith.constant 0 : index
    %c0_27 = arith.constant 0 : index
    %90 = vector.load %arg5[%c0_26, %c0_27] : memref<1x32xf32, #tpu.memory_space<vmem>>, vector<1x32xf32>
    %91 = vector.broadcast %90 : vector<1x32xf32> to vector<4x32xf32>
    %92 = arith.addf %89, %91 : vector<4x32xf32>
    %93 = arith.extf %1 : vector<4x32xbf16> to vector<4x32xf32>
    %94 = arith.addf %93, %92 : vector<4x32xf32>
    %cst_28 = arith.constant dense<0.000000e+00> : vector<4xf32>
    %95 = vector.multi_reduction <add>, %94, %cst_28 [1] : vector<4x32xf32> to vector<4xf32>
    %96 = vector.shape_cast %95 : vector<4xf32> to vector<4x1xf32>
    %cst_29 = arith.constant 3.200000e+01 : f32
    %97 = vector.broadcast %cst_29 : f32 to vector<4x1xf32>
    %98 = arith.divf %96, %97 : vector<4x1xf32>
    %99 = vector.broadcast %98 : vector<4x1xf32> to vector<4x32xf32>
    %100 = arith.subf %94, %99 : vector<4x32xf32>
    %101 = arith.mulf %100, %100 : vector<4x32xf32>
    %cst_30 = arith.constant dense<0.000000e+00> : vector<4xf32>
    %102 = vector.multi_reduction <add>, %101, %cst_30 [1] : vector<4x32xf32> to vector<4xf32>
    %103 = vector.shape_cast %102 : vector<4xf32> to vector<4x1xf32>
    %cst_31 = arith.constant 3.200000e+01 : f32
    %104 = vector.broadcast %cst_31 : f32 to vector<4x1xf32>
    %105 = arith.divf %103, %104 : vector<4x1xf32>
    %106 = vector.broadcast %98 : vector<4x1xf32> to vector<4x32xf32>
    %107 = arith.subf %94, %106 : vector<4x32xf32>
    %cst_32 = arith.constant 9.99999974E-6 : f32
    %108 = vector.broadcast %cst_32 : f32 to vector<4x1xf32>
    %109 = arith.addf %105, %108 : vector<4x1xf32>
    %110 = math.rsqrt %109 : vector<4x1xf32>
    %111 = vector.broadcast %110 : vector<4x1xf32> to vector<4x32xf32>
    %112 = arith.mulf %107, %111 : vector<4x32xf32>
    %c0_33 = arith.constant 0 : index
    %c0_34 = arith.constant 0 : index
    %113 = vector.load %arg6[%c0_33, %c0_34] : memref<1x32xf32, #tpu.memory_space<vmem>>, vector<1x32xf32>
    %114 = vector.broadcast %113 : vector<1x32xf32> to vector<4x32xf32>
    %115 = arith.mulf %112, %114 : vector<4x32xf32>
    %c0_35 = arith.constant 0 : index
    %c0_36 = arith.constant 0 : index
    %116 = vector.load %arg7[%c0_35, %c0_36] : memref<1x32xf32, #tpu.memory_space<vmem>>, vector<1x32xf32>
    %117 = vector.broadcast %116 : vector<1x32xf32> to vector<4x32xf32>
    %118 = arith.addf %115, %117 : vector<4x32xf32>
    %119 = vector.shape_cast %118 : vector<4x32xf32> to vector<1x4x32xf32>
    %120 = arith.truncf %119 : vector<1x4x32xf32> to vector<1x4x32xbf16>
    %c0_37 = arith.constant 0 : index
    %c0_38 = arith.constant 0 : index
    %c0_39 = arith.constant 0 : index
    %121 = vector.load %arg8[%c0_37, %c0_38, %c0_39] : memref<1x4x32xbf16, #tpu.memory_space<vmem>>, vector<1x4x32xbf16>
    tpu.vector_store %arg8[%c0_37, %c0_38, %c0_39], %120 {strides = array<i32>} : memref<1x4x32xbf16, #tpu.memory_space<vmem>>, vector<1x4x32xbf16>,
    return
  }
  func.func @transform_0(%arg0: i32) -> (i32, i32, i32) {
    %c0_i32 = arith.constant 0 : i32
    %c0_i32_0 = arith.constant 0 : i32
    %c0_i32_1 = arith.constant 0 : i32
    return %arg0, %c0_i32, %c0_i32_0 : i32, i32, i32
  }
  func.func @transform_1(%arg0: i32) -> (i32, i32) {
    %c0_i32 = arith.constant 0 : i32
    %c0_i32_0 = arith.constant 0 : i32
    %c0_i32_1 = arith.constant 0 : i32
    return %c0_i32, %c0_i32_0 : i32, i32
  }
  func.func @transform_2(%arg0: i32) -> (i32, i32) {
    %c0_i32 = arith.constant 0 : i32
    %c0_i32_0 = arith.constant 0 : i32
    %c0_i32_1 = arith.constant 0 : i32
    return %c0_i32, %c0_i32_0 : i32, i32
  }
  func.func @transform_3(%arg0: i32) -> (i32, i32) {
    %c0_i32 = arith.constant 0 : i32
    %c0_i32_0 = arith.constant 0 : i32
    %c0_i32_1 = arith.constant 0 : i32
    return %c0_i32, %c0_i32_0 : i32, i32
  }
  func.func @transform_4(%arg0: i32) -> (i32, i32) {
    %c0_i32 = arith.constant 0 : i32
    %c0_i32_0 = arith.constant 0 : i32
    %c0_i32_1 = arith.constant 0 : i32
    return %c0_i32, %c0_i32_0 : i32, i32
  }
  func.func @transform_5(%arg0: i32) -> (i32, i32) {
    %c0_i32 = arith.constant 0 : i32
    %c0_i32_0 = arith.constant 0 : i32
    %c0_i32_1 = arith.constant 0 : i32
    return %c0_i32, %c0_i32_0 : i32, i32
  }
  func.func @transform_6(%arg0: i32) -> (i32, i32) {
    %c0_i32 = arith.constant 0 : i32
    %c0_i32_0 = arith.constant 0 : i32
    %c0_i32_1 = arith.constant 0 : i32
    return %c0_i32, %c0_i32_0 : i32, i32
  }
  func.func @transform_7(%arg0: i32) -> (i32, i32, i32) {
    %c0_i32 = arith.constant 0 : i32
    %c0_i32_0 = arith.constant 0 : i32
    %c0_i32_1 = arith.constant 0 : i32
    return %arg0, %c0_i32, %c0_i32_0 : i32, i32, i32
  }
}

module attributes {stable_mosaic.version = 11 : i64} {
  func.func @_mha_ln_kernel(%arg0: i32, %arg1: memref<1x4x32xbf16, #tpu.memory_space<vmem>>, %arg2: memref<1x8x32xbf16, #tpu.memory_space<vmem>>, %arg3: memref<32x96xbf16, #tpu.memory_space<vmem>>, %arg4: memref<1x96xf32, #tpu.memory_space<vmem>>, %arg5: memref<32x32xbf16, #tpu.memory_space<vmem>>, %arg6: memref<1x32xf32, #tpu.memory_space<vmem>>, %arg7: memref<1x32xf32, #tpu.memory_space<vmem>>, %arg8: memref<1x32xf32, #tpu.memory_space<vmem>>, %arg9: memref<1x4x32xbf16, #tpu.memory_space<vmem>>) attributes {dimension_semantics = [#tpu.dimension_semantics<parallel>], iteration_bounds = array<i64: 2>, scalar_prefetch = 0 : i64, scratch_operands = 0 : i64, tpu.core_type = #tpu.core_type<tc>, window_params = [{transform_indices = @transform_0, window_bounds = array<i64: 1, 4, 32>}, {transform_indices = @transform_1, window_bounds = array<i64: 1, 8, 32>}, {pipeline_mode = #tpu.pipeline_mode<synchronous>, transform_indices = @transform_2, window_bounds = array<i64: 32, 96>}, {pipeline_mode = #tpu.pipeline_mode<synchronous>, transform_indices = @transform_3, window_bounds = array<i64: 1, 96>}, {pipeline_mode = #tpu.pipeline_mode<synchronous>, transform_indices = @transform_4, window_bounds = array<i64: 32, 32>}, {pipeline_mode = #tpu.pipeline_mode<synchronous>, transform_indices = @transform_5, window_bounds = array<i64: 1, 32>}, {pipeline_mode = #tpu.pipeline_mode<synchronous>, transform_indices = @transform_6, window_bounds = array<i64: 1, 32>}, {pipeline_mode = #tpu.pipeline_mode<synchronous>, transform_indices = @transform_7, window_bounds = array<i64: 1, 32>}, {transform_indices = @transform_8, window_bounds = array<i64: 1, 4, 32>}]} {
    %c0 = arith.constant 0 : index
    %c0_0 = arith.constant 0 : index
    %c0_1 = arith.constant 0 : index
    %0 = vector.load %arg1[%c0, %c0_0, %c0_1] : memref<1x4x32xbf16, #tpu.memory_space<vmem>>, vector<1x4x32xbf16>
    %1 = vector.shape_cast %0 : vector<1x4x32xbf16> to vector<4x32xbf16>
    %c0_2 = arith.constant 0 : index
    %c0_3 = arith.constant 0 : index
    %2 = vector.load %arg3[%c0_2, %c0_3] : memref<32x96xbf16, #tpu.memory_space<vmem>>, vector<32x96xbf16>
    %c0_4 = arith.constant 0 : index
    %c0_5 = arith.constant 0 : index
    %3 = vector.load %arg4[%c0_4, %c0_5] : memref<1x96xf32, #tpu.memory_space<vmem>>, vector<1x96xf32>
    %4 = vector.extract_strided_slice %2 {offsets = [0, 0], sizes = [32, 32], strides = [1, 1]} : vector<32x96xbf16> to vector<32x32xbf16>
    %cst = arith.constant dense<0.000000e+00> : vector<4x32xf32>
    %5 = tpu.matmul %1, %4, %cst {dimension_numbers = #tpu.dot_dimension_numbers<[1], [0], [0], [1], [0, 0, 1, 1], [], []>} : vector<4x32xbf16>, vector<32x32xbf16>, vector<4x32xf32> -> vector<4x32xf32>
    %6 = vector.extract_strided_slice %3 {offsets = [0, 0], sizes = [1, 32], strides = [1, 1]} : vector<1x96xf32> to vector<1x32xf32>
    %7 = vector.broadcast %6 : vector<1x32xf32> to vector<4x32xf32>
    %8 = arith.addf %5, %7 : vector<4x32xf32>
    %c0_6 = arith.constant 0 : index
    %c0_7 = arith.constant 0 : index
    %c0_8 = arith.constant 0 : index
    %9 = vector.load %arg2[%c0_6, %c0_7, %c0_8] : memref<1x8x32xbf16, #tpu.memory_space<vmem>>, vector<1x8x32xbf16>
    %10 = vector.shape_cast %9 : vector<1x8x32xbf16> to vector<8x32xbf16>
    %11 = vector.extract_strided_slice %2 {offsets = [0, 32], sizes = [32, 64], strides = [1, 1]} : vector<32x96xbf16> to vector<32x64xbf16>
    %cst_9 = arith.constant dense<0.000000e+00> : vector<8x64xf32>
    %12 = tpu.matmul %10, %11, %cst_9 {dimension_numbers = #tpu.dot_dimension_numbers<[1], [0], [0], [1], [0, 0, 1, 1], [], []>} : vector<8x32xbf16>, vector<32x64xbf16>, vector<8x64xf32> -> vector<8x64xf32>
    %13 = vector.extract_strided_slice %3 {offsets = [0, 32], sizes = [1, 64], strides = [1, 1]} : vector<1x96xf32> to vector<1x64xf32>
    %14 = vector.broadcast %13 : vector<1x64xf32> to vector<8x64xf32>
    %15 = arith.addf %12, %14 : vector<8x64xf32>
    %16 = vector.extract_strided_slice %15 {offsets = [0, 0], sizes = [8, 32], strides = [1, 1]} : vector<8x64xf32> to vector<8x32xf32>
    %17 = vector.shape_cast %16 : vector<8x32xf32> to vector<1x8x32xf32>
    %18 = vector.extract_strided_slice %15 {offsets = [0, 32], sizes = [8, 32], strides = [1, 1]} : vector<8x64xf32> to vector<8x32xf32>
    %19 = vector.shape_cast %18 : vector<8x32xf32> to vector<1x8x32xf32>
    %cst_10 = arith.constant 0.353553385 : f32
    %20 = vector.broadcast %cst_10 : f32 to vector<4x32xf32>
    %21 = arith.mulf %8, %20 : vector<4x32xf32>
    %22 = vector.shape_cast %21 : vector<4x32xf32> to vector<1x4x32xf32>
    %23 = arith.truncf %22 : vector<1x4x32xf32> to vector<1x4x32xbf16>
    %24 = arith.truncf %17 : vector<1x8x32xf32> to vector<1x8x32xbf16>
    %25 = arith.truncf %19 : vector<1x8x32xf32> to vector<1x8x32xbf16>
    %26 = vector.extract_strided_slice %23 {offsets = [0, 0, 0], sizes = [1, 4, 8], strides = [1, 1, 1]} : vector<1x4x32xbf16> to vector<1x4x8xbf16>
    %27 = vector.extract_strided_slice %24 {offsets = [0, 0, 0], sizes = [1, 8, 8], strides = [1, 1, 1]} : vector<1x8x32xbf16> to vector<1x8x8xbf16>
    %28 = vector.extract_strided_slice %25 {offsets = [0, 0, 0], sizes = [1, 8, 8], strides = [1, 1, 1]} : vector<1x8x32xbf16> to vector<1x8x8xbf16>
    %cst_11 = arith.constant dense<0.000000e+00> : vector<1x4x8xf32>
    %29 = tpu.matmul %26, %27, %cst_11 {dimension_numbers = #tpu.dot_dimension_numbers<[2], [2], [1], [1], [0, 0, 0, 1, 1, 1], [0], [0]>} : vector<1x4x8xbf16>, vector<1x8x8xbf16>, vector<1x4x8xf32> -> vector<1x4x8xf32>
    %cst_12 = arith.constant dense<0xFF800000> : vector<1x4xf32>
    %30 = vector.multi_reduction <maximumf>, %29, %cst_12 [2] : vector<1x4x8xf32> to vector<1x4xf32>
    %31 = vector.shape_cast %30 : vector<1x4xf32> to vector<1x4x1xf32>
    %32 = vector.broadcast %31 : vector<1x4x1xf32> to vector<1x4x8xf32>
    %33 = arith.subf %29, %32 : vector<1x4x8xf32>
    %34 = math.exp %33 : vector<1x4x8xf32>
    %cst_13 = arith.constant dense<0.000000e+00> : vector<1x4xf32>
    %35 = vector.multi_reduction <add>, %34, %cst_13 [2] : vector<1x4x8xf32> to vector<1x4xf32>
    %36 = vector.shape_cast %35 : vector<1x4xf32> to vector<1x4x1xf32>
    %37 = tpu.reciprocal %36 {approx = true} : vector<1x4x1xf32> -> vector<1x4x1xf32>
    %38 = vector.broadcast %37 : vector<1x4x1xf32> to vector<1x4x8xf32>
    %39 = arith.mulf %34, %38 : vector<1x4x8xf32>
    %40 = arith.truncf %39 : vector<1x4x8xf32> to vector<1x4x8xbf16>
    %cst_14 = arith.constant dense<0.000000e+00> : vector<1x4x8xf32>
    %41 = tpu.matmul %40, %28, %cst_14 {dimension_numbers = #tpu.dot_dimension_numbers<[2], [1], [1], [2], [0, 0, 0, 1, 1, 2], [0], [0]>} : vector<1x4x8xbf16>, vector<1x8x8xbf16>, vector<1x4x8xf32> -> vector<1x4x8xf32>
    %42 = arith.truncf %41 : vector<1x4x8xf32> to vector<1x4x8xbf16>
    %43 = vector.extract_strided_slice %23 {offsets = [0, 0, 8], sizes = [1, 4, 8], strides = [1, 1, 1]} : vector<1x4x32xbf16> to vector<1x4x8xbf16>
    %44 = vector.extract_strided_slice %24 {offsets = [0, 0, 8], sizes = [1, 8, 8], strides = [1, 1, 1]} : vector<1x8x32xbf16> to vector<1x8x8xbf16>
    %45 = vector.extract_strided_slice %25 {offsets = [0, 0, 8], sizes = [1, 8, 8], strides = [1, 1, 1]} : vector<1x8x32xbf16> to vector<1x8x8xbf16>
    %cst_15 = arith.constant dense<0.000000e+00> : vector<1x4x8xf32>
    %46 = tpu.matmul %43, %44, %cst_15 {dimension_numbers = #tpu.dot_dimension_numbers<[2], [2], [1], [1], [0, 0, 0, 1, 1, 1], [0], [0]>} : vector<1x4x8xbf16>, vector<1x8x8xbf16>, vector<1x4x8xf32> -> vector<1x4x8xf32>
    %cst_16 = arith.constant dense<0xFF800000> : vector<1x4xf32>
    %47 = vector.multi_reduction <maximumf>, %46, %cst_16 [2] : vector<1x4x8xf32> to vector<1x4xf32>
    %48 = vector.shape_cast %47 : vector<1x4xf32> to vector<1x4x1xf32>
    %49 = vector.broadcast %48 : vector<1x4x1xf32> to vector<1x4x8xf32>
    %50 = arith.subf %46, %49 : vector<1x4x8xf32>
    %51 = math.exp %50 : vector<1x4x8xf32>
    %cst_17 = arith.constant dense<0.000000e+00> : vector<1x4xf32>
    %52 = vector.multi_reduction <add>, %51, %cst_17 [2] : vector<1x4x8xf32> to vector<1x4xf32>
    %53 = vector.shape_cast %52 : vector<1x4xf32> to vector<1x4x1xf32>
    %54 = tpu.reciprocal %53 {approx = true} : vector<1x4x1xf32> -> vector<1x4x1xf32>
    %55 = vector.broadcast %54 : vector<1x4x1xf32> to vector<1x4x8xf32>
    %56 = arith.mulf %51, %55 : vector<1x4x8xf32>
    %57 = arith.truncf %56 : vector<1x4x8xf32> to vector<1x4x8xbf16>
    %cst_18 = arith.constant dense<0.000000e+00> : vector<1x4x8xf32>
    %58 = tpu.matmul %57, %45, %cst_18 {dimension_numbers = #tpu.dot_dimension_numbers<[2], [1], [1], [2], [0, 0, 0, 1, 1, 2], [0], [0]>} : vector<1x4x8xbf16>, vector<1x8x8xbf16>, vector<1x4x8xf32> -> vector<1x4x8xf32>
    %59 = arith.truncf %58 : vector<1x4x8xf32> to vector<1x4x8xbf16>
    %60 = vector.extract_strided_slice %23 {offsets = [0, 0, 16], sizes = [1, 4, 8], strides = [1, 1, 1]} : vector<1x4x32xbf16> to vector<1x4x8xbf16>
    %61 = vector.extract_strided_slice %24 {offsets = [0, 0, 16], sizes = [1, 8, 8], strides = [1, 1, 1]} : vector<1x8x32xbf16> to vector<1x8x8xbf16>
    %62 = vector.extract_strided_slice %25 {offsets = [0, 0, 16], sizes = [1, 8, 8], strides = [1, 1, 1]} : vector<1x8x32xbf16> to vector<1x8x8xbf16>
    %cst_19 = arith.constant dense<0.000000e+00> : vector<1x4x8xf32>
    %63 = tpu.matmul %60, %61, %cst_19 {dimension_numbers = #tpu.dot_dimension_numbers<[2], [2], [1], [1], [0, 0, 0, 1, 1, 1], [0], [0]>} : vector<1x4x8xbf16>, vector<1x8x8xbf16>, vector<1x4x8xf32> -> vector<1x4x8xf32>
    %cst_20 = arith.constant dense<0xFF800000> : vector<1x4xf32>
    %64 = vector.multi_reduction <maximumf>, %63, %cst_20 [2] : vector<1x4x8xf32> to vector<1x4xf32>
    %65 = vector.shape_cast %64 : vector<1x4xf32> to vector<1x4x1xf32>
    %66 = vector.broadcast %65 : vector<1x4x1xf32> to vector<1x4x8xf32>
    %67 = arith.subf %63, %66 : vector<1x4x8xf32>
    %68 = math.exp %67 : vector<1x4x8xf32>
    %cst_21 = arith.constant dense<0.000000e+00> : vector<1x4xf32>
    %69 = vector.multi_reduction <add>, %68, %cst_21 [2] : vector<1x4x8xf32> to vector<1x4xf32>
    %70 = vector.shape_cast %69 : vector<1x4xf32> to vector<1x4x1xf32>
    %71 = tpu.reciprocal %70 {approx = true} : vector<1x4x1xf32> -> vector<1x4x1xf32>
    %72 = vector.broadcast %71 : vector<1x4x1xf32> to vector<1x4x8xf32>
    %73 = arith.mulf %68, %72 : vector<1x4x8xf32>
    %74 = arith.truncf %73 : vector<1x4x8xf32> to vector<1x4x8xbf16>
    %cst_22 = arith.constant dense<0.000000e+00> : vector<1x4x8xf32>
    %75 = tpu.matmul %74, %62, %cst_22 {dimension_numbers = #tpu.dot_dimension_numbers<[2], [1], [1], [2], [0, 0, 0, 1, 1, 2], [0], [0]>} : vector<1x4x8xbf16>, vector<1x8x8xbf16>, vector<1x4x8xf32> -> vector<1x4x8xf32>
    %76 = arith.truncf %75 : vector<1x4x8xf32> to vector<1x4x8xbf16>
    %77 = vector.extract_strided_slice %23 {offsets = [0, 0, 24], sizes = [1, 4, 8], strides = [1, 1, 1]} : vector<1x4x32xbf16> to vector<1x4x8xbf16>
    %78 = vector.extract_strided_slice %24 {offsets = [0, 0, 24], sizes = [1, 8, 8], strides = [1, 1, 1]} : vector<1x8x32xbf16> to vector<1x8x8xbf16>
    %79 = vector.extract_strided_slice %25 {offsets = [0, 0, 24], sizes = [1, 8, 8], strides = [1, 1, 1]} : vector<1x8x32xbf16> to vector<1x8x8xbf16>
    %cst_23 = arith.constant dense<0.000000e+00> : vector<1x4x8xf32>
    %80 = tpu.matmul %77, %78, %cst_23 {dimension_numbers = #tpu.dot_dimension_numbers<[2], [2], [1], [1], [0, 0, 0, 1, 1, 1], [0], [0]>} : vector<1x4x8xbf16>, vector<1x8x8xbf16>, vector<1x4x8xf32> -> vector<1x4x8xf32>
    %cst_24 = arith.constant dense<0xFF800000> : vector<1x4xf32>
    %81 = vector.multi_reduction <maximumf>, %80, %cst_24 [2] : vector<1x4x8xf32> to vector<1x4xf32>
    %82 = vector.shape_cast %81 : vector<1x4xf32> to vector<1x4x1xf32>
    %83 = vector.broadcast %82 : vector<1x4x1xf32> to vector<1x4x8xf32>
    %84 = arith.subf %80, %83 : vector<1x4x8xf32>
    %85 = math.exp %84 : vector<1x4x8xf32>
    %cst_25 = arith.constant dense<0.000000e+00> : vector<1x4xf32>
    %86 = vector.multi_reduction <add>, %85, %cst_25 [2] : vector<1x4x8xf32> to vector<1x4xf32>
    %87 = vector.shape_cast %86 : vector<1x4xf32> to vector<1x4x1xf32>
    %88 = tpu.reciprocal %87 {approx = true} : vector<1x4x1xf32> -> vector<1x4x1xf32>
    %89 = vector.broadcast %88 : vector<1x4x1xf32> to vector<1x4x8xf32>
    %90 = arith.mulf %85, %89 : vector<1x4x8xf32>
    %91 = arith.truncf %90 : vector<1x4x8xf32> to vector<1x4x8xbf16>
    %cst_26 = arith.constant dense<0.000000e+00> : vector<1x4x8xf32>
    %92 = tpu.matmul %91, %79, %cst_26 {dimension_numbers = #tpu.dot_dimension_numbers<[2], [1], [1], [2], [0, 0, 0, 1, 1, 2], [0], [0]>} : vector<1x4x8xbf16>, vector<1x8x8xbf16>, vector<1x4x8xf32> -> vector<1x4x8xf32>
    %93 = arith.truncf %92 : vector<1x4x8xf32> to vector<1x4x8xbf16>
    %94 = tpu.concatenate %42, %59, %76, %93 in 2 : vector<1x4x8xbf16>, vector<1x4x8xbf16>, vector<1x4x8xbf16>, vector<1x4x8xbf16> -> vector<1x4x32xbf16>
    %95 = vector.shape_cast %94 : vector<1x4x32xbf16> to vector<4x32xbf16>
    %c0_27 = arith.constant 0 : index
    %c0_28 = arith.constant 0 : index
    %96 = vector.load %arg5[%c0_27, %c0_28] : memref<32x32xbf16, #tpu.memory_space<vmem>>, vector<32x32xbf16>
    %cst_29 = arith.constant dense<0.000000e+00> : vector<4x32xf32>
    %97 = tpu.matmul %95, %96, %cst_29 {dimension_numbers = #tpu.dot_dimension_numbers<[1], [0], [0], [1], [0, 0, 1, 1], [], []>} : vector<4x32xbf16>, vector<32x32xbf16>, vector<4x32xf32> -> vector<4x32xf32>
    %c0_30 = arith.constant 0 : index
    %c0_31 = arith.constant 0 : index
    %98 = vector.load %arg6[%c0_30, %c0_31] : memref<1x32xf32, #tpu.memory_space<vmem>>, vector<1x32xf32>
    %99 = vector.broadcast %98 : vector<1x32xf32> to vector<4x32xf32>
    %100 = arith.addf %97, %99 : vector<4x32xf32>
    %101 = arith.extf %1 : vector<4x32xbf16> to vector<4x32xf32>
    %102 = arith.addf %101, %100 : vector<4x32xf32>
    %cst_32 = arith.constant dense<0.000000e+00> : vector<4xf32>
    %103 = vector.multi_reduction <add>, %102, %cst_32 [1] : vector<4x32xf32> to vector<4xf32>
    %104 = vector.shape_cast %103 : vector<4xf32> to vector<4x1xf32>
    %cst_33 = arith.constant 3.200000e+01 : f32
    %105 = vector.broadcast %cst_33 : f32 to vector<4x1xf32>
    %106 = arith.divf %104, %105 : vector<4x1xf32>
    %107 = vector.broadcast %106 : vector<4x1xf32> to vector<4x32xf32>
    %108 = arith.subf %102, %107 : vector<4x32xf32>
    %109 = arith.mulf %108, %108 : vector<4x32xf32>
    %cst_34 = arith.constant dense<0.000000e+00> : vector<4xf32>
    %110 = vector.multi_reduction <add>, %109, %cst_34 [1] : vector<4x32xf32> to vector<4xf32>
    %111 = vector.shape_cast %110 : vector<4xf32> to vector<4x1xf32>
    %cst_35 = arith.constant 3.200000e+01 : f32
    %112 = vector.broadcast %cst_35 : f32 to vector<4x1xf32>
    %113 = arith.divf %111, %112 : vector<4x1xf32>
    %114 = vector.broadcast %106 : vector<4x1xf32> to vector<4x32xf32>
    %115 = arith.subf %102, %114 : vector<4x32xf32>
    %cst_36 = arith.constant 9.99999974E-6 : f32
    %116 = vector.broadcast %cst_36 : f32 to vector<4x1xf32>
    %117 = arith.addf %113, %116 : vector<4x1xf32>
    %118 = math.rsqrt %117 : vector<4x1xf32>
    %119 = vector.broadcast %118 : vector<4x1xf32> to vector<4x32xf32>
    %120 = arith.mulf %115, %119 : vector<4x32xf32>
    %c0_37 = arith.constant 0 : index
    %c0_38 = arith.constant 0 : index
    %121 = vector.load %arg7[%c0_37, %c0_38] : memref<1x32xf32, #tpu.memory_space<vmem>>, vector<1x32xf32>
    %122 = vector.broadcast %121 : vector<1x32xf32> to vector<4x32xf32>
    %123 = arith.mulf %120, %122 : vector<4x32xf32>
    %c0_39 = arith.constant 0 : index
    %c0_40 = arith.constant 0 : index
    %124 = vector.load %arg8[%c0_39, %c0_40] : memref<1x32xf32, #tpu.memory_space<vmem>>, vector<1x32xf32>
    %125 = vector.broadcast %124 : vector<1x32xf32> to vector<4x32xf32>
    %126 = arith.addf %123, %125 : vector<4x32xf32>
    %127 = vector.shape_cast %126 : vector<4x32xf32> to vector<1x4x32xf32>
    %128 = arith.truncf %127 : vector<1x4x32xf32> to vector<1x4x32xbf16>
    %c0_41 = arith.constant 0 : index
    %c0_42 = arith.constant 0 : index
    %c0_43 = arith.constant 0 : index
    %129 = vector.load %arg9[%c0_41, %c0_42, %c0_43] : memref<1x4x32xbf16, #tpu.memory_space<vmem>>, vector<1x4x32xbf16>
    tpu.vector_store %arg9[%c0_41, %c0_42, %c0_43], %128 {strides = array<i32>} : memref<1x4x32xbf16, #tpu.memory_space<vmem>>, vector<1x4x32xbf16>,
    return
  }
  func.func @transform_0(%arg0: i32) -> (i32, i32, i32) {
    %c0_i32 = arith.constant 0 : i32
    %c0_i32_0 = arith.constant 0 : i32
    %c0_i32_1 = arith.constant 0 : i32
    return %arg0, %c0_i32, %c0_i32_0 : i32, i32, i32
  }
  func.func @transform_1(%arg0: i32) -> (i32, i32, i32) {
    %c0_i32 = arith.constant 0 : i32
    %c0_i32_0 = arith.constant 0 : i32
    %c0_i32_1 = arith.constant 0 : i32
    return %arg0, %c0_i32, %c0_i32_0 : i32, i32, i32
  }
  func.func @transform_2(%arg0: i32) -> (i32, i32) {
    %c0_i32 = arith.constant 0 : i32
    %c0_i32_0 = arith.constant 0 : i32
    %c0_i32_1 = arith.constant 0 : i32
    return %c0_i32, %c0_i32_0 : i32, i32
  }
  func.func @transform_3(%arg0: i32) -> (i32, i32) {
    %c0_i32 = arith.constant 0 : i32
    %c0_i32_0 = arith.constant 0 : i32
    %c0_i32_1 = arith.constant 0 : i32
    return %c0_i32, %c0_i32_0 : i32, i32
  }
  func.func @transform_4(%arg0: i32) -> (i32, i32) {
    %c0_i32 = arith.constant 0 : i32
    %c0_i32_0 = arith.constant 0 : i32
    %c0_i32_1 = arith.constant 0 : i32
    return %c0_i32, %c0_i32_0 : i32, i32
  }
  func.func @transform_5(%arg0: i32) -> (i32, i32) {
    %c0_i32 = arith.constant 0 : i32
    %c0_i32_0 = arith.constant 0 : i32
    %c0_i32_1 = arith.constant 0 : i32
    return %c0_i32, %c0_i32_0 : i32, i32
  }
  func.func @transform_6(%arg0: i32) -> (i32, i32) {
    %c0_i32 = arith.constant 0 : i32
    %c0_i32_0 = arith.constant 0 : i32
    %c0_i32_1 = arith.constant 0 : i32
    return %c0_i32, %c0_i32_0 : i32, i32
  }
  func.func @transform_7(%arg0: i32) -> (i32, i32) {
    %c0_i32 = arith.constant 0 : i32
    %c0_i32_0 = arith.constant 0 : i32
    %c0_i32_1 = arith.constant 0 : i32
    return %c0_i32, %c0_i32_0 : i32, i32
  }
  func.func @transform_8(%arg0: i32) -> (i32, i32, i32) {
    %c0_i32 = arith.constant 0 : i32
    %c0_i32_0 = arith.constant 0 : i32
    %c0_i32_1 = arith.constant 0 : i32
    return %arg0, %c0_i32, %c0_i32_0 : i32, i32, i32
  }
}

module attributes {stable_mosaic.version = 11 : i64} {
  func.func @_ffn_ln_kernel(%arg0: i32, %arg1: memref<8x32xbf16, #tpu.memory_space<vmem>>, %arg2: memref<32x64xbf16, #tpu.memory_space<vmem>>, %arg3: memref<1x64xf32, #tpu.memory_space<vmem>>, %arg4: memref<64x32xbf16, #tpu.memory_space<vmem>>, %arg5: memref<1x32xf32, #tpu.memory_space<vmem>>, %arg6: memref<1x32xf32, #tpu.memory_space<vmem>>, %arg7: memref<1x32xf32, #tpu.memory_space<vmem>>, %arg8: memref<8x32xbf16, #tpu.memory_space<vmem>>) attributes {dimension_semantics = [#tpu.dimension_semantics<parallel>], iteration_bounds = array<i64: 1>, scalar_prefetch = 0 : i64, scratch_operands = 0 : i64, tpu.core_type = #tpu.core_type<tc>, window_params = [{transform_indices = @transform_0, window_bounds = array<i64: 8, 32>}, {pipeline_mode = #tpu.pipeline_mode<synchronous>, transform_indices = @transform_1, window_bounds = array<i64: 32, 64>}, {pipeline_mode = #tpu.pipeline_mode<synchronous>, transform_indices = @transform_2, window_bounds = array<i64: 1, 64>}, {pipeline_mode = #tpu.pipeline_mode<synchronous>, transform_indices = @transform_3, window_bounds = array<i64: 64, 32>}, {pipeline_mode = #tpu.pipeline_mode<synchronous>, transform_indices = @transform_4, window_bounds = array<i64: 1, 32>}, {pipeline_mode = #tpu.pipeline_mode<synchronous>, transform_indices = @transform_5, window_bounds = array<i64: 1, 32>}, {pipeline_mode = #tpu.pipeline_mode<synchronous>, transform_indices = @transform_6, window_bounds = array<i64: 1, 32>}, {transform_indices = @transform_7, window_bounds = array<i64: 8, 32>}]} {
    %c0 = arith.constant 0 : index
    %c0_0 = arith.constant 0 : index
    %0 = vector.load %arg1[%c0, %c0_0] : memref<8x32xbf16, #tpu.memory_space<vmem>>, vector<8x32xbf16>
    %c0_1 = arith.constant 0 : index
    %c0_2 = arith.constant 0 : index
    %1 = vector.load %arg2[%c0_1, %c0_2] : memref<32x64xbf16, #tpu.memory_space<vmem>>, vector<32x64xbf16>
    %cst = arith.constant dense<0.000000e+00> : vector<8x64xf32>
    %2 = tpu.matmul %0, %1, %cst {dimension_numbers = #tpu.dot_dimension_numbers<[1], [0], [0], [1], [0, 0, 1, 1], [], []>} : vector<8x32xbf16>, vector<32x64xbf16>, vector<8x64xf32> -> vector<8x64xf32>
    %c0_3 = arith.constant 0 : index
    %c0_4 = arith.constant 0 : index
    %3 = vector.load %arg3[%c0_3, %c0_4] : memref<1x64xf32, #tpu.memory_space<vmem>>, vector<1x64xf32>
    %4 = vector.broadcast %3 : vector<1x64xf32> to vector<8x64xf32>
    %5 = arith.addf %2, %4 : vector<8x64xf32>
    %cst_5 = arith.constant 0.000000e+00 : f32
    %6 = vector.broadcast %cst_5 : f32 to vector<8x64xf32>
    %7 = arith.maximumf %5, %6 : vector<8x64xf32>
    %8 = arith.truncf %7 : vector<8x64xf32> to vector<8x64xbf16>
    %c0_6 = arith.constant 0 : index
    %c0_7 = arith.constant 0 : index
    %9 = vector.load %arg4[%c0_6, %c0_7] : memref<64x32xbf16, #tpu.memory_space<vmem>>, vector<64x32xbf16>
    %cst_8 = arith.constant dense<0.000000e+00> : vector<8x32xf32>
    %10 = tpu.matmul %8, %9, %cst_8 {dimension_numbers = #tpu.dot_dimension_numbers<[1], [0], [0], [1], [0, 0, 1, 1], [], []>} : vector<8x64xbf16>, vector<64x32xbf16>, vector<8x32xf32> -> vector<8x32xf32>
    %c0_9 = arith.constant 0 : index
    %c0_10 = arith.constant 0 : index
    %11 = vector.load %arg5[%c0_9, %c0_10] : memref<1x32xf32, #tpu.memory_space<vmem>>, vector<1x32xf32>
    %12 = vector.broadcast %11 : vector<1x32xf32> to vector<8x32xf32>
    %13 = arith.addf %10, %12 : vector<8x32xf32>
    %14 = arith.extf %0 : vector<8x32xbf16> to vector<8x32xf32>
    %15 = arith.addf %14, %13 : vector<8x32xf32>
    %cst_11 = arith.constant dense<0.000000e+00> : vector<8xf32>
    %16 = vector.multi_reduction <add>, %15, %cst_11 [1] : vector<8x32xf32> to vector<8xf32>
    %17 = vector.shape_cast %16 : vector<8xf32> to vector<8x1xf32>
    %cst_12 = arith.constant 3.200000e+01 : f32
    %18 = vector.broadcast %cst_12 : f32 to vector<8x1xf32>
    %19 = arith.divf %17, %18 : vector<8x1xf32>
    %20 = vector.broadcast %19 : vector<8x1xf32> to vector<8x32xf32>
    %21 = arith.subf %15, %20 : vector<8x32xf32>
    %22 = arith.mulf %21, %21 : vector<8x32xf32>
    %cst_13 = arith.constant dense<0.000000e+00> : vector<8xf32>
    %23 = vector.multi_reduction <add>, %22, %cst_13 [1] : vector<8x32xf32> to vector<8xf32>
    %24 = vector.shape_cast %23 : vector<8xf32> to vector<8x1xf32>
    %cst_14 = arith.constant 3.200000e+01 : f32
    %25 = vector.broadcast %cst_14 : f32 to vector<8x1xf32>
    %26 = arith.divf %24, %25 : vector<8x1xf32>
    %27 = vector.broadcast %19 : vector<8x1xf32> to vector<8x32xf32>
    %28 = arith.subf %15, %27 : vector<8x32xf32>
    %cst_15 = arith.constant 9.99999974E-6 : f32
    %29 = vector.broadcast %cst_15 : f32 to vector<8x1xf32>
    %30 = arith.addf %26, %29 : vector<8x1xf32>
    %31 = math.rsqrt %30 : vector<8x1xf32>
    %32 = vector.broadcast %31 : vector<8x1xf32> to vector<8x32xf32>
    %33 = arith.mulf %28, %32 : vector<8x32xf32>
    %c0_16 = arith.constant 0 : index
    %c0_17 = arith.constant 0 : index
    %34 = vector.load %arg6[%c0_16, %c0_17] : memref<1x32xf32, #tpu.memory_space<vmem>>, vector<1x32xf32>
    %35 = vector.broadcast %34 : vector<1x32xf32> to vector<8x32xf32>
    %36 = arith.mulf %33, %35 : vector<8x32xf32>
    %c0_18 = arith.constant 0 : index
    %c0_19 = arith.constant 0 : index
    %37 = vector.load %arg7[%c0_18, %c0_19] : memref<1x32xf32, #tpu.memory_space<vmem>>, vector<1x32xf32>
    %38 = vector.broadcast %37 : vector<1x32xf32> to vector<8x32xf32>
    %39 = arith.addf %36, %38 : vector<8x32xf32>
    %40 = arith.truncf %39 : vector<8x32xf32> to vector<8x32xbf16>
    %c0_20 = arith.constant 0 : index
    %c0_21 = arith.constant 0 : index
    %41 = vector.load %arg8[%c0_20, %c0_21] : memref<8x32xbf16, #tpu.memory_space<vmem>>, vector<8x32xbf16>
    tpu.vector_store %arg8[%c0_20, %c0_21], %40 {strides = array<i32>} : memref<8x32xbf16, #tpu.memory_space<vmem>>, vector<8x32xbf16>,
    return
  }
  func.func @transform_0(%arg0: i32) -> (i32, i32) {
    %c0_i32 = arith.constant 0 : i32
    %c0_i32_0 = arith.constant 0 : i32
    return %arg0, %c0_i32 : i32, i32
  }
  func.func @transform_1(%arg0: i32) -> (i32, i32) {
    %c0_i32 = arith.constant 0 : i32
    %c0_i32_0 = arith.constant 0 : i32
    %c0_i32_1 = arith.constant 0 : i32
    return %c0_i32, %c0_i32_0 : i32, i32
  }
  func.func @transform_2(%arg0: i32) -> (i32, i32) {
    %c0_i32 = arith.constant 0 : i32
    %c0_i32_0 = arith.constant 0 : i32
    %c0_i32_1 = arith.constant 0 : i32
    return %c0_i32, %c0_i32_0 : i32, i32
  }
  func.func @transform_3(%arg0: i32) -> (i32, i32) {
    %c0_i32 = arith.constant 0 : i32
    %c0_i32_0 = arith.constant 0 : i32
    %c0_i32_1 = arith.constant 0 : i32
    return %c0_i32, %c0_i32_0 : i32, i32
  }
  func.func @transform_4(%arg0: i32) -> (i32, i32) {
    %c0_i32 = arith.constant 0 : i32
    %c0_i32_0 = arith.constant 0 : i32
    %c0_i32_1 = arith.constant 0 : i32
    return %c0_i32, %c0_i32_0 : i32, i32
  }
  func.func @transform_5(%arg0: i32) -> (i32, i32) {
    %c0_i32 = arith.constant 0 : i32
    %c0_i32_0 = arith.constant 0 : i32
    %c0_i32_1 = arith.constant 0 : i32
    return %c0_i32, %c0_i32_0 : i32, i32
  }
  func.func @transform_6(%arg0: i32) -> (i32, i32) {
    %c0_i32 = arith.constant 0 : i32
    %c0_i32_0 = arith.constant 0 : i32
    %c0_i32_1 = arith.constant 0 : i32
    return %c0_i32, %c0_i32_0 : i32, i32
  }
  func.func @transform_7(%arg0: i32) -> (i32, i32) {
    %c0_i32 = arith.constant 0 : i32
    %c0_i32_0 = arith.constant 0 : i32
    return %arg0, %c0_i32 : i32, i32
  }
}

module attributes {stable_mosaic.version = 11 : i64} {
  func.func @_linear_softmax_kernel(%arg0: i32, %arg1: memref<8x32xbf16, #tpu.memory_space<vmem>>, %arg2: memref<32x32xbf16, #tpu.memory_space<vmem>>, %arg3: memref<1x32xf32, #tpu.memory_space<vmem>>, %arg4: memref<8x32xf32, #tpu.memory_space<vmem>>) attributes {dimension_semantics = [#tpu.dimension_semantics<parallel>], iteration_bounds = array<i64: 1>, scalar_prefetch = 0 : i64, scratch_operands = 0 : i64, tpu.core_type = #tpu.core_type<tc>, window_params = [{transform_indices = @transform_0, window_bounds = array<i64: 8, 32>}, {pipeline_mode = #tpu.pipeline_mode<synchronous>, transform_indices = @transform_1, window_bounds = array<i64: 32, 32>}, {pipeline_mode = #tpu.pipeline_mode<synchronous>, transform_indices = @transform_2, window_bounds = array<i64: 1, 32>}, {transform_indices = @transform_3, window_bounds = array<i64: 8, 32>}]} {
    %c0 = arith.constant 0 : index
    %c0_0 = arith.constant 0 : index
    %0 = vector.load %arg1[%c0, %c0_0] : memref<8x32xbf16, #tpu.memory_space<vmem>>, vector<8x32xbf16>
    %c0_1 = arith.constant 0 : index
    %c0_2 = arith.constant 0 : index
    %1 = vector.load %arg2[%c0_1, %c0_2] : memref<32x32xbf16, #tpu.memory_space<vmem>>, vector<32x32xbf16>
    %cst = arith.constant dense<0.000000e+00> : vector<8x32xf32>
    %2 = tpu.matmul %0, %1, %cst {dimension_numbers = #tpu.dot_dimension_numbers<[1], [0], [0], [1], [0, 0, 1, 1], [], []>} : vector<8x32xbf16>, vector<32x32xbf16>, vector<8x32xf32> -> vector<8x32xf32>
    %c0_3 = arith.constant 0 : index
    %c0_4 = arith.constant 0 : index
    %3 = vector.load %arg3[%c0_3, %c0_4] : memref<1x32xf32, #tpu.memory_space<vmem>>, vector<1x32xf32>
    %4 = vector.broadcast %3 : vector<1x32xf32> to vector<8x32xf32>
    %5 = arith.addf %2, %4 : vector<8x32xf32>
    %cst_5 = arith.constant dense<0xFF800000> : vector<8xf32>
    %6 = vector.multi_reduction <maximumf>, %5, %cst_5 [1] : vector<8x32xf32> to vector<8xf32>
    %7 = vector.shape_cast %6 : vector<8xf32> to vector<8x1xf32>
    %8 = vector.broadcast %7 : vector<8x1xf32> to vector<8x32xf32>
    %9 = arith.subf %5, %8 : vector<8x32xf32>
    %10 = math.exp %9 : vector<8x32xf32>
    %cst_6 = arith.constant dense<0.000000e+00> : vector<8xf32>
    %11 = vector.multi_reduction <add>, %10, %cst_6 [1] : vector<8x32xf32> to vector<8xf32>
    %12 = vector.shape_cast %11 : vector<8xf32> to vector<8x1xf32>
    %13 = vector.broadcast %12 : vector<8x1xf32> to vector<8x32xf32>
    %14 = arith.divf %10, %13 : vector<8x32xf32>
    %c0_7 = arith.constant 0 : index
    %c0_8 = arith.constant 0 : index
    %15 = vector.load %arg4[%c0_7, %c0_8] : memref<8x32xf32, #tpu.memory_space<vmem>>, vector<8x32xf32>
    tpu.vector_store %arg4[%c0_7, %c0_8], %14 {strides = array<i32>} : memref<8x32xf32, #tpu.memory_space<vmem>>, vector<8x32xf32>,
    return
  }
  func.func @transform_0(%arg0: i32) -> (i32, i32) {
    %c0_i32 = arith.constant 0 : i32
    %c0_i32_0 = arith.constant 0 : i32
    return %arg0, %c0_i32 : i32, i32
  }
  func.func @transform_1(%arg0: i32) -> (i32, i32) {
    %c0_i32 = arith.constant 0 : i32
    %c0_i32_0 = arith.constant 0 : i32
    %c0_i32_1 = arith.constant 0 : i32
    return %c0_i32, %c0_i32_0 : i32, i32
  }
  func.func @transform_2(%arg0: i32) -> (i32, i32) {
    %c0_i32 = arith.constant 0 : i32
    %c0_i32_0 = arith.constant 0 : i32
    %c0_i32_1 = arith.constant 0 : i32
    return %c0_i32, %c0_i32_0 : i32, i32
  }
  func.func @transform_3(%arg0: i32) -> (i32, i32) {
    %c0_i32 = arith.constant 0 : i32
    %c0_i32_0 = arith.constant 0 : i32
    return %arg0, %c0_i32 : i32, i32
  }
}

</mosaic_0001>

<llo_original>
// kernel: transformer_forward.12
$region0: #{transformer_forward.12}
  #allocation0 [shape = 'u32[]', space=smem, size = 0x4, offset = 0x4, fixed_abs, tag = 'smem constant byte address 0x4 - core index']
  #allocation1 [shape = 'u32[144,128]{1,0:T(1,128)}', space=vmem, size = 0x12000, scoped, tag = 'internal scratch']
  %s0 = inlined_call_operand.vmem [shape: bf16[16,32], index: 0, kind: input, shape index: {}]
  %s1 = inlined_call_operand.vmem [shape: bf16[32,64], index: 1, kind: input, shape index: {}]
  %s2 = inlined_call_operand.vmem [shape: f32[1,64], index: 2, kind: input, shape index: {}]
  %s3 = inlined_call_operand.vmem [shape: bf16[64,32], index: 3, kind: input, shape index: {}]
  %s4 = inlined_call_operand.vmem [shape: f32[1,32], index: 4, kind: input, shape index: {}]
  %s5 = inlined_call_operand.vmem [shape: f32[1,32], index: 5, kind: input, shape index: {}]
  %s6 = inlined_call_operand.vmem [shape: f32[1,32], index: 6, kind: input, shape index: {}]
  %s7 = inlined_call_operand.vmem [shape: bf16[16,32], index: 7, kind: output, shape index: {}]
  %s8 = sld [smem:[#allocation0]]
  $region38: #{transformer_forward.12} parent=0
    _
  %s10 = ssub.s32 1, %s8
  %s11 = scalar_select 0, %s10, %s8
  // Predicated region
  $region2: #{transformer_forward.12} parent=0 // pred_check
    _
  $region3: #{transformer_forward.12} parent=0 // pred_check_branch
    %13 = sbr.rel (0) target = $region5
  $region4: #{transformer_forward.12} parent=0 // pred_region
    _
  $region5: #{transformer_forward.12} parent=0 // pred_fallthru
    _
  // Predicated region
  $region6: #{transformer_forward.12} parent=0 // pred_check
    _
  $region7: #{transformer_forward.12} parent=0 // pred_check_branch
    %15 = sbr.rel (0) target = $region9
  $region8: #{transformer_forward.12} parent=0 // pred_region
    _
  $region9: #{transformer_forward.12} parent=0 // pred_fallthru
    _
  // Predicated region
  $region10: #{transformer_forward.12} parent=0 // pred_check
    _
  $region11: #{transformer_forward.12} parent=0 // pred_check_branch
    %17 = sbr.rel (0) target = $region13
  $region12: #{transformer_forward.12} parent=0 // pred_region
    _
  $region13: #{transformer_forward.12} parent=0 // pred_fallthru
    _
  // Predicated region
  $region14: #{transformer_forward.12} parent=0 // pred_check
    _
  $region15: #{transformer_forward.12} parent=0 // pred_check_branch
    %19 = sbr.rel (0) target = $region17
  $region16: #{transformer_forward.12} parent=0 // pred_region
    _
  $region17: #{transformer_forward.12} parent=0 // pred_fallthru
    _
  // Predicated region
  $region18: #{transformer_forward.12} parent=0 // pred_check
    _
  $region19: #{transformer_forward.12} parent=0 // pred_check_branch
    %21 = sbr.rel (0) target = $region21
  $region20: #{transformer_forward.12} parent=0 // pred_region
    _
  $region21: #{transformer_forward.12} parent=0 // pred_fallthru
    _
  // Predicated region
  $region22: #{transformer_forward.12} parent=0 // pred_check
    _
  $region23: #{transformer_forward.12} parent=0 // pred_check_branch
    %23 = sbr.rel (0) target = $region25
  $region24: #{transformer_forward.12} parent=0 // pred_region
    _
  $region25: #{transformer_forward.12} parent=0 // pred_fallthru
    _
  // Predicated region
  $region26: #{transformer_forward.12} parent=0 // pred_check
    _
  $region27: #{transformer_forward.12} parent=0 // pred_check_branch
    %25 = sbr.rel (0) target = $region29
  $region28: #{transformer_forward.12} parent=0 // pred_region
    _
  $region29: #{transformer_forward.12} parent=0 // pred_fallthru
    _
  %v27 = vld [vmem:[%s0] sm:$0xf]
  %v28 = vld [vmem:[%s0 + $0x4] sm:$0xf]
  %v29 = vld [vmem:[%s1] sm:$0xf]
  %v30 = vld [vmem:[%s1 + $0x4] sm:$0xf]
  %v31 = vld [vmem:[%s1 + $0x8] sm:$0xf]
  %v32 = vld [vmem:[%s1 + $0xc] sm:$0xf]
  %v33 = vld [vmem:[%s2] sm:$0x1]
  %v35 = vlaneseq
  %v36 = vshrl.u32 %v35, 7
  %v37 = vsub.s32 0, %v36
  %v38 = vrot.slane %v33, %v37
  %v42 = vunpack.c.l.b16 %v27
  %v43 = vunpack.c.l.b16 %v28
  %v44 = vpack.c.b16 %v43, %v42
  %v49 = vunpack.c.l.b16 %v29
  %v50 = vunpack.c.l.b16 %v30
  %v51 = vunpack.c.l.b16 %v31
  %v52 = vunpack.c.l.b16 %v32
  %v53 = vpack.c.b16 %v50, %v49
  %v54 = vpack.c.b16 %v52, %v51
  %vm57 = vcmask 261120
  %v59 = vsel %vm57, %v44, 0
  %61 = vmatprep.subr.bf16.mxu0 0
  %62 = vmatpush1.bf16.msra.mxu0 0
  %63 = vmatprep.subr.bf16.mxu0 0
  %64 = vmatpush1.bf16.msra.mxu0 0
  %65 = vmatprep.subr.bf16.mxu0 0
  %66 = vmatpush1.bf16.msra.mxu0 0
  %67 = vmatprep.subr.bf16.mxu0 0
  %68 = vmatpush1.bf16.msra.mxu0 0
  %69 = vmatprep.subr.bf16.mxu0 0
  %70 = vmatpush1.bf16.msra.mxu0 0
  %71 = vmatprep.subr.bf16.mxu0 0
  %72 = vmatpush1.bf16.msra.mxu0 0
  %73 = vmatprep.subr.bf16.mxu0 0
  %74 = vmatpush1.bf16.msra.mxu0 %v54
  %75 = vmatprep.subr.bf16.mxu0 0
  %76 = vmatpush1.bf16.msra.mxu0 %v53
  %77 = vmatprep.subr.bf16.mxu0 0
  %78 = vmatpush2.bf16.msra.mxu0 0
  %79 = vmatprep.subr.bf16.mxu0 0
  %80 = vmatpush2.bf16.msra.mxu0 0
  %81 = vmatprep.subr.bf16.mxu0 0
  %82 = vmatpush2.bf16.msra.mxu0 0
  %83 = vmatprep.subr.bf16.mxu0 0
  %84 = vmatpush2.bf16.msra.mxu0 0
  %85 = vmatprep.subr.bf16.mxu0 0
  %86 = vmatpush2.bf16.msra.mxu0 0
  %87 = vmatprep.subr.bf16.mxu0 0
  %88 = vmatpush2.bf16.msra.mxu0 0
  %89 = vmatprep.subr.bf16.mxu0 0
  %90 = vmatpush2.bf16.msra.mxu0 0
  %91 = vmatprep.subr.bf16.mxu0 0
  %92 = vmatpush2.bf16.msra.mxu0 0
  %93 = vmatprep.mubr.bf16.mxu0 0
  %94 = vmatmul.mubr.bf16.gmra.mxu0 %v59
  %v95 = vpop.f32.mrf.mxu0
  %v96 = vadd.f32 %v38, %v95
  %v97 = vpop.f32.mrf.mxu0
  %v98 = vpop.f32.mrf.mxu0
  %v99 = vadd.f32 %v38, %v98
  %v100 = vpop.f32.mrf.mxu0
  %101 = vdwg.mxu0
  %v102 = vmax.f32 %v96, 0.0
  %v103 = vmax.f32 %v99, 0.0
  %v104 = vpack.c.bf16 %v103, %v102
  %v105 = vld [vmem:[%s3] sm:$0xf]
  %v106 = vld [vmem:[%s3 + $0x4] sm:$0xf]
  %v107 = vld [vmem:[%s3 + $0x8] sm:$0xf]
  %v108 = vld [vmem:[%s3 + $0xc] sm:$0xf]
  %v109 = vld [vmem:[%s3 + $0x10] sm:$0xf]
  %v110 = vld [vmem:[%s3 + $0x14] sm:$0xf]
  %v111 = vld [vmem:[%s3 + $0x18] sm:$0xf]
  %v112 = vld [vmem:[%s3 + $0x1c] sm:$0xf]
  %v113 = vld [vmem:[%s4] sm:$0x1]
  %v115 = vlaneseq
  %v116 = vshrl.u32 %v115, 7
  %v117 = vsub.s32 0, %v116
  %v118 = vrot.slane %v113, %v117
  %v128 = vunpack.c.l.b16 %v105
  %v129 = vunpack.c.l.b16 %v106
  %v130 = vunpack.c.l.b16 %v107
  %v131 = vunpack.c.l.b16 %v108
  %v132 = vunpack.c.l.b16 %v109
  %v133 = vunpack.c.l.b16 %v110
  %v134 = vunpack.c.l.b16 %v111
  %v135 = vunpack.c.l.b16 %v112
  %v136 = vpack.c.b16 %v129, %v128
  %v137 = vpack.c.b16 %v131, %v130
  %v138 = vpack.c.b16 %v133, %v132
  %v139 = vpack.c.b16 %v135, %v134
  %vm144 = vcmask 523264
  %v146 = vsel %vm144, %v104, 0
  %148 = vmatprep.subr.bf16.mxu0 0
  %149 = vmatpush1.bf16.msra.mxu0 0
  %150 = vmatprep.subr.bf16.mxu0 0
  %151 = vmatpush1.bf16.msra.mxu0 0
  %152 = vmatprep.subr.bf16.mxu0 0
  %153 = vmatpush1.bf16.msra.mxu0 0
  %154 = vmatprep.subr.bf16.mxu0 0
  %155 = vmatpush1.bf16.msra.mxu0 0
  %156 = vmatprep.subr.bf16.mxu0 0
  %157 = vmatpush1.bf16.msra.mxu0 %v139
  %158 = vmatprep.subr.bf16.mxu0 0
  %159 = vmatpush1.bf16.msra.mxu0 %v138
  %160 = vmatprep.subr.bf16.mxu0 0
  %161 = vmatpush1.bf16.msra.mxu0 %v137
  %162 = vmatprep.subr.bf16.mxu0 0
  %163 = vmatpush1.bf16.msra.mxu0 %v136
  %164 = vmatprep.subr.bf16.mxu0 0
  %165 = vmatpush2.bf16.msra.mxu0 0
  %166 = vmatprep.subr.bf16.mxu0 0
  %167 = vmatpush2.bf16.msra.mxu0 0
  %168 = vmatprep.subr.bf16.mxu0 0
  %169 = vmatpush2.bf16.msra.mxu0 0
  %170 = vmatprep.subr.bf16.mxu0 0
  %171 = vmatpush2.bf16.msra.mxu0 0
  %172 = vmatprep.subr.bf16.mxu0 0
  %173 = vmatpush2.bf16.msra.mxu0 0
  %174 = vmatprep.subr.bf16.mxu0 0
  %175 = vmatpush2.bf16.msra.mxu0 0
  %176 = vmatprep.subr.bf16.mxu0 0
  %177 = vmatpush2.bf16.msra.mxu0 0
  %178 = vmatprep.subr.bf16.mxu0 0
  %179 = vmatpush2.bf16.msra.mxu0 0
  %180 = vmatprep.mubr.bf16.mxu0 0
  %181 = vmatmul.mubr.bf16.gmra.mxu0 %v146
  %v182 = vpop.f32.mrf.mxu0
  %v183 = vadd.f32 %v118, %v182
  %v184 = vpop.f32.mrf.mxu0
  %v185 = vpop.f32.mrf.mxu0
  %v186 = vadd.f32 %v118, %v185
  %v187 = vpop.f32.mrf.mxu0
  %188 = vdwg.mxu0
  %v189 = vunpack.c.l.bf16 %v27
  %v190 = vunpack.c.l.bf16 %v28
  %v191 = vadd.f32 %v189, %v183
  %v192 = vadd.f32 %v190, %v186
  %v193 = vsel %vm57, %v191, 0.0
  %194 = vadd.xlane.f32.xlu0 %v193
  %v195 = vpop.xlane.xlu0 %194
  %v196 = vsel %vm57, %v192, 0.0
  %197 = vadd.xlane.f32.xlu0 %v196
  %v198 = vpop.xlane.xlu0 %197
  %v199 = vrcp.pop 32.0
  %v200 = vmul.f32 %v195, %v199
  %v201 = vmul.f32 %v198, %v199
  %v202 = vsub.f32 %v191, %v200
  %v203 = vsub.f32 %v192, %v201
  %v204 = vmul.f32 %v202, %v202
  %v205 = vmul.f32 %v203, %v203
  %v206 = vsel %vm57, %v204, 0.0
  %207 = vadd.xlane.f32.xlu0 %v206
  %v208 = vpop.xlane.xlu0 %207
  %v209 = vsel %vm57, %v205, 0.0
  %210 = vadd.xlane.f32.xlu0 %v209
  %v211 = vpop.xlane.xlu0 %210
  %v212 = vmul.f32 %v208, %v199
  %v213 = vmul.f32 %v211, %v199
  %v214 = vadd.f32 %v212, 1e-05
  %v215 = vadd.f32 %v213, 1e-05
  %v216 = vrsqrt.pop %v214
  %v217 = vrsqrt.pop %v215
  %v218 = vmul.f32 %v202, %v216
  %v219 = vmul.f32 %v203, %v217
  %v220 = vld [vmem:[%s5] sm:$0x1]
  %v222 = vlaneseq
  %v223 = vshrl.u32 %v222, 7
  %v224 = vsub.s32 0, %v223
  %v225 = vrot.slane %v220, %v224
  %v227 = vmul.f32 %v218, %v225
  %v228 = vmul.f32 %v219, %v225
  %v229 = vld [vmem:[%s6] sm:$0x1]
  %v231 = vlaneseq
  %v232 = vshrl.u32 %v231, 7
  %v233 = vsub.s32 0, %v232
  %v234 = vrot.slane %v229, %v233
  %v236 = vadd.f32 %v227, %v234
  %v237 = vadd.f32 %v228, %v234
  %v238 = vpack.c.bf16 %v237, %v236
  %v240 = vunpack.c.l.b16 %v238
  %v241 = vunpack.c.h.b16 %v238
  %v242 = vpack.c.b16 %v240, %v240
  %v243 = vpack.c.b16 %v241, %v241
  %vm246 = vcmask 257024
  %247 = vst.msk [vmem:[%s7] sm:$0xf] %vm246, %v242
  %248 = vst.msk [vmem:[%s7 + $0x4] sm:$0xf] %vm246, %v243
  // Predicated region
  $region30: #{transformer_forward.12} parent=0 // pred_check
    _
  $region31: #{transformer_forward.12} parent=0 // pred_check_branch
    %250 = sbr.rel (0) target = $region33
  $region32: #{transformer_forward.12} parent=0 // pred_region
    _
  $region33: #{transformer_forward.12} parent=0 // pred_fallthru
    _
  // Predicated region
  $region34: #{transformer_forward.12} parent=0 // pred_check
    _
  $region35: #{transformer_forward.12} parent=0 // pred_check_branch
    %252 = sbr.rel (0) target = $region37
  $region36: #{transformer_forward.12} parent=0 // pred_region
    _
  $region37: #{transformer_forward.12} parent=0 // pred_fallthru
    _

// kernel: transformer_forward.15
$region0: #{transformer_forward.15}
  #allocation0 [shape = 'u32[]', space=smem, size = 0x4, offset = 0x4, fixed_abs, tag = 'smem constant byte address 0x4 - core index']
  #allocation1 [shape = 'u32[144,128]{1,0:T(1,128)}', space=vmem, size = 0x12000, scoped, tag = 'internal scratch']
  %s0 = inlined_call_operand.vmem [shape: bf16[2,4,32], index: 0, kind: input, shape index: {}]
  %s1 = inlined_call_operand.vmem [shape: bf16[32,96], index: 1, kind: input, shape index: {}]
  %s2 = inlined_call_operand.vmem [shape: f32[1,96], index: 2, kind: input, shape index: {}]
  %s3 = inlined_call_operand.vmem [shape: bf16[32,32], index: 3, kind: input, shape index: {}]
  %s4 = inlined_call_operand.vmem [shape: f32[1,32], index: 4, kind: input, shape index: {}]
  %s5 = inlined_call_operand.vmem [shape: f32[1,32], index: 5, kind: input, shape index: {}]
  %s6 = inlined_call_operand.vmem [shape: f32[1,32], index: 6, kind: input, shape index: {}]
  %s7 = inlined_call_operand.vmem [shape: bf16[2,4,32], index: 7, kind: output, shape index: {}]
  %s8 = sld [smem:[#allocation0]]
  $region61: #{transformer_forward.15} parent=0
    _
  %s10 = ssub.s32 1, %s8
  %s11 = scalar_select 0, %s10, %s8
  loop: start=0, step=1, limit=4
  $region2: #{transformer_forward.15} parent=0 // loop_pre_header
    _
  $region3: #{transformer_forward.15} parent=0 // loop_header
    %s13 = sphi 0, %s17
    %p14 = scmp.ge.s32.totalorder %s13, 4
    %s23 = sphi 0, %s25
    %s26 = sphi 0, %s23
    %s27 = sphi 0, %s26
    %s43 = sphi 0, %s27
    %s47 = sphi 0, %s47
    %s49 = sphi 0, %s47
    %s50 = sphi 0, %s49
    %s64 = sphi 0, %s50
    %s68 = sphi 0, %s68
    %s70 = sphi 0, %s68
    %s71 = sphi 0, %s70
    %s85 = sphi 0, %s71
    %s89 = sphi 0, %s89
    %s91 = sphi 0, %s89
    %s92 = sphi 0, %s91
    %s106 = sphi 0, %s92
    %s110 = sphi 0, %s110
    %s112 = sphi 0, %s110
    %s113 = sphi 0, %s112
    %s127 = sphi 0, %s113
    %s131 = sphi 0, %s131
    %s133 = sphi 0, %s131
    %s134 = sphi 0, %s133
    %s148 = sphi 0, %s134
    %s152 = sphi 0, %s152
    %s154 = sphi 0, %s152
    %s155 = sphi 0, %s154
    %s169 = sphi 0, %s155
    %s175 = sphi 0, %s177
    %s178 = sphi 0, %s175
    %s179 = sphi 0, %s178
    %s195 = sphi 0, %s179
  $region4: #{transformer_forward.15} parent=0 // loop_header_branch
    %16 = sbr.rel (%p14) target = $region8
  $region5: #{transformer_forward.15} parent=0 // loop_body
    %s18 = ssub.s32 %s13, 1
    %s19 = ssub.s32 %s13, 2
    %s20 = sadd.s32 %s13, 1
    %s21 = ssub.s32 %s13, %s20
    %p22 = scmp.eq.s32.totalorder %s21, 0
    %s24 = sadd.s32 %s23, 1
    %s25 = scalar_select %p22, %s23, %s24
    %p28 = pneg %p22
    %p29 = scmp.eq.s32.totalorder %s13, 1
    %p30 = por %p28, %p29
    %p31 = scmp.ne.s32.totalorder %s23, %s26
    %p32 = scmp.eq.s32.totalorder %s13, 0
    %p33 = por %p31, %p32
    %p34 = scmp.ne.s32.totalorder %s23, %s26
    %p35 = scmp.eq.s32.totalorder %s18, 1
    %p36 = por %p34, %p35
    %p37 = scmp.ne.s32.totalorder %s26, %s27
    %p38 = scmp.eq.s32.totalorder %s18, 0
    %p39 = por %p37, %p38
    %p40 = scmp.ne.s32.totalorder %s26, %s27
    %p41 = scmp.eq.s32.totalorder %s19, 1
    %p42 = por %p40, %p41
    %p44 = scmp.ne.s32.totalorder %s27, %s43
    %p45 = scmp.eq.s32.totalorder %s19, 0
    %p46 = por %p44, %p45
    %s48 = sadd.s32 %s47, 1
    %p51 = scmp.eq.s32.totalorder %s13, 1
    %p52 = scmp.ne.s32.totalorder %s47, %s49
    %p53 = scmp.eq.s32.totalorder %s13, 0
    %p54 = por %p52, %p53
    %p55 = scmp.ne.s32.totalorder %s47, %s49
    %p56 = scmp.eq.s32.totalorder %s18, 1
    %p57 = por %p55, %p56
    %p58 = scmp.ne.s32.totalorder %s49, %s50
    %p59 = scmp.eq.s32.totalorder %s18, 0
    %p60 = por %p58, %p59
    %p61 = scmp.ne.s32.totalorder %s49, %s50
    %p62 = scmp.eq.s32.totalorder %s19, 1
    %p63 = por %p61, %p62
    %p65 = scmp.ne.s32.totalorder %s50, %s64
    %p66 = scmp.eq.s32.totalorder %s19, 0
    %p67 = por %p65, %p66
    %s69 = sadd.s32 %s68, 1
    %p72 = scmp.eq.s32.totalorder %s13, 1
    %p73 = scmp.ne.s32.totalorder %s68, %s70
    %p74 = scmp.eq.s32.totalorder %s13, 0
    %p75 = por %p73, %p74
    %p76 = scmp.ne.s32.totalorder %s68, %s70
    %p77 = scmp.eq.s32.totalorder %s18, 1
    %p78 = por %p76, %p77
    %p79 = scmp.ne.s32.totalorder %s70, %s71
    %p80 = scmp.eq.s32.totalorder %s18, 0
    %p81 = por %p79, %p80
    %p82 = scmp.ne.s32.totalorder %s70, %s71
    %p83 = scmp.eq.s32.totalorder %s19, 1
    %p84 = por %p82, %p83
    %p86 = scmp.ne.s32.totalorder %s71, %s85
    %p87 = scmp.eq.s32.totalorder %s19, 0
    %p88 = por %p86, %p87
    %s90 = sadd.s32 %s89, 1
    %p93 = scmp.eq.s32.totalorder %s13, 1
    %p94 = scmp.ne.s32.totalorder %s89, %s91
    %p95 = scmp.eq.s32.totalorder %s13, 0
    %p96 = por %p94, %p95
    %p97 = scmp.ne.s32.totalorder %s89, %s91
    %p98 = scmp.eq.s32.totalorder %s18, 1
    %p99 = por %p97, %p98
    %p100 = scmp.ne.s32.totalorder %s91, %s92
    %p101 = scmp.eq.s32.totalorder %s18, 0
    %p102 = por %p100, %p101
    %p103 = scmp.ne.s32.totalorder %s91, %s92
    %p104 = scmp.eq.s32.totalorder %s19, 1
    %p105 = por %p103, %p104
    %p107 = scmp.ne.s32.totalorder %s92, %s106
    %p108 = scmp.eq.s32.totalorder %s19, 0
    %p109 = por %p107, %p108
    %s111 = sadd.s32 %s110, 1
    %p114 = scmp.eq.s32.totalorder %s13, 1
    %p115 = scmp.ne.s32.totalorder %s110, %s112
    %p116 = scmp.eq.s32.totalorder %s13, 0
    %p117 = por %p115, %p116
    %p118 = scmp.ne.s32.totalorder %s110, %s112
    %p119 = scmp.eq.s32.totalorder %s18, 1
    %p120 = por %p118, %p119
    %p121 = scmp.ne.s32.totalorder %s112, %s113
    %p122 = scmp.eq.s32.totalorder %s18, 0
    %p123 = por %p121, %p122
    %p124 = scmp.ne.s32.totalorder %s112, %s113
    %p125 = scmp.eq.s32.totalorder %s19, 1
    %p126 = por %p124, %p125
    %p128 = scmp.ne.s32.totalorder %s113, %s127
    %p129 = scmp.eq.s32.totalorder %s19, 0
    %p130 = por %p128, %p129
    %s132 = sadd.s32 %s131, 1
    %p135 = scmp.eq.s32.totalorder %s13, 1
    %p136 = scmp.ne.s32.totalorder %s131, %s133
    %p137 = scmp.eq.s32.totalorder %s13, 0
    %p138 = por %p136, %p137
    %p139 = scmp.ne.s32.totalorder %s131, %s133
    %p140 = scmp.eq.s32.totalorder %s18, 1
    %p141 = por %p139, %p140
    %p142 = scmp.ne.s32.totalorder %s133, %s134
    %p143 = scmp.eq.s32.totalorder %s18, 0
    %p144 = por %p142, %p143
    %p145 = scmp.ne.s32.totalorder %s133, %s134
    %p146 = scmp.eq.s32.totalorder %s19, 1
    %p147 = por %p145, %p146
    %p149 = scmp.ne.s32.totalorder %s134, %s148
    %p150 = scmp.eq.s32.totalorder %s19, 0
    %p151 = por %p149, %p150
    %s153 = sadd.s32 %s152, 1
    %p156 = scmp.eq.s32.totalorder %s13, 1
    %p157 = scmp.ne.s32.totalorder %s152, %s154
    %p158 = scmp.eq.s32.totalorder %s13, 0
    %p159 = por %p157, %p158
    %p160 = scmp.ne.s32.totalorder %s152, %s154
    %p161 = scmp.eq.s32.totalorder %s18, 1
    %p162 = por %p160, %p161
    %p163 = scmp.ne.s32.totalorder %s154, %s155
    %p164 = scmp.eq.s32.totalorder %s18, 0
    %p165 = por %p163, %p164
    %p166 = scmp.ne.s32.totalorder %s154, %s155
    %p167 = scmp.eq.s32.totalorder %s19, 1
    %p168 = por %p166, %p167
    %p170 = scmp.ne.s32.totalorder %s155, %s169
    %p171 = scmp.eq.s32.totalorder %s19, 0
    %p172 = por %p170, %p171
    %s173 = ssub.s32 %s13, %s20
    %p174 = scmp.eq.s32.totalorder %s173, 0
    %s176 = sadd.s32 %s175, 1
    %s177 = scalar_select %p174, %s175, %s176
    %p180 = pneg %p174
    %p181 = scmp.eq.s32.totalorder %s13, 1
    %p182 = por %p180, %p181
    %p183 = scmp.ne.s32.totalorder %s175, %s178
    %p184 = scmp.eq.s32.totalorder %s13, 0
    %p185 = por %p183, %p184
    %p186 = scmp.ne.s32.totalorder %s175, %s178
    %p187 = scmp.eq.s32.totalorder %s18, 1
    %p188 = por %p186, %p187
    %p189 = scmp.ne.s32.totalorder %s178, %s179
    %p190 = scmp.eq.s32.totalorder %s18, 0
    %p191 = por %p189, %p190
    %p192 = scmp.ne.s32.totalorder %s178, %s179
    %p193 = scmp.eq.s32.totalorder %s19, 1
    %p194 = por %p192, %p193
    %p196 = scmp.ne.s32.totalorder %s179, %s195
    %p197 = scmp.eq.s32.totalorder %s19, 0
    %p198 = por %p196, %p197
    %p199 = scmp.le.s32.totalorder 1, %s13
    %p200 = scmp.lt.s32.totalorder %s13, 3
    %p201 = pnand %p199, %p200
    %p202 = pneg %p201
    // Predicated region
    $region9: #{transformer_forward.15} parent=5 // pred_check
      _
    $region10: #{transformer_forward.15} parent=5 // pred_check_branch
      %204 = sbr.rel (%p201) target = $region12
    $region11: #{transformer_forward.15} parent=5 // pred_region
      %s205 = ssub.s32 %s13, 1
      // Predicated region
      $region13: #{transformer_forward.15} parent=11 // pred_check
        %p206 = pneg %p60
      $region14: #{transformer_forward.15} parent=11 // pred_check_branch
        %208 = sbr.rel (%p206) target = $region16
      $region15: #{transformer_forward.15} parent=11 // pred_region
        _
      $region16: #{transformer_forward.15} parent=11 // pred_fallthru
        _
      // Predicated region
      $region17: #{transformer_forward.15} parent=11 // pred_check
        %p209 = pneg %p81
      $region18: #{transformer_forward.15} parent=11 // pred_check_branch
        %211 = sbr.rel (%p209) target = $region20
      $region19: #{transformer_forward.15} parent=11 // pred_region
        _
      $region20: #{transformer_forward.15} parent=11 // pred_fallthru
        _
      // Predicated region
      $region21: #{transformer_forward.15} parent=11 // pred_check
        %p212 = pneg %p102
      $region22: #{transformer_forward.15} parent=11 // pred_check_branch
        %214 = sbr.rel (%p212) target = $region24
      $region23: #{transformer_forward.15} parent=11 // pred_region
        _
      $region24: #{transformer_forward.15} parent=11 // pred_fallthru
        _
      // Predicated region
      $region25: #{transformer_forward.15} parent=11 // pred_check
        %p215 = pneg %p123
      $region26: #{transformer_forward.15} parent=11 // pred_check_branch
        %217 = sbr.rel (%p215) target = $region28
      $region27: #{transformer_forward.15} parent=11 // pred_region
        _
      $region28: #{transformer_forward.15} parent=11 // pred_fallthru
        _
      // Predicated region
      $region29: #{transformer_forward.15} parent=11 // pred_check
        %p218 = pneg %p144
      $region30: #{transformer_forward.15} parent=11 // pred_check_branch
        %220 = sbr.rel (%p218) target = $region32
      $region31: #{transformer_forward.15} parent=11 // pred_region
        _
      $region32: #{transformer_forward.15} parent=11 // pred_fallthru
        _
      // Predicated region
      $region33: #{transformer_forward.15} parent=11 // pred_check
        %p221 = pneg %p165
      $region34: #{transformer_forward.15} parent=11 // pred_check_branch
        %223 = sbr.rel (%p221) target = $region36
      $region35: #{transformer_forward.15} parent=11 // pred_region
        _
      $region36: #{transformer_forward.15} parent=11 // pred_fallthru
        _
    $region12: #{transformer_forward.15} parent=5 // pred_fallthru
      _
    %p224 = scmp.lt.s32.totalorder %s13, 2
    // Predicated region
    $region37: #{transformer_forward.15} parent=5 // pred_check
      %p225 = pneg %p224
    $region38: #{transformer_forward.15} parent=5 // pred_check_branch
      %227 = sbr.rel (%p225) target = $region40
    $region39: #{transformer_forward.15} parent=5 // pred_region
      // Predicated region
      $region41: #{transformer_forward.15} parent=39 // pred_check
        %p228 = pneg %p33
      $region42: #{transformer_forward.15} parent=39 // pred_check_branch
        %230 = sbr.rel (%p228) target = $region44
      $region43: #{transformer_forward.15} parent=39 // pred_region
        %p231 = scmp.lt.s32.totalorder %s13, 1
        %s232 = scalar_select %p231, %s13, 1
        %s233 = smul.addr %s232, 2
        %s234 = scalar_lea.vmem %s0, %s233
      $region44: #{transformer_forward.15} parent=39 // pred_fallthru
        _
    $region40: #{transformer_forward.15} parent=5 // pred_fallthru
      _
    %p235 = scmp.le.s32.totalorder 1, %s13
    %p236 = scmp.lt.s32.totalorder %s13, 3
    %p237 = pnand %p235, %p236
    %p238 = pneg %p237
    // Predicated region
    $region45: #{transformer_forward.15} parent=5 // pred_check
      _
    $region46: #{transformer_forward.15} parent=5 // pred_check_branch
      %240 = sbr.rel (%p237) target = $region48
    $region47: #{transformer_forward.15} parent=5 // pred_region
      %s241 = ssub.s32 %s13, 1
      %p242 = scmp.lt.s32.totalorder %s18, 1
      %s243 = scalar_select %p242, %s18, 1
      %s244 = smul.addr %s243, 2
      %s245 = scalar_lea.vmem %s0, %s244
      %p246 = pneg %p39
      %p247 = pneg %p36
      %p248 = pneg %p60
      %p249 = pneg %p57
      %p250 = pneg %p81
      %p251 = pneg %p78
      %p252 = pneg %p102
      %p253 = pneg %p99
      %p254 = pneg %p123
      %p255 = pneg %p120
      %p256 = pneg %p144
      %p257 = pneg %p141
      %p258 = pneg %p165
      %p259 = pneg %p162
      %p260 = pneg %p191
      %p261 = pneg %p188
      %p262 = scmp.lt.s32.totalorder %s18, 1
      %s263 = scalar_select %p262, %s18, 1
      %s264 = smul.addr %s263, 2
      %s265 = scalar_lea.vmem %s7, %s264
      %p266 = scmp.lt.s32.totalorder %s18, 1
      %s267 = scalar_select %p266, %s18, 1
      %s268 = smul.addr %s267, 2
      %s269 = scalar_lea.vmem %s0, %s268
      %p270 = scmp.lt.s32.totalorder %s18, 1
      %s271 = scalar_select %p270, %s18, 1
      %s272 = smul.addr %s271, 2
      %s273 = scalar_lea.vmem %s7, %s272
      %v275 = vld [vmem:[%s269] sm:$0x3]
      %v276 = vld [vmem:[%s1] sm:$0xf]
      %v277 = vld [vmem:[%s1 + $0x4] sm:$0xf]
      %v278 = vld [vmem:[%s1 + $0x8] sm:$0xf]
      %v279 = vld [vmem:[%s1 + $0xc] sm:$0xf]
      %v280 = vld [vmem:[%s2] sm:$0x1]
      %v282 = vlaneseq
      %v283 = vshrl.u32 %v282, 7
      %v284 = vsub.s32 0, %v283
      %v285 = vrot.slane %v280, %v284
      %v291 = vunpack.c.l.b16 %v276
      %v292 = vunpack.c.l.b16 %v277
      %v293 = vunpack.c.l.b16 %v278
      %v294 = vunpack.c.l.b16 %v279
      %v295 = vpack.c.b16 %v292, %v291
      %v296 = vpack.c.b16 %v294, %v293
      %vm299 = vcmask 261120
      %v301 = vsel %vm299, %v275, 0
      %303 = vmatprep.subr.bf16.mxu0 0
      %304 = vmatpush1.bf16.msra.mxu0 0
      %305 = vmatprep.subr.bf16.mxu0 0
      %306 = vmatpush1.bf16.msra.mxu0 0
      %307 = vmatprep.subr.bf16.mxu0 0
      %308 = vmatpush1.bf16.msra.mxu0 0
      %309 = vmatprep.subr.bf16.mxu0 0
      %310 = vmatpush1.bf16.msra.mxu0 0
      %311 = vmatprep.subr.bf16.mxu0 0
      %312 = vmatpush1.bf16.msra.mxu0 0
      %313 = vmatprep.subr.bf16.mxu0 0
      %314 = vmatpush1.bf16.msra.mxu0 0
      %315 = vmatprep.subr.bf16.mxu0 0
      %316 = vmatpush1.bf16.msra.mxu0 %v296
      %317 = vmatprep.subr.bf16.mxu0 0
      %318 = vmatpush1.bf16.msra.mxu0 %v295
      %319 = vmatprep.subr.bf16.mxu0 0
      %320 = vmatpush2.bf16.msra.mxu0 0
      %321 = vmatprep.subr.bf16.mxu0 0
      %322 = vmatpush2.bf16.msra.mxu0 0
      %323 = vmatprep.subr.bf16.mxu0 0
      %324 = vmatpush2.bf16.msra.mxu0 0
      %325 = vmatprep.subr.bf16.mxu0 0
      %326 = vmatpush2.bf16.msra.mxu0 0
      %327 = vmatprep.subr.bf16.mxu0 0
      %328 = vmatpush2.bf16.msra.mxu0 0
      %329 = vmatprep.subr.bf16.mxu0 0
      %330 = vmatpush2.bf16.msra.mxu0 0
      %331 = vmatprep.subr.bf16.mxu0 0
      %332 = vmatpush2.bf16.msra.mxu0 0
      %333 = vmatprep.subr.bf16.mxu0 0
      %334 = vmatpush2.bf16.msra.mxu0 0
      %335 = vmatprep.mubr.bf16.mxu0 0
      %336 = vmatmul.mubr.bf16.gmra.mxu0 %v301
      %v337 = vpop.f32.mrf.mxu0
      %v338 = vadd.f32 %v285, %v337
      %v339 = vpop.f32.mrf.mxu0
      %v340 = vpop.f32.mrf.mxu0
      %v341 = vpop.f32.mrf.mxu0
      %342 = vdwg.mxu0
      %v343 = vmul.f32 %v338, 0.35355338
      %v344 = vpack.c.bf16 %v343, %v343
      %v345 = vpack.c.bf16 %v338, %v338
      %347 = vrot.lane.b32.xlu0 %v345, 96
      %v348 = vpop.permute.xlu0 %347
      %vm349 = vcmask 64512
      %v351 = vsel %vm349, %v344, 0
      %v354 = vsel %vm349, %v348, 0
      %356 = vmatprep.subr.bf16.mxu0 0
      %357 = vmatpush1.bf16.xpose.msra.mxu0 0
      %358 = vmatprep.subr.bf16.mxu0 0
      %359 = vmatpush1.bf16.xpose.msra.mxu0 0
      %360 = vmatprep.subr.bf16.mxu0 0
      %361 = vmatpush1.bf16.xpose.msra.mxu0 0
      %362 = vmatprep.subr.bf16.mxu0 0
      %363 = vmatpush1.bf16.xpose.msra.mxu0 0
      %364 = vmatprep.subr.bf16.mxu0 0
      %365 = vmatpush1.bf16.xpose.msra.mxu0 0
      %366 = vmatprep.subr.bf16.mxu0 0
      %367 = vmatpush1.bf16.xpose.msra.mxu0 0
      %368 = vmatprep.subr.bf16.mxu0 0
      %369 = vmatpush1.bf16.xpose.msra.mxu0 0
      %370 = vmatprep.subr.bf16.mxu0 0
      %371 = vmatpush1.bf16.xpose.msra.mxu0 %v354
      %372 = vmatprep.subr.bf16.mxu0 0
      %373 = vmatpush2.bf16.xpose.msra.mxu0 0
      %374 = vmatprep.subr.bf16.mxu0 0
      %375 = vmatpush2.bf16.xpose.msra.mxu0 0
      %376 = vmatprep.subr.bf16.mxu0 0
      %377 = vmatpush2.bf16.xpose.msra.mxu0 0
      %378 = vmatprep.subr.bf16.mxu0 0
      %379 = vmatpush2.bf16.xpose.msra.mxu0 0
      %380 = vmatprep.subr.bf16.mxu0 0
      %381 = vmatpush2.bf16.xpose.msra.mxu0 0
      %382 = vmatprep.subr.bf16.mxu0 0
      %383 = vmatpush2.bf16.xpose.msra.mxu0 0
      %384 = vmatprep.subr.bf16.mxu0 0
      %385 = vmatpush2.bf16.xpose.msra.mxu0 0
      %386 = vmatprep.subr.bf16.mxu0 0
      %387 = vmatpush2.bf16.xpose.msra.mxu0 0
      %388 = vmatprep.mubr.bf16.mxu0 0
      %389 = vmatmul.mubr.bf16.gmra.mxu0 %v351
      %v390 = vpop.f32.mrf.mxu0
      %v391 = vadd.f32 0.0, %v390
      %v392 = vpop.f32.mrf.mxu0
      %v393 = vpop.f32.mrf.mxu0
      %v394 = vpop.f32.mrf.mxu0
      %395 = vdwg.mxu0
      %vm396 = vcmask 27648
      %v397 = vsel %vm396, %v391, -inf
      %398 = vmax.xlane.f32.xlu0 %v397
      %v399 = vpop.xlane.xlu0 %398
      %v400 = vsub.f32 %v391, %v399
      %v401 = vmul.f32 %v400, 1.442695
      %v402 = vpow.pop %v401
      %v403 = vsel %vm396, %v402, 0.0
      %404 = vadd.xlane.f32.xlu0 %v403
      %v405 = vpop.xlane.xlu0 %404
      %v406 = vrcp.pop %v405
      %v407 = vmul.f32 %v402, %v406
      %v408 = vpack.c.bf16 %v407, %v407
      %409 = vrot.lane.b32.xlu0 %v345, 64
      %v410 = vpop.permute.xlu0 %409
      %vm411 = vcmask 31744
      %v413 = vsel %vm411, %v408, 0
      %vm415 = vcmask 1041408
      %v417 = vsel %vm415, %v410, 0
      %419 = vmatprep.subr.bf16.mxu0 0
      %420 = vmatpush1.bf16.msra.mxu0 0
      %421 = vmatprep.subr.bf16.mxu0 0
      %422 = vmatpush1.bf16.msra.mxu0 0
      %423 = vmatprep.subr.bf16.mxu0 0
      %424 = vmatpush1.bf16.msra.mxu0 0
      %425 = vmatprep.subr.bf16.mxu0 0
      %426 = vmatpush1.bf16.msra.mxu0 0
      %427 = vmatprep.subr.bf16.mxu0 0
      %428 = vmatpush1.bf16.msra.mxu0 0
      %429 = vmatprep.subr.bf16.mxu0 0
      %430 = vmatpush1.bf16.msra.mxu0 0
      %431 = vmatprep.subr.bf16.mxu0 0
      %432 = vmatpush1.bf16.msra.mxu0 0
      %433 = vmatprep.subr.bf16.mxu0 0
      %434 = vmatpush1.bf16.msra.mxu0 %v417
      %435 = vmatprep.subr.bf16.mxu0 0
      %436 = vmatpush2.bf16.msra.mxu0 0
      %437 = vmatprep.subr.bf16.mxu0 0
      %438 = vmatpush2.bf16.msra.mxu0 0
      %439 = vmatprep.subr.bf16.mxu0 0
      %440 = vmatpush2.bf16.msra.mxu0 0
      %441 = vmatprep.subr.bf16.mxu0 0
      %442 = vmatpush2.bf16.msra.mxu0 0
      %443 = vmatprep.subr.bf16.mxu0 0
      %444 = vmatpush2.bf16.msra.mxu0 0
      %445 = vmatprep.subr.bf16.mxu0 0
      %446 = vmatpush2.bf16.msra.mxu0 0
      %447 = vmatprep.subr.bf16.mxu0 0
      %448 = vmatpush2.bf16.msra.mxu0 0
      %449 = vmatprep.subr.bf16.mxu0 0
      %450 = vmatpush2.bf16.msra.mxu0 0
      %451 = vmatprep.mubr.bf16.mxu0 0
      %452 = vmatmul.mubr.bf16.gmra.mxu0 %v413
      %v453 = vpop.f32.mrf.mxu0
      %v454 = vadd.f32 0.0, %v453
      %v455 = vpop.f32.mrf.mxu0
      %v456 = vpop.f32.mrf.mxu0
      %v457 = vpop.f32.mrf.mxu0
      %458 = vdwg.mxu0
      %v459 = vpack.c.bf16 %v454, %v454
      %461 = vrot.lane.b32.xlu0 %v344, 120
      %v462 = vpop.permute.xlu0 %461
      %463 = vrot.lane.b32.xlu0 %v345, 88
      %v464 = vpop.permute.xlu0 %463
      %v466 = vsel %vm349, %v462, 0
      %v469 = vsel %vm349, %v464, 0
      %471 = vmatprep.subr.bf16.mxu0 0
      %472 = vmatpush1.bf16.xpose.msra.mxu0 0
      %473 = vmatprep.subr.bf16.mxu0 0
      %474 = vmatpush1.bf16.xpose.msra.mxu0 0
      %475 = vmatprep.subr.bf16.mxu0 0
      %476 = vmatpush1.bf16.xpose.msra.mxu0 0
      %477 = vmatprep.subr.bf16.mxu0 0
      %478 = vmatpush1.bf16.xpose.msra.mxu0 0
      %479 = vmatprep.subr.bf16.mxu0 0
      %480 = vmatpush1.bf16.xpose.msra.mxu0 0
      %481 = vmatprep.subr.bf16.mxu0 0
      %482 = vmatpush1.bf16.xpose.msra.mxu0 0
      %483 = vmatprep.subr.bf16.mxu0 0
      %484 = vmatpush1.bf16.xpose.msra.mxu0 0
      %485 = vmatprep.subr.bf16.mxu0 0
      %486 = vmatpush1.bf16.xpose.msra.mxu0 %v469
      %487 = vmatprep.subr.bf16.mxu0 0
      %488 = vmatpush2.bf16.xpose.msra.mxu0 0
      %489 = vmatprep.subr.bf16.mxu0 0
      %490 = vmatpush2.bf16.xpose.msra.mxu0 0
      %491 = vmatprep.subr.bf16.mxu0 0
      %492 = vmatpush2.bf16.xpose.msra.mxu0 0
      %493 = vmatprep.subr.bf16.mxu0 0
      %494 = vmatpush2.bf16.xpose.msra.mxu0 0
      %495 = vmatprep.subr.bf16.mxu0 0
      %496 = vmatpush2.bf16.xpose.msra.mxu0 0
      %497 = vmatprep.subr.bf16.mxu0 0
      %498 = vmatpush2.bf16.xpose.msra.mxu0 0
      %499 = vmatprep.subr.bf16.mxu0 0
      %500 = vmatpush2.bf16.xpose.msra.mxu0 0
      %501 = vmatprep.subr.bf16.mxu0 0
      %502 = vmatpush2.bf16.xpose.msra.mxu0 0
      %503 = vmatprep.mubr.bf16.mxu0 0
      %504 = vmatmul.mubr.bf16.gmra.mxu0 %v466
      %v505 = vpop.f32.mrf.mxu0
      %v506 = vadd.f32 0.0, %v505
      %v507 = vpop.f32.mrf.mxu0
      %v508 = vpop.f32.mrf.mxu0
      %v509 = vpop.f32.mrf.mxu0
      %510 = vdwg.mxu0
      %v511 = vsel %vm396, %v506, -inf
      %512 = vmax.xlane.f32.xlu0 %v511
      %v513 = vpop.xlane.xlu0 %512
      %v514 = vsub.f32 %v506, %v513
      %v515 = vmul.f32 %v514, 1.442695
      %v516 = vpow.pop %v515
      %v517 = vsel %vm396, %v516, 0.0
      %518 = vadd.xlane.f32.xlu0 %v517
      %v519 = vpop.xlane.xlu0 %518
      %v520 = vrcp.pop %v519
      %v521 = vmul.f32 %v516, %v520
      %v522 = vpack.c.bf16 %v521, %v521
      %523 = vrot.lane.b32.xlu0 %v345, 56
      %v524 = vpop.permute.xlu0 %523
      %v526 = vsel %vm411, %v522, 0
      %v529 = vsel %vm415, %v524, 0
      %531 = vmatprep.subr.bf16.mxu0 0
      %532 = vmatpush1.bf16.msra.mxu0 0
      %533 = vmatprep.subr.bf16.mxu0 0
      %534 = vmatpush1.bf16.msra.mxu0 0
      %535 = vmatprep.subr.bf16.mxu0 0
      %536 = vmatpush1.bf16.msra.mxu0 0
      %537 = vmatprep.subr.bf16.mxu0 0
      %538 = vmatpush1.bf16.msra.mxu0 0
      %539 = vmatprep.subr.bf16.mxu0 0
      %540 = vmatpush1.bf16.msra.mxu0 0
      %541 = vmatprep.subr.bf16.mxu0 0
      %542 = vmatpush1.bf16.msra.mxu0 0
      %543 = vmatprep.subr.bf16.mxu0 0
      %544 = vmatpush1.bf16.msra.mxu0 0
      %545 = vmatprep.subr.bf16.mxu0 0
      %546 = vmatpush1.bf16.msra.mxu0 %v529
      %547 = vmatprep.subr.bf16.mxu0 0
      %548 = vmatpush2.bf16.msra.mxu0 0
      %549 = vmatprep.subr.bf16.mxu0 0
      %550 = vmatpush2.bf16.msra.mxu0 0
      %551 = vmatprep.subr.bf16.mxu0 0
      %552 = vmatpush2.bf16.msra.mxu0 0
      %553 = vmatprep.subr.bf16.mxu0 0
      %554 = vmatpush2.bf16.msra.mxu0 0
      %555 = vmatprep.subr.bf16.mxu0 0
      %556 = vmatpush2.bf16.msra.mxu0 0
      %557 = vmatprep.subr.bf16.mxu0 0
      %558 = vmatpush2.bf16.msra.mxu0 0
      %559 = vmatprep.subr.bf16.mxu0 0
      %560 = vmatpush2.bf16.msra.mxu0 0
      %561 = vmatprep.subr.bf16.mxu0 0
      %562 = vmatpush2.bf16.msra.mxu0 0
      %563 = vmatprep.mubr.bf16.mxu0 0
      %564 = vmatmul.mubr.bf16.gmra.mxu0 %v526
      %v565 = vpop.f32.mrf.mxu0
      %v566 = vadd.f32 0.0, %v565
      %v567 = vpop.f32.mrf.mxu0
      %v568 = vpop.f32.mrf.mxu0
      %v569 = vpop.f32.mrf.mxu0
      %570 = vdwg.mxu0
      %v571 = vpack.c.bf16 %v566, %v566
      %572 = vrot.lane.b32.xlu0 %v344, 112
      %v573 = vpop.permute.xlu0 %572
      %574 = vrot.lane.b32.xlu0 %v345, 80
      %v575 = vpop.permute.xlu0 %574
      %v577 = vsel %vm349, %v573, 0
      %v580 = vsel %vm349, %v575, 0
      %582 = vmatprep.subr.bf16.mxu0 0
      %583 = vmatpush1.bf16.xpose.msra.mxu0 0
      %584 = vmatprep.subr.bf16.mxu0 0
      %585 = vmatpush1.bf16.xpose.msra.mxu0 0
      %586 = vmatprep.subr.bf16.mxu0 0
      %587 = vmatpush1.bf16.xpose.msra.mxu0 0
      %588 = vmatprep.subr.bf16.mxu0 0
      %589 = vmatpush1.bf16.xpose.msra.mxu0 0
      %590 = vmatprep.subr.bf16.mxu0 0
      %591 = vmatpush1.bf16.xpose.msra.mxu0 0
      %592 = vmatprep.subr.bf16.mxu0 0
      %593 = vmatpush1.bf16.xpose.msra.mxu0 0
      %594 = vmatprep.subr.bf16.mxu0 0
      %595 = vmatpush1.bf16.xpose.msra.mxu0 0
      %596 = vmatprep.subr.bf16.mxu0 0
      %597 = vmatpush1.bf16.xpose.msra.mxu0 %v580
      %598 = vmatprep.subr.bf16.mxu0 0
      %599 = vmatpush2.bf16.xpose.msra.mxu0 0
      %600 = vmatprep.subr.bf16.mxu0 0
      %601 = vmatpush2.bf16.xpose.msra.mxu0 0
      %602 = vmatprep.subr.bf16.mxu0 0
      %603 = vmatpush2.bf16.xpose.msra.mxu0 0
      %604 = vmatprep.subr.bf16.mxu0 0
      %605 = vmatpush2.bf16.xpose.msra.mxu0 0
      %606 = vmatprep.subr.bf16.mxu0 0
      %607 = vmatpush2.bf16.xpose.msra.mxu0 0
      %608 = vmatprep.subr.bf16.mxu0 0
      %609 = vmatpush2.bf16.xpose.msra.mxu0 0
      %610 = vmatprep.subr.bf16.mxu0 0
      %611 = vmatpush2.bf16.xpose.msra.mxu0 0
      %612 = vmatprep.subr.bf16.mxu0 0
      %613 = vmatpush2.bf16.xpose.msra.mxu0 0
      %614 = vmatprep.mubr.bf16.mxu0 0
      %615 = vmatmul.mubr.bf16.gmra.mxu0 %v577
      %v616 = vpop.f32.mrf.mxu0
      %v617 = vadd.f32 0.0, %v616
      %v618 = vpop.f32.mrf.mxu0
      %v619 = vpop.f32.mrf.mxu0
      %v620 = vpop.f32.mrf.mxu0
      %621 = vdwg.mxu0
      %v622 = vsel %vm396, %v617, -inf
      %623 = vmax.xlane.f32.xlu0 %v622
      %v624 = vpop.xlane.xlu0 %623
      %v625 = vsub.f32 %v617, %v624
      %v626 = vmul.f32 %v625, 1.442695
      %v627 = vpow.pop %v626
      %v628 = vsel %vm396, %v627, 0.0
      %629 = vadd.xlane.f32.xlu0 %v628
      %v630 = vpop.xlane.xlu0 %629
      %v631 = vrcp.pop %v630
      %v632 = vmul.f32 %v627, %v631
      %v633 = vpack.c.bf16 %v632, %v632
      %634 = vrot.lane.b32.xlu0 %v345, 48
      %v635 = vpop.permute.xlu0 %634
      %v637 = vsel %vm411, %v633, 0
      %v640 = vsel %vm415, %v635, 0
      %642 = vmatprep.subr.bf16.mxu0 0
      %643 = vmatpush1.bf16.msra.mxu0 0
      %644 = vmatprep.subr.bf16.mxu0 0
      %645 = vmatpush1.bf16.msra.mxu0 0
      %646 = vmatprep.subr.bf16.mxu0 0
      %647 = vmatpush1.bf16.msra.mxu0 0
      %648 = vmatprep.subr.bf16.mxu0 0
      %649 = vmatpush1.bf16.msra.mxu0 0
      %650 = vmatprep.subr.bf16.mxu0 0
      %651 = vmatpush1.bf16.msra.mxu0 0
      %652 = vmatprep.subr.bf16.mxu0 0
      %653 = vmatpush1.bf16.msra.mxu0 0
      %654 = vmatprep.subr.bf16.mxu0 0
      %655 = vmatpush1.bf16.msra.mxu0 0
      %656 = vmatprep.subr.bf16.mxu0 0
      %657 = vmatpush1.bf16.msra.mxu0 %v640
      %658 = vmatprep.subr.bf16.mxu0 0
      %659 = vmatpush2.bf16.msra.mxu0 0
      %660 = vmatprep.subr.bf16.mxu0 0
      %661 = vmatpush2.bf16.msra.mxu0 0
      %662 = vmatprep.subr.bf16.mxu0 0
      %663 = vmatpush2.bf16.msra.mxu0 0
      %664 = vmatprep.subr.bf16.mxu0 0
      %665 = vmatpush2.bf16.msra.mxu0 0
      %666 = vmatprep.subr.bf16.mxu0 0
      %667 = vmatpush2.bf16.msra.mxu0 0
      %668 = vmatprep.subr.bf16.mxu0 0
      %669 = vmatpush2.bf16.msra.mxu0 0
      %670 = vmatprep.subr.bf16.mxu0 0
      %671 = vmatpush2.bf16.msra.mxu0 0
      %672 = vmatprep.subr.bf16.mxu0 0
      %673 = vmatpush2.bf16.msra.mxu0 0
      %674 = vmatprep.mubr.bf16.mxu0 0
      %675 = vmatmul.mubr.bf16.gmra.mxu0 %v637
      %v676 = vpop.f32.mrf.mxu0
      %v677 = vadd.f32 0.0, %v676
      %v678 = vpop.f32.mrf.mxu0
      %v679 = vpop.f32.mrf.mxu0
      %v680 = vpop.f32.mrf.mxu0
      %681 = vdwg.mxu0
      %v682 = vpack.c.bf16 %v677, %v677
      %683 = vrot.lane.b32.xlu0 %v344, 104
      %v684 = vpop.permute.xlu0 %683
      %685 = vrot.lane.b32.xlu0 %v345, 72
      %v686 = vpop.permute.xlu0 %685
      %v688 = vsel %vm349, %v684, 0
      %v691 = vsel %vm349, %v686, 0
      %693 = vmatprep.subr.bf16.mxu0 0
      %694 = vmatpush1.bf16.xpose.msra.mxu0 0
      %695 = vmatprep.subr.bf16.mxu0 0
      %696 = vmatpush1.bf16.xpose.msra.mxu0 0
      %697 = vmatprep.subr.bf16.mxu0 0
      %698 = vmatpush1.bf16.xpose.msra.mxu0 0
      %699 = vmatprep.subr.bf16.mxu0 0
      %700 = vmatpush1.bf16.xpose.msra.mxu0 0
      %701 = vmatprep.subr.bf16.mxu0 0
      %702 = vmatpush1.bf16.xpose.msra.mxu0 0
      %703 = vmatprep.subr.bf16.mxu0 0
      %704 = vmatpush1.bf16.xpose.msra.mxu0 0
      %705 = vmatprep.subr.bf16.mxu0 0
      %706 = vmatpush1.bf16.xpose.msra.mxu0 0
      %707 = vmatprep.subr.bf16.mxu0 0
      %708 = vmatpush1.bf16.xpose.msra.mxu0 %v691
      %709 = vmatprep.subr.bf16.mxu0 0
      %710 = vmatpush2.bf16.xpose.msra.mxu0 0
      %711 = vmatprep.subr.bf16.mxu0 0
      %712 = vmatpush2.bf16.xpose.msra.mxu0 0
      %713 = vmatprep.subr.bf16.mxu0 0
      %714 = vmatpush2.bf16.xpose.msra.mxu0 0
      %715 = vmatprep.subr.bf16.mxu0 0
      %716 = vmatpush2.bf16.xpose.msra.mxu0 0
      %717 = vmatprep.subr.bf16.mxu0 0
      %718 = vmatpush2.bf16.xpose.msra.mxu0 0
      %719 = vmatprep.subr.bf16.mxu0 0
      %720 = vmatpush2.bf16.xpose.msra.mxu0 0
      %721 = vmatprep.subr.bf16.mxu0 0
      %722 = vmatpush2.bf16.xpose.msra.mxu0 0
      %723 = vmatprep.subr.bf16.mxu0 0
      %724 = vmatpush2.bf16.xpose.msra.mxu0 0
      %725 = vmatprep.mubr.bf16.mxu0 0
      %726 = vmatmul.mubr.bf16.gmra.mxu0 %v688
      %v727 = vpop.f32.mrf.mxu0
      %v728 = vadd.f32 0.0, %v727
      %v729 = vpop.f32.mrf.mxu0
      %v730 = vpop.f32.mrf.mxu0
      %v731 = vpop.f32.mrf.mxu0
      %732 = vdwg.mxu0
      %v733 = vsel %vm396, %v728, -inf
      %734 = vmax.xlane.f32.xlu0 %v733
      %v735 = vpop.xlane.xlu0 %734
      %v736 = vsub.f32 %v728, %v735
      %v737 = vmul.f32 %v736, 1.442695
      %v738 = vpow.pop %v737
      %v739 = vsel %vm396, %v738, 0.0
      %740 = vadd.xlane.f32.xlu0 %v739
      %v741 = vpop.xlane.xlu0 %740
      %v742 = vrcp.pop %v741
      %v743 = vmul.f32 %v738, %v742
      %v744 = vpack.c.bf16 %v743, %v743
      %745 = vrot.lane.b32.xlu0 %v345, 40
      %v746 = vpop.permute.xlu0 %745
      %v748 = vsel %vm411, %v744, 0
      %v751 = vsel %vm415, %v746, 0
      %753 = vmatprep.subr.bf16.mxu0 0
      %754 = vmatpush1.bf16.msra.mxu0 0
      %755 = vmatprep.subr.bf16.mxu0 0
      %756 = vmatpush1.bf16.msra.mxu0 0
      %757 = vmatprep.subr.bf16.mxu0 0
      %758 = vmatpush1.bf16.msra.mxu0 0
      %759 = vmatprep.subr.bf16.mxu0 0
      %760 = vmatpush1.bf16.msra.mxu0 0
      %761 = vmatprep.subr.bf16.mxu0 0
      %762 = vmatpush1.bf16.msra.mxu0 0
      %763 = vmatprep.subr.bf16.mxu0 0
      %764 = vmatpush1.bf16.msra.mxu0 0
      %765 = vmatprep.subr.bf16.mxu0 0
      %766 = vmatpush1.bf16.msra.mxu0 0
      %767 = vmatprep.subr.bf16.mxu0 0
      %768 = vmatpush1.bf16.msra.mxu0 %v751
      %769 = vmatprep.subr.bf16.mxu0 0
      %770 = vmatpush2.bf16.msra.mxu0 0
      %771 = vmatprep.subr.bf16.mxu0 0
      %772 = vmatpush2.bf16.msra.mxu0 0
      %773 = vmatprep.subr.bf16.mxu0 0
      %774 = vmatpush2.bf16.msra.mxu0 0
      %775 = vmatprep.subr.bf16.mxu0 0
      %776 = vmatpush2.bf16.msra.mxu0 0
      %777 = vmatprep.subr.bf16.mxu0 0
      %778 = vmatpush2.bf16.msra.mxu0 0
      %779 = vmatprep.subr.bf16.mxu0 0
      %780 = vmatpush2.bf16.msra.mxu0 0
      %781 = vmatprep.subr.bf16.mxu0 0
      %782 = vmatpush2.bf16.msra.mxu0 0
      %783 = vmatprep.subr.bf16.mxu0 0
      %784 = vmatpush2.bf16.msra.mxu0 0
      %785 = vmatprep.mubr.bf16.mxu0 0
      %786 = vmatmul.mubr.bf16.gmra.mxu0 %v748
      %v787 = vpop.f32.mrf.mxu0
      %v788 = vadd.f32 0.0, %v787
      %v789 = vpop.f32.mrf.mxu0
      %v790 = vpop.f32.mrf.mxu0
      %v791 = vpop.f32.mrf.mxu0
      %792 = vdwg.mxu0
      %v793 = vpack.c.bf16 %v788, %v788
      %795 = vrot.lane.b32.xlu0 %v571, 8
      %v796 = vpop.permute.xlu0 %795
      %798 = vrot.lane.b32.xlu0 %v682, 16
      %v799 = vpop.permute.xlu0 %798
      %801 = vrot.lane.b32.xlu0 %v793, 24
      %v802 = vpop.permute.xlu0 %801
      %v805 = vsel %vm349, %v459, %v796
      %vm806 = vcmask 130048
      %v808 = vsel %vm806, %v805, %v799
      %vm809 = vcmask 195584
      %v811 = vsel %vm809, %v808, %v802
      %v812 = vld [vmem:[%s3] sm:$0xf]
      %v813 = vld [vmem:[%s3 + $0x4] sm:$0xf]
      %v814 = vld [vmem:[%s3 + $0x8] sm:$0xf]
      %v815 = vld [vmem:[%s3 + $0xc] sm:$0xf]
      %v816 = vld [vmem:[%s4] sm:$0x1]
      %v818 = vlaneseq
      %v819 = vshrl.u32 %v818, 7
      %v820 = vsub.s32 0, %v819
      %v821 = vrot.slane %v816, %v820
      %v827 = vunpack.c.l.b16 %v812
      %v828 = vunpack.c.l.b16 %v813
      %v829 = vunpack.c.l.b16 %v814
      %v830 = vunpack.c.l.b16 %v815
      %v831 = vpack.c.b16 %v828, %v827
      %v832 = vpack.c.b16 %v830, %v829
      %v835 = vsel %vm299, %v811, 0
      %837 = vmatprep.subr.bf16.mxu0 0
      %838 = vmatpush1.bf16.msra.mxu0 0
      %839 = vmatprep.subr.bf16.mxu0 0
      %840 = vmatpush1.bf16.msra.mxu0 0
      %841 = vmatprep.subr.bf16.mxu0 0
      %842 = vmatpush1.bf16.msra.mxu0 0
      %843 = vmatprep.subr.bf16.mxu0 0
      %844 = vmatpush1.bf16.msra.mxu0 0
      %845 = vmatprep.subr.bf16.mxu0 0
      %846 = vmatpush1.bf16.msra.mxu0 0
      %847 = vmatprep.subr.bf16.mxu0 0
      %848 = vmatpush1.bf16.msra.mxu0 0
      %849 = vmatprep.subr.bf16.mxu0 0
      %850 = vmatpush1.bf16.msra.mxu0 %v832
      %851 = vmatprep.subr.bf16.mxu0 0
      %852 = vmatpush1.bf16.msra.mxu0 %v831
      %853 = vmatprep.subr.bf16.mxu0 0
      %854 = vmatpush2.bf16.msra.mxu0 0
      %855 = vmatprep.subr.bf16.mxu0 0
      %856 = vmatpush2.bf16.msra.mxu0 0
      %857 = vmatprep.subr.bf16.mxu0 0
      %858 = vmatpush2.bf16.msra.mxu0 0
      %859 = vmatprep.subr.bf16.mxu0 0
      %860 = vmatpush2.bf16.msra.mxu0 0
      %861 = vmatprep.subr.bf16.mxu0 0
      %862 = vmatpush2.bf16.msra.mxu0 0
      %863 = vmatprep.subr.bf16.mxu0 0
      %864 = vmatpush2.bf16.msra.mxu0 0
      %865 = vmatprep.subr.bf16.mxu0 0
      %866 = vmatpush2.bf16.msra.mxu0 0
      %867 = vmatprep.subr.bf16.mxu0 0
      %868 = vmatpush2.bf16.msra.mxu0 0
      %869 = vmatprep.mubr.bf16.mxu0 0
      %870 = vmatmul.mubr.bf16.gmra.mxu0 %v835
      %v871 = vpop.f32.mrf.mxu0
      %v872 = vadd.f32 %v821, %v871
      %v873 = vpop.f32.mrf.mxu0
      %v874 = vpop.f32.mrf.mxu0
      %v875 = vpop.f32.mrf.mxu0
      %876 = vdwg.mxu0
      %v877 = vunpack.c.l.bf16 %v275
      %v878 = vadd.f32 %v877, %v872
      %vm879 = vcmask 257024
      %v880 = vsel %vm879, %v878, 0.0
      %881 = vadd.xlane.f32.xlu0 %v880
      %v882 = vpop.xlane.xlu0 %881
      %v883 = vrcp.pop 32.0
      %v884 = vmul.f32 %v882, %v883
      %v885 = vsub.f32 %v878, %v884
      %v886 = vmul.f32 %v885, %v885
      %v887 = vsel %vm879, %v886, 0.0
      %888 = vadd.xlane.f32.xlu0 %v887
      %v889 = vpop.xlane.xlu0 %888
      %v890 = vmul.f32 %v889, %v883
      %v891 = vadd.f32 %v890, 1e-05
      %v892 = vrsqrt.pop %v891
      %v893 = vmul.f32 %v885, %v892
      %v894 = vld [vmem:[%s5] sm:$0x1]
      %v896 = vlaneseq
      %v897 = vshrl.u32 %v896, 7
      %v898 = vsub.s32 0, %v897
      %v899 = vrot.slane %v894, %v898
      %v901 = vmul.f32 %v893, %v899
      %v902 = vld [vmem:[%s6] sm:$0x1]
      %v904 = vlaneseq
      %v905 = vshrl.u32 %v904, 7
      %v906 = vsub.s32 0, %v905
      %v907 = vrot.slane %v902, %v906
      %v909 = vadd.f32 %v901, %v907
      %v910 = vpack.c.bf16 %v909, %v909
      %vm911 = vcmask 254976
      %912 = vst.msk [vmem:[%s273] sm:$0x3] %vm911, %v910
      %p913 = scmp.lt.s32.totalorder %s18, 1
      %s914 = scalar_select %p913, %s18, 1
      %s915 = smul.addr %s914, 2
      %s916 = scalar_lea.vmem %s7, %s915
      // Predicated region
      $region49: #{transformer_forward.15} parent=47 // pred_check
        %p917 = pneg %p188
      $region50: #{transformer_forward.15} parent=47 // pred_check_branch
        %919 = sbr.rel (%p917) target = $region52
      $region51: #{transformer_forward.15} parent=47 // pred_region
        _
      $region52: #{transformer_forward.15} parent=47 // pred_fallthru
        _
    $region48: #{transformer_forward.15} parent=5 // pred_fallthru
      _
    %p920 = scmp.le.s32.totalorder 2, %s13
    // Predicated region
    $region53: #{transformer_forward.15} parent=5 // pred_check
      %p921 = pneg %p920
    $region54: #{transformer_forward.15} parent=5 // pred_check_branch
      %923 = sbr.rel (%p921) target = $region56
    $region55: #{transformer_forward.15} parent=5 // pred_region
      %s924 = ssub.s32 %s13, 2
      // Predicated region
      $region57: #{transformer_forward.15} parent=55 // pred_check
        %p925 = pneg %p194
      $region58: #{transformer_forward.15} parent=55 // pred_check_branch
        %927 = sbr.rel (%p925) target = $region60
      $region59: #{transformer_forward.15} parent=55 // pred_region
        %p928 = scmp.lt.s32.totalorder %s19, 1
        %s929 = scalar_select %p928, %s19, 1
        %s930 = smul.addr %s929, 2
        %s931 = scalar_lea.vmem %s7, %s930
      $region60: #{transformer_forward.15} parent=55 // pred_fallthru
        _
    $region56: #{transformer_forward.15} parent=5 // pred_fallthru
      _
  $region6: #{transformer_forward.15} parent=0 // loop_footer
    %s17 = sadd.s32 1, %s13
  $region7: #{transformer_forward.15} parent=0 // loop_footer_branch
    %12 = sbr.rel target = $region3
  $region8: #{transformer_forward.15} parent=0 // loop_exit
    _

// kernel: transformer_forward.11
$region0: #{transformer_forward.11}
  #allocation0 [shape = 'u32[]', space=smem, size = 0x4, offset = 0x4, fixed_abs, tag = 'smem constant byte address 0x4 - core index']
  #allocation1 [shape = 'u32[144,128]{1,0:T(1,128)}', space=vmem, size = 0x12000, scoped, tag = 'internal scratch']
  %s0 = inlined_call_operand.vmem [shape: bf16[2,8,32], index: 0, kind: input, shape index: {}]
  %s1 = inlined_call_operand.vmem [shape: bf16[32,96], index: 1, kind: input, shape index: {}]
  %s2 = inlined_call_operand.vmem [shape: f32[1,96], index: 2, kind: input, shape index: {}]
  %s3 = inlined_call_operand.vmem [shape: bf16[32,32], index: 3, kind: input, shape index: {}]
  %s4 = inlined_call_operand.vmem [shape: f32[1,32], index: 4, kind: input, shape index: {}]
  %s5 = inlined_call_operand.vmem [shape: f32[1,32], index: 5, kind: input, shape index: {}]
  %s6 = inlined_call_operand.vmem [shape: f32[1,32], index: 6, kind: input, shape index: {}]
  %s7 = inlined_call_operand.vmem [shape: bf16[2,8,32], index: 7, kind: output, shape index: {}]
  %s8 = sld [smem:[#allocation0]]
  $region61: #{transformer_forward.11} parent=0
    _
  %s10 = ssub.s32 1, %s8
  %s11 = scalar_select 0, %s10, %s8
  loop: start=0, step=1, limit=4
  $region2: #{transformer_forward.11} parent=0 // loop_pre_header
    _
  $region3: #{transformer_forward.11} parent=0 // loop_header
    %s13 = sphi 0, %s17
    %p14 = scmp.ge.s32.totalorder %s13, 4
    %s23 = sphi 0, %s25
    %s26 = sphi 0, %s23
    %s27 = sphi 0, %s26
    %s43 = sphi 0, %s27
    %s47 = sphi 0, %s47
    %s49 = sphi 0, %s47
    %s50 = sphi 0, %s49
    %s64 = sphi 0, %s50
    %s68 = sphi 0, %s68
    %s70 = sphi 0, %s68
    %s71 = sphi 0, %s70
    %s85 = sphi 0, %s71
    %s89 = sphi 0, %s89
    %s91 = sphi 0, %s89
    %s92 = sphi 0, %s91
    %s106 = sphi 0, %s92
    %s110 = sphi 0, %s110
    %s112 = sphi 0, %s110
    %s113 = sphi 0, %s112
    %s127 = sphi 0, %s113
    %s131 = sphi 0, %s131
    %s133 = sphi 0, %s131
    %s134 = sphi 0, %s133
    %s148 = sphi 0, %s134
    %s152 = sphi 0, %s152
    %s154 = sphi 0, %s152
    %s155 = sphi 0, %s154
    %s169 = sphi 0, %s155
    %s175 = sphi 0, %s177
    %s178 = sphi 0, %s175
    %s179 = sphi 0, %s178
    %s195 = sphi 0, %s179
  $region4: #{transformer_forward.11} parent=0 // loop_header_branch
    %16 = sbr.rel (%p14) target = $region8
  $region5: #{transformer_forward.11} parent=0 // loop_body
    %s18 = ssub.s32 %s13, 1
    %s19 = ssub.s32 %s13, 2
    %s20 = sadd.s32 %s13, 1
    %s21 = ssub.s32 %s13, %s20
    %p22 = scmp.eq.s32.totalorder %s21, 0
    %s24 = sadd.s32 %s23, 1
    %s25 = scalar_select %p22, %s23, %s24
    %p28 = pneg %p22
    %p29 = scmp.eq.s32.totalorder %s13, 1
    %p30 = por %p28, %p29
    %p31 = scmp.ne.s32.totalorder %s23, %s26
    %p32 = scmp.eq.s32.totalorder %s13, 0
    %p33 = por %p31, %p32
    %p34 = scmp.ne.s32.totalorder %s23, %s26
    %p35 = scmp.eq.s32.totalorder %s18, 1
    %p36 = por %p34, %p35
    %p37 = scmp.ne.s32.totalorder %s26, %s27
    %p38 = scmp.eq.s32.totalorder %s18, 0
    %p39 = por %p37, %p38
    %p40 = scmp.ne.s32.totalorder %s26, %s27
    %p41 = scmp.eq.s32.totalorder %s19, 1
    %p42 = por %p40, %p41
    %p44 = scmp.ne.s32.totalorder %s27, %s43
    %p45 = scmp.eq.s32.totalorder %s19, 0
    %p46 = por %p44, %p45
    %s48 = sadd.s32 %s47, 1
    %p51 = scmp.eq.s32.totalorder %s13, 1
    %p52 = scmp.ne.s32.totalorder %s47, %s49
    %p53 = scmp.eq.s32.totalorder %s13, 0
    %p54 = por %p52, %p53
    %p55 = scmp.ne.s32.totalorder %s47, %s49
    %p56 = scmp.eq.s32.totalorder %s18, 1
    %p57 = por %p55, %p56
    %p58 = scmp.ne.s32.totalorder %s49, %s50
    %p59 = scmp.eq.s32.totalorder %s18, 0
    %p60 = por %p58, %p59
    %p61 = scmp.ne.s32.totalorder %s49, %s50
    %p62 = scmp.eq.s32.totalorder %s19, 1
    %p63 = por %p61, %p62
    %p65 = scmp.ne.s32.totalorder %s50, %s64
    %p66 = scmp.eq.s32.totalorder %s19, 0
    %p67 = por %p65, %p66
    %s69 = sadd.s32 %s68, 1
    %p72 = scmp.eq.s32.totalorder %s13, 1
    %p73 = scmp.ne.s32.totalorder %s68, %s70
    %p74 = scmp.eq.s32.totalorder %s13, 0
    %p75 = por %p73, %p74
    %p76 = scmp.ne.s32.totalorder %s68, %s70
    %p77 = scmp.eq.s32.totalorder %s18, 1
    %p78 = por %p76, %p77
    %p79 = scmp.ne.s32.totalorder %s70, %s71
    %p80 = scmp.eq.s32.totalorder %s18, 0
    %p81 = por %p79, %p80
    %p82 = scmp.ne.s32.totalorder %s70, %s71
    %p83 = scmp.eq.s32.totalorder %s19, 1
    %p84 = por %p82, %p83
    %p86 = scmp.ne.s32.totalorder %s71, %s85
    %p87 = scmp.eq.s32.totalorder %s19, 0
    %p88 = por %p86, %p87
    %s90 = sadd.s32 %s89, 1
    %p93 = scmp.eq.s32.totalorder %s13, 1
    %p94 = scmp.ne.s32.totalorder %s89, %s91
    %p95 = scmp.eq.s32.totalorder %s13, 0
    %p96 = por %p94, %p95
    %p97 = scmp.ne.s32.totalorder %s89, %s91
    %p98 = scmp.eq.s32.totalorder %s18, 1
    %p99 = por %p97, %p98
    %p100 = scmp.ne.s32.totalorder %s91, %s92
    %p101 = scmp.eq.s32.totalorder %s18, 0
    %p102 = por %p100, %p101
    %p103 = scmp.ne.s32.totalorder %s91, %s92
    %p104 = scmp.eq.s32.totalorder %s19, 1
    %p105 = por %p103, %p104
    %p107 = scmp.ne.s32.totalorder %s92, %s106
    %p108 = scmp.eq.s32.totalorder %s19, 0
    %p109 = por %p107, %p108
    %s111 = sadd.s32 %s110, 1
    %p114 = scmp.eq.s32.totalorder %s13, 1
    %p115 = scmp.ne.s32.totalorder %s110, %s112
    %p116 = scmp.eq.s32.totalorder %s13, 0
    %p117 = por %p115, %p116
    %p118 = scmp.ne.s32.totalorder %s110, %s112
    %p119 = scmp.eq.s32.totalorder %s18, 1
    %p120 = por %p118, %p119
    %p121 = scmp.ne.s32.totalorder %s112, %s113
    %p122 = scmp.eq.s32.totalorder %s18, 0
    %p123 = por %p121, %p122
    %p124 = scmp.ne.s32.totalorder %s112, %s113
    %p125 = scmp.eq.s32.totalorder %s19, 1
    %p126 = por %p124, %p125
    %p128 = scmp.ne.s32.totalorder %s113, %s127
    %p129 = scmp.eq.s32.totalorder %s19, 0
    %p130 = por %p128, %p129
    %s132 = sadd.s32 %s131, 1
    %p135 = scmp.eq.s32.totalorder %s13, 1
    %p136 = scmp.ne.s32.totalorder %s131, %s133
    %p137 = scmp.eq.s32.totalorder %s13, 0
    %p138 = por %p136, %p137
    %p139 = scmp.ne.s32.totalorder %s131, %s133
    %p140 = scmp.eq.s32.totalorder %s18, 1
    %p141 = por %p139, %p140
    %p142 = scmp.ne.s32.totalorder %s133, %s134
    %p143 = scmp.eq.s32.totalorder %s18, 0
    %p144 = por %p142, %p143
    %p145 = scmp.ne.s32.totalorder %s133, %s134
    %p146 = scmp.eq.s32.totalorder %s19, 1
    %p147 = por %p145, %p146
    %p149 = scmp.ne.s32.totalorder %s134, %s148
    %p150 = scmp.eq.s32.totalorder %s19, 0
    %p151 = por %p149, %p150
    %s153 = sadd.s32 %s152, 1
    %p156 = scmp.eq.s32.totalorder %s13, 1
    %p157 = scmp.ne.s32.totalorder %s152, %s154
    %p158 = scmp.eq.s32.totalorder %s13, 0
    %p159 = por %p157, %p158
    %p160 = scmp.ne.s32.totalorder %s152, %s154
    %p161 = scmp.eq.s32.totalorder %s18, 1
    %p162 = por %p160, %p161
    %p163 = scmp.ne.s32.totalorder %s154, %s155
    %p164 = scmp.eq.s32.totalorder %s18, 0
    %p165 = por %p163, %p164
    %p166 = scmp.ne.s32.totalorder %s154, %s155
    %p167 = scmp.eq.s32.totalorder %s19, 1
    %p168 = por %p166, %p167
    %p170 = scmp.ne.s32.totalorder %s155, %s169
    %p171 = scmp.eq.s32.totalorder %s19, 0
    %p172 = por %p170, %p171
    %s173 = ssub.s32 %s13, %s20
    %p174 = scmp.eq.s32.totalorder %s173, 0
    %s176 = sadd.s32 %s175, 1
    %s177 = scalar_select %p174, %s175, %s176
    %p180 = pneg %p174
    %p181 = scmp.eq.s32.totalorder %s13, 1
    %p182 = por %p180, %p181
    %p183 = scmp.ne.s32.totalorder %s175, %s178
    %p184 = scmp.eq.s32.totalorder %s13, 0
    %p185 = por %p183, %p184
    %p186 = scmp.ne.s32.totalorder %s175, %s178
    %p187 = scmp.eq.s32.totalorder %s18, 1
    %p188 = por %p186, %p187
    %p189 = scmp.ne.s32.totalorder %s178, %s179
    %p190 = scmp.eq.s32.totalorder %s18, 0
    %p191 = por %p189, %p190
    %p192 = scmp.ne.s32.totalorder %s178, %s179
    %p193 = scmp.eq.s32.totalorder %s19, 1
    %p194 = por %p192, %p193
    %p196 = scmp.ne.s32.totalorder %s179, %s195
    %p197 = scmp.eq.s32.totalorder %s19, 0
    %p198 = por %p196, %p197
    %p199 = scmp.le.s32.totalorder 1, %s13
    %p200 = scmp.lt.s32.totalorder %s13, 3
    %p201 = pnand %p199, %p200
    %p202 = pneg %p201
    // Predicated region
    $region9: #{transformer_forward.11} parent=5 // pred_check
      _
    $region10: #{transformer_forward.11} parent=5 // pred_check_branch
      %204 = sbr.rel (%p201) target = $region12
    $region11: #{transformer_forward.11} parent=5 // pred_region
      %s205 = ssub.s32 %s13, 1
      // Predicated region
      $region13: #{transformer_forward.11} parent=11 // pred_check
        %p206 = pneg %p60
      $region14: #{transformer_forward.11} parent=11 // pred_check_branch
        %208 = sbr.rel (%p206) target = $region16
      $region15: #{transformer_forward.11} parent=11 // pred_region
        _
      $region16: #{transformer_forward.11} parent=11 // pred_fallthru
        _
      // Predicated region
      $region17: #{transformer_forward.11} parent=11 // pred_check
        %p209 = pneg %p81
      $region18: #{transformer_forward.11} parent=11 // pred_check_branch
        %211 = sbr.rel (%p209) target = $region20
      $region19: #{transformer_forward.11} parent=11 // pred_region
        _
      $region20: #{transformer_forward.11} parent=11 // pred_fallthru
        _
      // Predicated region
      $region21: #{transformer_forward.11} parent=11 // pred_check
        %p212 = pneg %p102
      $region22: #{transformer_forward.11} parent=11 // pred_check_branch
        %214 = sbr.rel (%p212) target = $region24
      $region23: #{transformer_forward.11} parent=11 // pred_region
        _
      $region24: #{transformer_forward.11} parent=11 // pred_fallthru
        _
      // Predicated region
      $region25: #{transformer_forward.11} parent=11 // pred_check
        %p215 = pneg %p123
      $region26: #{transformer_forward.11} parent=11 // pred_check_branch
        %217 = sbr.rel (%p215) target = $region28
      $region27: #{transformer_forward.11} parent=11 // pred_region
        _
      $region28: #{transformer_forward.11} parent=11 // pred_fallthru
        _
      // Predicated region
      $region29: #{transformer_forward.11} parent=11 // pred_check
        %p218 = pneg %p144
      $region30: #{transformer_forward.11} parent=11 // pred_check_branch
        %220 = sbr.rel (%p218) target = $region32
      $region31: #{transformer_forward.11} parent=11 // pred_region
        _
      $region32: #{transformer_forward.11} parent=11 // pred_fallthru
        _
      // Predicated region
      $region33: #{transformer_forward.11} parent=11 // pred_check
        %p221 = pneg %p165
      $region34: #{transformer_forward.11} parent=11 // pred_check_branch
        %223 = sbr.rel (%p221) target = $region36
      $region35: #{transformer_forward.11} parent=11 // pred_region
        _
      $region36: #{transformer_forward.11} parent=11 // pred_fallthru
        _
    $region12: #{transformer_forward.11} parent=5 // pred_fallthru
      _
    %p224 = scmp.lt.s32.totalorder %s13, 2
    // Predicated region
    $region37: #{transformer_forward.11} parent=5 // pred_check
      %p225 = pneg %p224
    $region38: #{transformer_forward.11} parent=5 // pred_check_branch
      %227 = sbr.rel (%p225) target = $region40
    $region39: #{transformer_forward.11} parent=5 // pred_region
      // Predicated region
      $region41: #{transformer_forward.11} parent=39 // pred_check
        %p228 = pneg %p33
      $region42: #{transformer_forward.11} parent=39 // pred_check_branch
        %230 = sbr.rel (%p228) target = $region44
      $region43: #{transformer_forward.11} parent=39 // pred_region
        %p231 = scmp.lt.s32.totalorder %s13, 1
        %s232 = scalar_select %p231, %s13, 1
        %s233 = smul.addr %s232, 4
        %s234 = scalar_lea.vmem %s0, %s233
      $region44: #{transformer_forward.11} parent=39 // pred_fallthru
        _
    $region40: #{transformer_forward.11} parent=5 // pred_fallthru
      _
    %p235 = scmp.le.s32.totalorder 1, %s13
    %p236 = scmp.lt.s32.totalorder %s13, 3
    %p237 = pnand %p235, %p236
    %p238 = pneg %p237
    // Predicated region
    $region45: #{transformer_forward.11} parent=5 // pred_check
      _
    $region46: #{transformer_forward.11} parent=5 // pred_check_branch
      %240 = sbr.rel (%p237) target = $region48
    $region47: #{transformer_forward.11} parent=5 // pred_region
      %s241 = ssub.s32 %s13, 1
      %p242 = scmp.lt.s32.totalorder %s18, 1
      %s243 = scalar_select %p242, %s18, 1
      %s244 = smul.addr %s243, 4
      %s245 = scalar_lea.vmem %s0, %s244
      %p246 = pneg %p39
      %p247 = pneg %p36
      %p248 = pneg %p60
      %p249 = pneg %p57
      %p250 = pneg %p81
      %p251 = pneg %p78
      %p252 = pneg %p102
      %p253 = pneg %p99
      %p254 = pneg %p123
      %p255 = pneg %p120
      %p256 = pneg %p144
      %p257 = pneg %p141
      %p258 = pneg %p165
      %p259 = pneg %p162
      %p260 = pneg %p191
      %p261 = pneg %p188
      %p262 = scmp.lt.s32.totalorder %s18, 1
      %s263 = scalar_select %p262, %s18, 1
      %s264 = smul.addr %s263, 4
      %s265 = scalar_lea.vmem %s7, %s264
      %p266 = scmp.lt.s32.totalorder %s18, 1
      %s267 = scalar_select %p266, %s18, 1
      %s268 = smul.addr %s267, 4
      %s269 = scalar_lea.vmem %s0, %s268
      %p270 = scmp.lt.s32.totalorder %s18, 1
      %s271 = scalar_select %p270, %s18, 1
      %s272 = smul.addr %s271, 4
      %s273 = scalar_lea.vmem %s7, %s272
      %v275 = vld [vmem:[%s269] sm:$0xf]
      %v276 = vld [vmem:[%s1] sm:$0xf]
      %v277 = vld [vmem:[%s1 + $0x4] sm:$0xf]
      %v278 = vld [vmem:[%s1 + $0x8] sm:$0xf]
      %v279 = vld [vmem:[%s1 + $0xc] sm:$0xf]
      %v280 = vld [vmem:[%s2] sm:$0x1]
      %v282 = vlaneseq
      %v283 = vshrl.u32 %v282, 7
      %v284 = vsub.s32 0, %v283
      %v285 = vrot.slane %v280, %v284
      %v291 = vunpack.c.l.b16 %v276
      %v292 = vunpack.c.l.b16 %v277
      %v293 = vunpack.c.l.b16 %v278
      %v294 = vunpack.c.l.b16 %v279
      %v295 = vpack.c.b16 %v292, %v291
      %v296 = vpack.c.b16 %v294, %v293
      %vm299 = vcmask 261120
      %v301 = vsel %vm299, %v275, 0
      %303 = vmatprep.subr.bf16.mxu0 0
      %304 = vmatpush1.bf16.msra.mxu0 0
      %305 = vmatprep.subr.bf16.mxu0 0
      %306 = vmatpush1.bf16.msra.mxu0 0
      %307 = vmatprep.subr.bf16.mxu0 0
      %308 = vmatpush1.bf16.msra.mxu0 0
      %309 = vmatprep.subr.bf16.mxu0 0
      %310 = vmatpush1.bf16.msra.mxu0 0
      %311 = vmatprep.subr.bf16.mxu0 0
      %312 = vmatpush1.bf16.msra.mxu0 0
      %313 = vmatprep.subr.bf16.mxu0 0
      %314 = vmatpush1.bf16.msra.mxu0 0
      %315 = vmatprep.subr.bf16.mxu0 0
      %316 = vmatpush1.bf16.msra.mxu0 %v296
      %317 = vmatprep.subr.bf16.mxu0 0
      %318 = vmatpush1.bf16.msra.mxu0 %v295
      %319 = vmatprep.subr.bf16.mxu0 0
      %320 = vmatpush2.bf16.msra.mxu0 0
      %321 = vmatprep.subr.bf16.mxu0 0
      %322 = vmatpush2.bf16.msra.mxu0 0
      %323 = vmatprep.subr.bf16.mxu0 0
      %324 = vmatpush2.bf16.msra.mxu0 0
      %325 = vmatprep.subr.bf16.mxu0 0
      %326 = vmatpush2.bf16.msra.mxu0 0
      %327 = vmatprep.subr.bf16.mxu0 0
      %328 = vmatpush2.bf16.msra.mxu0 0
      %329 = vmatprep.subr.bf16.mxu0 0
      %330 = vmatpush2.bf16.msra.mxu0 0
      %331 = vmatprep.subr.bf16.mxu0 0
      %332 = vmatpush2.bf16.msra.mxu0 0
      %333 = vmatprep.subr.bf16.mxu0 0
      %334 = vmatpush2.bf16.msra.mxu0 0
      %335 = vmatprep.mubr.bf16.mxu0 0
      %336 = vmatmul.mubr.bf16.gmra.mxu0 %v301
      %v337 = vpop.f32.mrf.mxu0
      %v338 = vadd.f32 %v285, %v337
      %v339 = vpop.f32.mrf.mxu0
      %v340 = vpop.f32.mrf.mxu0
      %v341 = vpop.f32.mrf.mxu0
      %342 = vdwg.mxu0
      %v343 = vmul.f32 %v338, 0.35355338
      %v344 = vpack.c.bf16 %v343, %v343
      %v345 = vpack.c.bf16 %v338, %v338
      %347 = vrot.lane.b32.xlu0 %v345, 96
      %v348 = vpop.permute.xlu0 %347
      %vm349 = vcmask 64512
      %v351 = vsel %vm349, %v344, 0
      %v354 = vsel %vm349, %v348, 0
      %356 = vmatprep.subr.bf16.mxu0 0
      %357 = vmatpush1.bf16.xpose.msra.mxu0 0
      %358 = vmatprep.subr.bf16.mxu0 0
      %359 = vmatpush1.bf16.xpose.msra.mxu0 0
      %360 = vmatprep.subr.bf16.mxu0 0
      %361 = vmatpush1.bf16.xpose.msra.mxu0 0
      %362 = vmatprep.subr.bf16.mxu0 0
      %363 = vmatpush1.bf16.xpose.msra.mxu0 0
      %364 = vmatprep.subr.bf16.mxu0 0
      %365 = vmatpush1.bf16.xpose.msra.mxu0 0
      %366 = vmatprep.subr.bf16.mxu0 0
      %367 = vmatpush1.bf16.xpose.msra.mxu0 0
      %368 = vmatprep.subr.bf16.mxu0 0
      %369 = vmatpush1.bf16.xpose.msra.mxu0 0
      %370 = vmatprep.subr.bf16.mxu0 0
      %371 = vmatpush1.bf16.xpose.msra.mxu0 %v354
      %372 = vmatprep.subr.bf16.mxu0 0
      %373 = vmatpush2.bf16.xpose.msra.mxu0 0
      %374 = vmatprep.subr.bf16.mxu0 0
      %375 = vmatpush2.bf16.xpose.msra.mxu0 0
      %376 = vmatprep.subr.bf16.mxu0 0
      %377 = vmatpush2.bf16.xpose.msra.mxu0 0
      %378 = vmatprep.subr.bf16.mxu0 0
      %379 = vmatpush2.bf16.xpose.msra.mxu0 0
      %380 = vmatprep.subr.bf16.mxu0 0
      %381 = vmatpush2.bf16.xpose.msra.mxu0 0
      %382 = vmatprep.subr.bf16.mxu0 0
      %383 = vmatpush2.bf16.xpose.msra.mxu0 0
      %384 = vmatprep.subr.bf16.mxu0 0
      %385 = vmatpush2.bf16.xpose.msra.mxu0 0
      %386 = vmatprep.subr.bf16.mxu0 0
      %387 = vmatpush2.bf16.xpose.msra.mxu0 0
      %388 = vmatprep.mubr.bf16.mxu0 0
      %389 = vmatmul.mubr.bf16.gmra.mxu0 %v351
      %v390 = vpop.f32.mrf.mxu0
      %v391 = vadd.f32 0.0, %v390
      %v392 = vpop.f32.mrf.mxu0
      %v393 = vpop.f32.mrf.mxu0
      %v394 = vpop.f32.mrf.mxu0
      %395 = vdwg.mxu0
      %v396 = vsel %vm349, %v391, -inf
      %397 = vmax.xlane.f32.xlu0 %v396
      %v398 = vpop.xlane.xlu0 %397
      %v399 = vsub.f32 %v391, %v398
      %v400 = vmul.f32 %v399, 1.442695
      %v401 = vpow.pop %v400
      %v402 = vsel %vm349, %v401, 0.0
      %403 = vadd.xlane.f32.xlu0 %v402
      %v404 = vpop.xlane.xlu0 %403
      %v405 = vrcp.pop %v404
      %v406 = vmul.f32 %v401, %v405
      %v407 = vpack.c.bf16 %v406, %v406
      %408 = vrot.lane.b32.xlu0 %v345, 64
      %v409 = vpop.permute.xlu0 %408
      %v411 = vsel %vm349, %v407, 0
      %vm413 = vcmask 1043456
      %v415 = vsel %vm413, %v409, 0
      %417 = vmatprep.subr.bf16.mxu0 0
      %418 = vmatpush1.bf16.msra.mxu0 0
      %419 = vmatprep.subr.bf16.mxu0 0
      %420 = vmatpush1.bf16.msra.mxu0 0
      %421 = vmatprep.subr.bf16.mxu0 0
      %422 = vmatpush1.bf16.msra.mxu0 0
      %423 = vmatprep.subr.bf16.mxu0 0
      %424 = vmatpush1.bf16.msra.mxu0 0
      %425 = vmatprep.subr.bf16.mxu0 0
      %426 = vmatpush1.bf16.msra.mxu0 0
      %427 = vmatprep.subr.bf16.mxu0 0
      %428 = vmatpush1.bf16.msra.mxu0 0
      %429 = vmatprep.subr.bf16.mxu0 0
      %430 = vmatpush1.bf16.msra.mxu0 0
      %431 = vmatprep.subr.bf16.mxu0 0
      %432 = vmatpush1.bf16.msra.mxu0 %v415
      %433 = vmatprep.subr.bf16.mxu0 0
      %434 = vmatpush2.bf16.msra.mxu0 0
      %435 = vmatprep.subr.bf16.mxu0 0
      %436 = vmatpush2.bf16.msra.mxu0 0
      %437 = vmatprep.subr.bf16.mxu0 0
      %438 = vmatpush2.bf16.msra.mxu0 0
      %439 = vmatprep.subr.bf16.mxu0 0
      %440 = vmatpush2.bf16.msra.mxu0 0
      %441 = vmatprep.subr.bf16.mxu0 0
      %442 = vmatpush2.bf16.msra.mxu0 0
      %443 = vmatprep.subr.bf16.mxu0 0
      %444 = vmatpush2.bf16.msra.mxu0 0
      %445 = vmatprep.subr.bf16.mxu0 0
      %446 = vmatpush2.bf16.msra.mxu0 0
      %447 = vmatprep.subr.bf16.mxu0 0
      %448 = vmatpush2.bf16.msra.mxu0 0
      %449 = vmatprep.mubr.bf16.mxu0 0
      %450 = vmatmul.mubr.bf16.gmra.mxu0 %v411
      %v451 = vpop.f32.mrf.mxu0
      %v452 = vadd.f32 0.0, %v451
      %v453 = vpop.f32.mrf.mxu0
      %v454 = vpop.f32.mrf.mxu0
      %v455 = vpop.f32.mrf.mxu0
      %456 = vdwg.mxu0
      %v457 = vpack.c.bf16 %v452, %v452
      %459 = vrot.lane.b32.xlu0 %v344, 120
      %v460 = vpop.permute.xlu0 %459
      %461 = vrot.lane.b32.xlu0 %v345, 88
      %v462 = vpop.permute.xlu0 %461
      %v464 = vsel %vm349, %v460, 0
      %v467 = vsel %vm349, %v462, 0
      %469 = vmatprep.subr.bf16.mxu0 0
      %470 = vmatpush1.bf16.xpose.msra.mxu0 0
      %471 = vmatprep.subr.bf16.mxu0 0
      %472 = vmatpush1.bf16.xpose.msra.mxu0 0
      %473 = vmatprep.subr.bf16.mxu0 0
      %474 = vmatpush1.bf16.xpose.msra.mxu0 0
      %475 = vmatprep.subr.bf16.mxu0 0
      %476 = vmatpush1.bf16.xpose.msra.mxu0 0
      %477 = vmatprep.subr.bf16.mxu0 0
      %478 = vmatpush1.bf16.xpose.msra.mxu0 0
      %479 = vmatprep.subr.bf16.mxu0 0
      %480 = vmatpush1.bf16.xpose.msra.mxu0 0
      %481 = vmatprep.subr.bf16.mxu0 0
      %482 = vmatpush1.bf16.xpose.msra.mxu0 0
      %483 = vmatprep.subr.bf16.mxu0 0
      %484 = vmatpush1.bf16.xpose.msra.mxu0 %v467
      %485 = vmatprep.subr.bf16.mxu0 0
      %486 = vmatpush2.bf16.xpose.msra.mxu0 0
      %487 = vmatprep.subr.bf16.mxu0 0
      %488 = vmatpush2.bf16.xpose.msra.mxu0 0
      %489 = vmatprep.subr.bf16.mxu0 0
      %490 = vmatpush2.bf16.xpose.msra.mxu0 0
      %491 = vmatprep.subr.bf16.mxu0 0
      %492 = vmatpush2.bf16.xpose.msra.mxu0 0
      %493 = vmatprep.subr.bf16.mxu0 0
      %494 = vmatpush2.bf16.xpose.msra.mxu0 0
      %495 = vmatprep.subr.bf16.mxu0 0
      %496 = vmatpush2.bf16.xpose.msra.mxu0 0
      %497 = vmatprep.subr.bf16.mxu0 0
      %498 = vmatpush2.bf16.xpose.msra.mxu0 0
      %499 = vmatprep.subr.bf16.mxu0 0
      %500 = vmatpush2.bf16.xpose.msra.mxu0 0
      %501 = vmatprep.mubr.bf16.mxu0 0
      %502 = vmatmul.mubr.bf16.gmra.mxu0 %v464
      %v503 = vpop.f32.mrf.mxu0
      %v504 = vadd.f32 0.0, %v503
      %v505 = vpop.f32.mrf.mxu0
      %v506 = vpop.f32.mrf.mxu0
      %v507 = vpop.f32.mrf.mxu0
      %508 = vdwg.mxu0
      %v509 = vsel %vm349, %v504, -inf
      %510 = vmax.xlane.f32.xlu0 %v509
      %v511 = vpop.xlane.xlu0 %510
      %v512 = vsub.f32 %v504, %v511
      %v513 = vmul.f32 %v512, 1.442695
      %v514 = vpow.pop %v513
      %v515 = vsel %vm349, %v514, 0.0
      %516 = vadd.xlane.f32.xlu0 %v515
      %v517 = vpop.xlane.xlu0 %516
      %v518 = vrcp.pop %v517
      %v519 = vmul.f32 %v514, %v518
      %v520 = vpack.c.bf16 %v519, %v519
      %521 = vrot.lane.b32.xlu0 %v345, 56
      %v522 = vpop.permute.xlu0 %521
      %v524 = vsel %vm349, %v520, 0
      %v527 = vsel %vm413, %v522, 0
      %529 = vmatprep.subr.bf16.mxu0 0
      %530 = vmatpush1.bf16.msra.mxu0 0
      %531 = vmatprep.subr.bf16.mxu0 0
      %532 = vmatpush1.bf16.msra.mxu0 0
      %533 = vmatprep.subr.bf16.mxu0 0
      %534 = vmatpush1.bf16.msra.mxu0 0
      %535 = vmatprep.subr.bf16.mxu0 0
      %536 = vmatpush1.bf16.msra.mxu0 0
      %537 = vmatprep.subr.bf16.mxu0 0
      %538 = vmatpush1.bf16.msra.mxu0 0
      %539 = vmatprep.subr.bf16.mxu0 0
      %540 = vmatpush1.bf16.msra.mxu0 0
      %541 = vmatprep.subr.bf16.mxu0 0
      %542 = vmatpush1.bf16.msra.mxu0 0
      %543 = vmatprep.subr.bf16.mxu0 0
      %544 = vmatpush1.bf16.msra.mxu0 %v527
      %545 = vmatprep.subr.bf16.mxu0 0
      %546 = vmatpush2.bf16.msra.mxu0 0
      %547 = vmatprep.subr.bf16.mxu0 0
      %548 = vmatpush2.bf16.msra.mxu0 0
      %549 = vmatprep.subr.bf16.mxu0 0
      %550 = vmatpush2.bf16.msra.mxu0 0
      %551 = vmatprep.subr.bf16.mxu0 0
      %552 = vmatpush2.bf16.msra.mxu0 0
      %553 = vmatprep.subr.bf16.mxu0 0
      %554 = vmatpush2.bf16.msra.mxu0 0
      %555 = vmatprep.subr.bf16.mxu0 0
      %556 = vmatpush2.bf16.msra.mxu0 0
      %557 = vmatprep.subr.bf16.mxu0 0
      %558 = vmatpush2.bf16.msra.mxu0 0
      %559 = vmatprep.subr.bf16.mxu0 0
      %560 = vmatpush2.bf16.msra.mxu0 0
      %561 = vmatprep.mubr.bf16.mxu0 0
      %562 = vmatmul.mubr.bf16.gmra.mxu0 %v524
      %v563 = vpop.f32.mrf.mxu0
      %v564 = vadd.f32 0.0, %v563
      %v565 = vpop.f32.mrf.mxu0
      %v566 = vpop.f32.mrf.mxu0
      %v567 = vpop.f32.mrf.mxu0
      %568 = vdwg.mxu0
      %v569 = vpack.c.bf16 %v564, %v564
      %570 = vrot.lane.b32.xlu0 %v344, 112
      %v571 = vpop.permute.xlu0 %570
      %572 = vrot.lane.b32.xlu0 %v345, 80
      %v573 = vpop.permute.xlu0 %572
      %v575 = vsel %vm349, %v571, 0
      %v578 = vsel %vm349, %v573, 0
      %580 = vmatprep.subr.bf16.mxu0 0
      %581 = vmatpush1.bf16.xpose.msra.mxu0 0
      %582 = vmatprep.subr.bf16.mxu0 0
      %583 = vmatpush1.bf16.xpose.msra.mxu0 0
      %584 = vmatprep.subr.bf16.mxu0 0
      %585 = vmatpush1.bf16.xpose.msra.mxu0 0
      %586 = vmatprep.subr.bf16.mxu0 0
      %587 = vmatpush1.bf16.xpose.msra.mxu0 0
      %588 = vmatprep.subr.bf16.mxu0 0
      %589 = vmatpush1.bf16.xpose.msra.mxu0 0
      %590 = vmatprep.subr.bf16.mxu0 0
      %591 = vmatpush1.bf16.xpose.msra.mxu0 0
      %592 = vmatprep.subr.bf16.mxu0 0
      %593 = vmatpush1.bf16.xpose.msra.mxu0 0
      %594 = vmatprep.subr.bf16.mxu0 0
      %595 = vmatpush1.bf16.xpose.msra.mxu0 %v578
      %596 = vmatprep.subr.bf16.mxu0 0
      %597 = vmatpush2.bf16.xpose.msra.mxu0 0
      %598 = vmatprep.subr.bf16.mxu0 0
      %599 = vmatpush2.bf16.xpose.msra.mxu0 0
      %600 = vmatprep.subr.bf16.mxu0 0
      %601 = vmatpush2.bf16.xpose.msra.mxu0 0
      %602 = vmatprep.subr.bf16.mxu0 0
      %603 = vmatpush2.bf16.xpose.msra.mxu0 0
      %604 = vmatprep.subr.bf16.mxu0 0
      %605 = vmatpush2.bf16.xpose.msra.mxu0 0
      %606 = vmatprep.subr.bf16.mxu0 0
      %607 = vmatpush2.bf16.xpose.msra.mxu0 0
      %608 = vmatprep.subr.bf16.mxu0 0
      %609 = vmatpush2.bf16.xpose.msra.mxu0 0
      %610 = vmatprep.subr.bf16.mxu0 0
      %611 = vmatpush2.bf16.xpose.msra.mxu0 0
      %612 = vmatprep.mubr.bf16.mxu0 0
      %613 = vmatmul.mubr.bf16.gmra.mxu0 %v575
      %v614 = vpop.f32.mrf.mxu0
      %v615 = vadd.f32 0.0, %v614
      %v616 = vpop.f32.mrf.mxu0
      %v617 = vpop.f32.mrf.mxu0
      %v618 = vpop.f32.mrf.mxu0
      %619 = vdwg.mxu0
      %v620 = vsel %vm349, %v615, -inf
      %621 = vmax.xlane.f32.xlu0 %v620
      %v622 = vpop.xlane.xlu0 %621
      %v623 = vsub.f32 %v615, %v622
      %v624 = vmul.f32 %v623, 1.442695
      %v625 = vpow.pop %v624
      %v626 = vsel %vm349, %v625, 0.0
      %627 = vadd.xlane.f32.xlu0 %v626
      %v628 = vpop.xlane.xlu0 %627
      %v629 = vrcp.pop %v628
      %v630 = vmul.f32 %v625, %v629
      %v631 = vpack.c.bf16 %v630, %v630
      %632 = vrot.lane.b32.xlu0 %v345, 48
      %v633 = vpop.permute.xlu0 %632
      %v635 = vsel %vm349, %v631, 0
      %v638 = vsel %vm413, %v633, 0
      %640 = vmatprep.subr.bf16.mxu0 0
      %641 = vmatpush1.bf16.msra.mxu0 0
      %642 = vmatprep.subr.bf16.mxu0 0
      %643 = vmatpush1.bf16.msra.mxu0 0
      %644 = vmatprep.subr.bf16.mxu0 0
      %645 = vmatpush1.bf16.msra.mxu0 0
      %646 = vmatprep.subr.bf16.mxu0 0
      %647 = vmatpush1.bf16.msra.mxu0 0
      %648 = vmatprep.subr.bf16.mxu0 0
      %649 = vmatpush1.bf16.msra.mxu0 0
      %650 = vmatprep.subr.bf16.mxu0 0
      %651 = vmatpush1.bf16.msra.mxu0 0
      %652 = vmatprep.subr.bf16.mxu0 0
      %653 = vmatpush1.bf16.msra.mxu0 0
      %654 = vmatprep.subr.bf16.mxu0 0
      %655 = vmatpush1.bf16.msra.mxu0 %v638
      %656 = vmatprep.subr.bf16.mxu0 0
      %657 = vmatpush2.bf16.msra.mxu0 0
      %658 = vmatprep.subr.bf16.mxu0 0
      %659 = vmatpush2.bf16.msra.mxu0 0
      %660 = vmatprep.subr.bf16.mxu0 0
      %661 = vmatpush2.bf16.msra.mxu0 0
      %662 = vmatprep.subr.bf16.mxu0 0
      %663 = vmatpush2.bf16.msra.mxu0 0
      %664 = vmatprep.subr.bf16.mxu0 0
      %665 = vmatpush2.bf16.msra.mxu0 0
      %666 = vmatprep.subr.bf16.mxu0 0
      %667 = vmatpush2.bf16.msra.mxu0 0
      %668 = vmatprep.subr.bf16.mxu0 0
      %669 = vmatpush2.bf16.msra.mxu0 0
      %670 = vmatprep.subr.bf16.mxu0 0
      %671 = vmatpush2.bf16.msra.mxu0 0
      %672 = vmatprep.mubr.bf16.mxu0 0
      %673 = vmatmul.mubr.bf16.gmra.mxu0 %v635
      %v674 = vpop.f32.mrf.mxu0
      %v675 = vadd.f32 0.0, %v674
      %v676 = vpop.f32.mrf.mxu0
      %v677 = vpop.f32.mrf.mxu0
      %v678 = vpop.f32.mrf.mxu0
      %679 = vdwg.mxu0
      %v680 = vpack.c.bf16 %v675, %v675
      %681 = vrot.lane.b32.xlu0 %v344, 104
      %v682 = vpop.permute.xlu0 %681
      %683 = vrot.lane.b32.xlu0 %v345, 72
      %v684 = vpop.permute.xlu0 %683
      %v686 = vsel %vm349, %v682, 0
      %v689 = vsel %vm349, %v684, 0
      %691 = vmatprep.subr.bf16.mxu0 0
      %692 = vmatpush1.bf16.xpose.msra.mxu0 0
      %693 = vmatprep.subr.bf16.mxu0 0
      %694 = vmatpush1.bf16.xpose.msra.mxu0 0
      %695 = vmatprep.subr.bf16.mxu0 0
      %696 = vmatpush1.bf16.xpose.msra.mxu0 0
      %697 = vmatprep.subr.bf16.mxu0 0
      %698 = vmatpush1.bf16.xpose.msra.mxu0 0
      %699 = vmatprep.subr.bf16.mxu0 0
      %700 = vmatpush1.bf16.xpose.msra.mxu0 0
      %701 = vmatprep.subr.bf16.mxu0 0
      %702 = vmatpush1.bf16.xpose.msra.mxu0 0
      %703 = vmatprep.subr.bf16.mxu0 0
      %704 = vmatpush1.bf16.xpose.msra.mxu0 0
      %705 = vmatprep.subr.bf16.mxu0 0
      %706 = vmatpush1.bf16.xpose.msra.mxu0 %v689
      %707 = vmatprep.subr.bf16.mxu0 0
      %708 = vmatpush2.bf16.xpose.msra.mxu0 0
      %709 = vmatprep.subr.bf16.mxu0 0
      %710 = vmatpush2.bf16.xpose.msra.mxu0 0
      %711 = vmatprep.subr.bf16.mxu0 0
      %712 = vmatpush2.bf16.xpose.msra.mxu0 0
      %713 = vmatprep.subr.bf16.mxu0 0
      %714 = vmatpush2.bf16.xpose.msra.mxu0 0
      %715 = vmatprep.subr.bf16.mxu0 0
      %716 = vmatpush2.bf16.xpose.msra.mxu0 0
      %717 = vmatprep.subr.bf16.mxu0 0
      %718 = vmatpush2.bf16.xpose.msra.mxu0 0
      %719 = vmatprep.subr.bf16.mxu0 0
      %720 = vmatpush2.bf16.xpose.msra.mxu0 0
      %721 = vmatprep.subr.bf16.mxu0 0
      %722 = vmatpush2.bf16.xpose.msra.mxu0 0
      %723 = vmatprep.mubr.bf16.mxu0 0
      %724 = vmatmul.mubr.bf16.gmra.mxu0 %v686
      %v725 = vpop.f32.mrf.mxu0
      %v726 = vadd.f32 0.0, %v725
      %v727 = vpop.f32.mrf.mxu0
      %v728 = vpop.f32.mrf.mxu0
      %v729 = vpop.f32.mrf.mxu0
      %730 = vdwg.mxu0
      %v731 = vsel %vm349, %v726, -inf
      %732 = vmax.xlane.f32.xlu0 %v731
      %v733 = vpop.xlane.xlu0 %732
      %v734 = vsub.f32 %v726, %v733
      %v735 = vmul.f32 %v734, 1.442695
      %v736 = vpow.pop %v735
      %v737 = vsel %vm349, %v736, 0.0
      %738 = vadd.xlane.f32.xlu0 %v737
      %v739 = vpop.xlane.xlu0 %738
      %v740 = vrcp.pop %v739
      %v741 = vmul.f32 %v736, %v740
      %v742 = vpack.c.bf16 %v741, %v741
      %743 = vrot.lane.b32.xlu0 %v345, 40
      %v744 = vpop.permute.xlu0 %743
      %v746 = vsel %vm349, %v742, 0
      %v749 = vsel %vm413, %v744, 0
      %751 = vmatprep.subr.bf16.mxu0 0
      %752 = vmatpush1.bf16.msra.mxu0 0
      %753 = vmatprep.subr.bf16.mxu0 0
      %754 = vmatpush1.bf16.msra.mxu0 0
      %755 = vmatprep.subr.bf16.mxu0 0
      %756 = vmatpush1.bf16.msra.mxu0 0
      %757 = vmatprep.subr.bf16.mxu0 0
      %758 = vmatpush1.bf16.msra.mxu0 0
      %759 = vmatprep.subr.bf16.mxu0 0
      %760 = vmatpush1.bf16.msra.mxu0 0
      %761 = vmatprep.subr.bf16.mxu0 0
      %762 = vmatpush1.bf16.msra.mxu0 0
      %763 = vmatprep.subr.bf16.mxu0 0
      %764 = vmatpush1.bf16.msra.mxu0 0
      %765 = vmatprep.subr.bf16.mxu0 0
      %766 = vmatpush1.bf16.msra.mxu0 %v749
      %767 = vmatprep.subr.bf16.mxu0 0
      %768 = vmatpush2.bf16.msra.mxu0 0
      %769 = vmatprep.subr.bf16.mxu0 0
      %770 = vmatpush2.bf16.msra.mxu0 0
      %771 = vmatprep.subr.bf16.mxu0 0
      %772 = vmatpush2.bf16.msra.mxu0 0
      %773 = vmatprep.subr.bf16.mxu0 0
      %774 = vmatpush2.bf16.msra.mxu0 0
      %775 = vmatprep.subr.bf16.mxu0 0
      %776 = vmatpush2.bf16.msra.mxu0 0
      %777 = vmatprep.subr.bf16.mxu0 0
      %778 = vmatpush2.bf16.msra.mxu0 0
      %779 = vmatprep.subr.bf16.mxu0 0
      %780 = vmatpush2.bf16.msra.mxu0 0
      %781 = vmatprep.subr.bf16.mxu0 0
      %782 = vmatpush2.bf16.msra.mxu0 0
      %783 = vmatprep.mubr.bf16.mxu0 0
      %784 = vmatmul.mubr.bf16.gmra.mxu0 %v746
      %v785 = vpop.f32.mrf.mxu0
      %v786 = vadd.f32 0.0, %v785
      %v787 = vpop.f32.mrf.mxu0
      %v788 = vpop.f32.mrf.mxu0
      %v789 = vpop.f32.mrf.mxu0
      %790 = vdwg.mxu0
      %v791 = vpack.c.bf16 %v786, %v786
      %793 = vrot.lane.b32.xlu0 %v569, 8
      %v794 = vpop.permute.xlu0 %793
      %796 = vrot.lane.b32.xlu0 %v680, 16
      %v797 = vpop.permute.xlu0 %796
      %799 = vrot.lane.b32.xlu0 %v791, 24
      %v800 = vpop.permute.xlu0 %799
      %v803 = vsel %vm349, %v457, %v794
      %vm804 = vcmask 130048
      %v806 = vsel %vm804, %v803, %v797
      %vm807 = vcmask 195584
      %v809 = vsel %vm807, %v806, %v800
      %v810 = vld [vmem:[%s3] sm:$0xf]
      %v811 = vld [vmem:[%s3 + $0x4] sm:$0xf]
      %v812 = vld [vmem:[%s3 + $0x8] sm:$0xf]
      %v813 = vld [vmem:[%s3 + $0xc] sm:$0xf]
      %v814 = vld [vmem:[%s4] sm:$0x1]
      %v816 = vlaneseq
      %v817 = vshrl.u32 %v816, 7
      %v818 = vsub.s32 0, %v817
      %v819 = vrot.slane %v814, %v818
      %v825 = vunpack.c.l.b16 %v810
      %v826 = vunpack.c.l.b16 %v811
      %v827 = vunpack.c.l.b16 %v812
      %v828 = vunpack.c.l.b16 %v813
      %v829 = vpack.c.b16 %v826, %v825
      %v830 = vpack.c.b16 %v828, %v827
      %v833 = vsel %vm299, %v809, 0
      %835 = vmatprep.subr.bf16.mxu0 0
      %836 = vmatpush1.bf16.msra.mxu0 0
      %837 = vmatprep.subr.bf16.mxu0 0
      %838 = vmatpush1.bf16.msra.mxu0 0
      %839 = vmatprep.subr.bf16.mxu0 0
      %840 = vmatpush1.bf16.msra.mxu0 0
      %841 = vmatprep.subr.bf16.mxu0 0
      %842 = vmatpush1.bf16.msra.mxu0 0
      %843 = vmatprep.subr.bf16.mxu0 0
      %844 = vmatpush1.bf16.msra.mxu0 0
      %845 = vmatprep.subr.bf16.mxu0 0
      %846 = vmatpush1.bf16.msra.mxu0 0
      %847 = vmatprep.subr.bf16.mxu0 0
      %848 = vmatpush1.bf16.msra.mxu0 %v830
      %849 = vmatprep.subr.bf16.mxu0 0
      %850 = vmatpush1.bf16.msra.mxu0 %v829
      %851 = vmatprep.subr.bf16.mxu0 0
      %852 = vmatpush2.bf16.msra.mxu0 0
      %853 = vmatprep.subr.bf16.mxu0 0
      %854 = vmatpush2.bf16.msra.mxu0 0
      %855 = vmatprep.subr.bf16.mxu0 0
      %856 = vmatpush2.bf16.msra.mxu0 0
      %857 = vmatprep.subr.bf16.mxu0 0
      %858 = vmatpush2.bf16.msra.mxu0 0
      %859 = vmatprep.subr.bf16.mxu0 0
      %860 = vmatpush2.bf16.msra.mxu0 0
      %861 = vmatprep.subr.bf16.mxu0 0
      %862 = vmatpush2.bf16.msra.mxu0 0
      %863 = vmatprep.subr.bf16.mxu0 0
      %864 = vmatpush2.bf16.msra.mxu0 0
      %865 = vmatprep.subr.bf16.mxu0 0
      %866 = vmatpush2.bf16.msra.mxu0 0
      %867 = vmatprep.mubr.bf16.mxu0 0
      %868 = vmatmul.mubr.bf16.gmra.mxu0 %v833
      %v869 = vpop.f32.mrf.mxu0
      %v870 = vadd.f32 %v819, %v869
      %v871 = vpop.f32.mrf.mxu0
      %v872 = vpop.f32.mrf.mxu0
      %v873 = vpop.f32.mrf.mxu0
      %874 = vdwg.mxu0
      %v875 = vunpack.c.l.bf16 %v275
      %v876 = vadd.f32 %v875, %v870
      %v877 = vsel %vm299, %v876, 0.0
      %878 = vadd.xlane.f32.xlu0 %v877
      %v879 = vpop.xlane.xlu0 %878
      %v880 = vrcp.pop 32.0
      %v881 = vmul.f32 %v879, %v880
      %v882 = vsub.f32 %v876, %v881
      %v883 = vmul.f32 %v882, %v882
      %v884 = vsel %vm299, %v883, 0.0
      %885 = vadd.xlane.f32.xlu0 %v884
      %v886 = vpop.xlane.xlu0 %885
      %v887 = vmul.f32 %v886, %v880
      %v888 = vadd.f32 %v887, 1e-05
      %v889 = vrsqrt.pop %v888
      %v890 = vmul.f32 %v882, %v889
      %v891 = vld [vmem:[%s5] sm:$0x1]
      %v893 = vlaneseq
      %v894 = vshrl.u32 %v893, 7
      %v895 = vsub.s32 0, %v894
      %v896 = vrot.slane %v891, %v895
      %v898 = vmul.f32 %v890, %v896
      %v899 = vld [vmem:[%s6] sm:$0x1]
      %v901 = vlaneseq
      %v902 = vshrl.u32 %v901, 7
      %v903 = vsub.s32 0, %v902
      %v904 = vrot.slane %v899, %v903
      %v906 = vadd.f32 %v898, %v904
      %v907 = vpack.c.bf16 %v906, %v906
      %vm908 = vcmask 257024
      %909 = vst.msk [vmem:[%s273] sm:$0xf] %vm908, %v907
      %p910 = scmp.lt.s32.totalorder %s18, 1
      %s911 = scalar_select %p910, %s18, 1
      %s912 = smul.addr %s911, 4
      %s913 = scalar_lea.vmem %s7, %s912
      // Predicated region
      $region49: #{transformer_forward.11} parent=47 // pred_check
        %p914 = pneg %p188
      $region50: #{transformer_forward.11} parent=47 // pred_check_branch
        %916 = sbr.rel (%p914) target = $region52
      $region51: #{transformer_forward.11} parent=47 // pred_region
        _
      $region52: #{transformer_forward.11} parent=47 // pred_fallthru
        _
    $region48: #{transformer_forward.11} parent=5 // pred_fallthru
      _
    %p917 = scmp.le.s32.totalorder 2, %s13
    // Predicated region
    $region53: #{transformer_forward.11} parent=5 // pred_check
      %p918 = pneg %p917
    $region54: #{transformer_forward.11} parent=5 // pred_check_branch
      %920 = sbr.rel (%p918) target = $region56
    $region55: #{transformer_forward.11} parent=5 // pred_region
      %s921 = ssub.s32 %s13, 2
      // Predicated region
      $region57: #{transformer_forward.11} parent=55 // pred_check
        %p922 = pneg %p194
      $region58: #{transformer_forward.11} parent=55 // pred_check_branch
        %924 = sbr.rel (%p922) target = $region60
      $region59: #{transformer_forward.11} parent=55 // pred_region
        %p925 = scmp.lt.s32.totalorder %s19, 1
        %s926 = scalar_select %p925, %s19, 1
        %s927 = smul.addr %s926, 4
        %s928 = scalar_lea.vmem %s7, %s927
      $region60: #{transformer_forward.11} parent=55 // pred_fallthru
        _
    $region56: #{transformer_forward.11} parent=5 // pred_fallthru
      _
  $region6: #{transformer_forward.11} parent=0 // loop_footer
    %s17 = sadd.s32 1, %s13
  $region7: #{transformer_forward.11} parent=0 // loop_footer_branch
    %12 = sbr.rel target = $region3
  $region8: #{transformer_forward.11} parent=0 // loop_exit
    _

// kernel: transformer_forward.16
$region0: #{transformer_forward.16}
  #allocation0 [shape = 'u32[]', space=smem, size = 0x4, offset = 0x4, fixed_abs, tag = 'smem constant byte address 0x4 - core index']
  #allocation1 [shape = 'u32[144,128]{1,0:T(1,128)}', space=vmem, size = 0x12000, scoped, tag = 'internal scratch']
  %s0 = inlined_call_operand.vmem [shape: bf16[2,4,32], index: 0, kind: input, shape index: {}]
  %s1 = inlined_call_operand.vmem [shape: bf16[2,8,32], index: 1, kind: input, shape index: {}]
  %s2 = inlined_call_operand.vmem [shape: bf16[32,96], index: 2, kind: input, shape index: {}]
  %s3 = inlined_call_operand.vmem [shape: f32[1,96], index: 3, kind: input, shape index: {}]
  %s4 = inlined_call_operand.vmem [shape: bf16[32,32], index: 4, kind: input, shape index: {}]
  %s5 = inlined_call_operand.vmem [shape: f32[1,32], index: 5, kind: input, shape index: {}]
  %s6 = inlined_call_operand.vmem [shape: f32[1,32], index: 6, kind: input, shape index: {}]
  %s7 = inlined_call_operand.vmem [shape: f32[1,32], index: 7, kind: input, shape index: {}]
  %s8 = inlined_call_operand.vmem [shape: bf16[2,4,32], index: 8, kind: output, shape index: {}]
  %s9 = sld [smem:[#allocation0]]
  $region65: #{transformer_forward.16} parent=0
    _
  %s11 = ssub.s32 1, %s9
  %s12 = scalar_select 0, %s11, %s9
  loop: start=0, step=1, limit=4
  $region2: #{transformer_forward.16} parent=0 // loop_pre_header
    _
  $region3: #{transformer_forward.16} parent=0 // loop_header
    %s14 = sphi 0, %s18
    %p15 = scmp.ge.s32.totalorder %s14, 4
    %s24 = sphi 0, %s26
    %s27 = sphi 0, %s24
    %s28 = sphi 0, %s27
    %s44 = sphi 0, %s28
    %s50 = sphi 0, %s52
    %s53 = sphi 0, %s50
    %s54 = sphi 0, %s53
    %s70 = sphi 0, %s54
    %s74 = sphi 0, %s74
    %s76 = sphi 0, %s74
    %s77 = sphi 0, %s76
    %s91 = sphi 0, %s77
    %s95 = sphi 0, %s95
    %s97 = sphi 0, %s95
    %s98 = sphi 0, %s97
    %s112 = sphi 0, %s98
    %s116 = sphi 0, %s116
    %s118 = sphi 0, %s116
    %s119 = sphi 0, %s118
    %s133 = sphi 0, %s119
    %s137 = sphi 0, %s137
    %s139 = sphi 0, %s137
    %s140 = sphi 0, %s139
    %s154 = sphi 0, %s140
    %s158 = sphi 0, %s158
    %s160 = sphi 0, %s158
    %s161 = sphi 0, %s160
    %s175 = sphi 0, %s161
    %s179 = sphi 0, %s179
    %s181 = sphi 0, %s179
    %s182 = sphi 0, %s181
    %s196 = sphi 0, %s182
    %s202 = sphi 0, %s204
    %s205 = sphi 0, %s202
    %s206 = sphi 0, %s205
    %s222 = sphi 0, %s206
  $region4: #{transformer_forward.16} parent=0 // loop_header_branch
    %17 = sbr.rel (%p15) target = $region8
  $region5: #{transformer_forward.16} parent=0 // loop_body
    %s19 = ssub.s32 %s14, 1
    %s20 = ssub.s32 %s14, 2
    %s21 = sadd.s32 %s14, 1
    %s22 = ssub.s32 %s14, %s21
    %p23 = scmp.eq.s32.totalorder %s22, 0
    %s25 = sadd.s32 %s24, 1
    %s26 = scalar_select %p23, %s24, %s25
    %p29 = pneg %p23
    %p30 = scmp.eq.s32.totalorder %s14, 1
    %p31 = por %p29, %p30
    %p32 = scmp.ne.s32.totalorder %s24, %s27
    %p33 = scmp.eq.s32.totalorder %s14, 0
    %p34 = por %p32, %p33
    %p35 = scmp.ne.s32.totalorder %s24, %s27
    %p36 = scmp.eq.s32.totalorder %s19, 1
    %p37 = por %p35, %p36
    %p38 = scmp.ne.s32.totalorder %s27, %s28
    %p39 = scmp.eq.s32.totalorder %s19, 0
    %p40 = por %p38, %p39
    %p41 = scmp.ne.s32.totalorder %s27, %s28
    %p42 = scmp.eq.s32.totalorder %s20, 1
    %p43 = por %p41, %p42
    %p45 = scmp.ne.s32.totalorder %s28, %s44
    %p46 = scmp.eq.s32.totalorder %s20, 0
    %p47 = por %p45, %p46
    %s48 = ssub.s32 %s14, %s21
    %p49 = scmp.eq.s32.totalorder %s48, 0
    %s51 = sadd.s32 %s50, 1
    %s52 = scalar_select %p49, %s50, %s51
    %p55 = pneg %p49
    %p56 = scmp.eq.s32.totalorder %s14, 1
    %p57 = por %p55, %p56
    %p58 = scmp.ne.s32.totalorder %s50, %s53
    %p59 = scmp.eq.s32.totalorder %s14, 0
    %p60 = por %p58, %p59
    %p61 = scmp.ne.s32.totalorder %s50, %s53
    %p62 = scmp.eq.s32.totalorder %s19, 1
    %p63 = por %p61, %p62
    %p64 = scmp.ne.s32.totalorder %s53, %s54
    %p65 = scmp.eq.s32.totalorder %s19, 0
    %p66 = por %p64, %p65
    %p67 = scmp.ne.s32.totalorder %s53, %s54
    %p68 = scmp.eq.s32.totalorder %s20, 1
    %p69 = por %p67, %p68
    %p71 = scmp.ne.s32.totalorder %s54, %s70
    %p72 = scmp.eq.s32.totalorder %s20, 0
    %p73 = por %p71, %p72
    %s75 = sadd.s32 %s74, 1
    %p78 = scmp.eq.s32.totalorder %s14, 1
    %p79 = scmp.ne.s32.totalorder %s74, %s76
    %p80 = scmp.eq.s32.totalorder %s14, 0
    %p81 = por %p79, %p80
    %p82 = scmp.ne.s32.totalorder %s74, %s76
    %p83 = scmp.eq.s32.totalorder %s19, 1
    %p84 = por %p82, %p83
    %p85 = scmp.ne.s32.totalorder %s76, %s77
    %p86 = scmp.eq.s32.totalorder %s19, 0
    %p87 = por %p85, %p86
    %p88 = scmp.ne.s32.totalorder %s76, %s77
    %p89 = scmp.eq.s32.totalorder %s20, 1
    %p90 = por %p88, %p89
    %p92 = scmp.ne.s32.totalorder %s77, %s91
    %p93 = scmp.eq.s32.totalorder %s20, 0
    %p94 = por %p92, %p93
    %s96 = sadd.s32 %s95, 1
    %p99 = scmp.eq.s32.totalorder %s14, 1
    %p100 = scmp.ne.s32.totalorder %s95, %s97
    %p101 = scmp.eq.s32.totalorder %s14, 0
    %p102 = por %p100, %p101
    %p103 = scmp.ne.s32.totalorder %s95, %s97
    %p104 = scmp.eq.s32.totalorder %s19, 1
    %p105 = por %p103, %p104
    %p106 = scmp.ne.s32.totalorder %s97, %s98
    %p107 = scmp.eq.s32.totalorder %s19, 0
    %p108 = por %p106, %p107
    %p109 = scmp.ne.s32.totalorder %s97, %s98
    %p110 = scmp.eq.s32.totalorder %s20, 1
    %p111 = por %p109, %p110
    %p113 = scmp.ne.s32.totalorder %s98, %s112
    %p114 = scmp.eq.s32.totalorder %s20, 0
    %p115 = por %p113, %p114
    %s117 = sadd.s32 %s116, 1
    %p120 = scmp.eq.s32.totalorder %s14, 1
    %p121 = scmp.ne.s32.totalorder %s116, %s118
    %p122 = scmp.eq.s32.totalorder %s14, 0
    %p123 = por %p121, %p122
    %p124 = scmp.ne.s32.totalorder %s116, %s118
    %p125 = scmp.eq.s32.totalorder %s19, 1
    %p126 = por %p124, %p125
    %p127 = scmp.ne.s32.totalorder %s118, %s119
    %p128 = scmp.eq.s32.totalorder %s19, 0
    %p129 = por %p127, %p128
    %p130 = scmp.ne.s32.totalorder %s118, %s119
    %p131 = scmp.eq.s32.totalorder %s20, 1
    %p132 = por %p130, %p131
    %p134 = scmp.ne.s32.totalorder %s119, %s133
    %p135 = scmp.eq.s32.totalorder %s20, 0
    %p136 = por %p134, %p135
    %s138 = sadd.s32 %s137, 1
    %p141 = scmp.eq.s32.totalorder %s14, 1
    %p142 = scmp.ne.s32.totalorder %s137, %s139
    %p143 = scmp.eq.s32.totalorder %s14, 0
    %p144 = por %p142, %p143
    %p145 = scmp.ne.s32.totalorder %s137, %s139
    %p146 = scmp.eq.s32.totalorder %s19, 1
    %p147 = por %p145, %p146
    %p148 = scmp.ne.s32.totalorder %s139, %s140
    %p149 = scmp.eq.s32.totalorder %s19, 0
    %p150 = por %p148, %p149
    %p151 = scmp.ne.s32.totalorder %s139, %s140
    %p152 = scmp.eq.s32.totalorder %s20, 1
    %p153 = por %p151, %p152
    %p155 = scmp.ne.s32.totalorder %s140, %s154
    %p156 = scmp.eq.s32.totalorder %s20, 0
    %p157 = por %p155, %p156
    %s159 = sadd.s32 %s158, 1
    %p162 = scmp.eq.s32.totalorder %s14, 1
    %p163 = scmp.ne.s32.totalorder %s158, %s160
    %p164 = scmp.eq.s32.totalorder %s14, 0
    %p165 = por %p163, %p164
    %p166 = scmp.ne.s32.totalorder %s158, %s160
    %p167 = scmp.eq.s32.totalorder %s19, 1
    %p168 = por %p166, %p167
    %p169 = scmp.ne.s32.totalorder %s160, %s161
    %p170 = scmp.eq.s32.totalorder %s19, 0
    %p171 = por %p169, %p170
    %p172 = scmp.ne.s32.totalorder %s160, %s161
    %p173 = scmp.eq.s32.totalorder %s20, 1
    %p174 = por %p172, %p173
    %p176 = scmp.ne.s32.totalorder %s161, %s175
    %p177 = scmp.eq.s32.totalorder %s20, 0
    %p178 = por %p176, %p177
    %s180 = sadd.s32 %s179, 1
    %p183 = scmp.eq.s32.totalorder %s14, 1
    %p184 = scmp.ne.s32.totalorder %s179, %s181
    %p185 = scmp.eq.s32.totalorder %s14, 0
    %p186 = por %p184, %p185
    %p187 = scmp.ne.s32.totalorder %s179, %s181
    %p188 = scmp.eq.s32.totalorder %s19, 1
    %p189 = por %p187, %p188
    %p190 = scmp.ne.s32.totalorder %s181, %s182
    %p191 = scmp.eq.s32.totalorder %s19, 0
    %p192 = por %p190, %p191
    %p193 = scmp.ne.s32.totalorder %s181, %s182
    %p194 = scmp.eq.s32.totalorder %s20, 1
    %p195 = por %p193, %p194
    %p197 = scmp.ne.s32.totalorder %s182, %s196
    %p198 = scmp.eq.s32.totalorder %s20, 0
    %p199 = por %p197, %p198
    %s200 = ssub.s32 %s14, %s21
    %p201 = scmp.eq.s32.totalorder %s200, 0
    %s203 = sadd.s32 %s202, 1
    %s204 = scalar_select %p201, %s202, %s203
    %p207 = pneg %p201
    %p208 = scmp.eq.s32.totalorder %s14, 1
    %p209 = por %p207, %p208
    %p210 = scmp.ne.s32.totalorder %s202, %s205
    %p211 = scmp.eq.s32.totalorder %s14, 0
    %p212 = por %p210, %p211
    %p213 = scmp.ne.s32.totalorder %s202, %s205
    %p214 = scmp.eq.s32.totalorder %s19, 1
    %p215 = por %p213, %p214
    %p216 = scmp.ne.s32.totalorder %s205, %s206
    %p217 = scmp.eq.s32.totalorder %s19, 0
    %p218 = por %p216, %p217
    %p219 = scmp.ne.s32.totalorder %s205, %s206
    %p220 = scmp.eq.s32.totalorder %s20, 1
    %p221 = por %p219, %p220
    %p223 = scmp.ne.s32.totalorder %s206, %s222
    %p224 = scmp.eq.s32.totalorder %s20, 0
    %p225 = por %p223, %p224
    %p226 = scmp.le.s32.totalorder 1, %s14
    %p227 = scmp.lt.s32.totalorder %s14, 3
    %p228 = pnand %p226, %p227
    %p229 = pneg %p228
    // Predicated region
    $region9: #{transformer_forward.16} parent=5 // pred_check
      _
    $region10: #{transformer_forward.16} parent=5 // pred_check_branch
      %231 = sbr.rel (%p228) target = $region12
    $region11: #{transformer_forward.16} parent=5 // pred_region
      %s232 = ssub.s32 %s14, 1
      // Predicated region
      $region13: #{transformer_forward.16} parent=11 // pred_check
        %p233 = pneg %p87
      $region14: #{transformer_forward.16} parent=11 // pred_check_branch
        %235 = sbr.rel (%p233) target = $region16
      $region15: #{transformer_forward.16} parent=11 // pred_region
        _
      $region16: #{transformer_forward.16} parent=11 // pred_fallthru
        _
      // Predicated region
      $region17: #{transformer_forward.16} parent=11 // pred_check
        %p236 = pneg %p108
      $region18: #{transformer_forward.16} parent=11 // pred_check_branch
        %238 = sbr.rel (%p236) target = $region20
      $region19: #{transformer_forward.16} parent=11 // pred_region
        _
      $region20: #{transformer_forward.16} parent=11 // pred_fallthru
        _
      // Predicated region
      $region21: #{transformer_forward.16} parent=11 // pred_check
        %p239 = pneg %p129
      $region22: #{transformer_forward.16} parent=11 // pred_check_branch
        %241 = sbr.rel (%p239) target = $region24
      $region23: #{transformer_forward.16} parent=11 // pred_region
        _
      $region24: #{transformer_forward.16} parent=11 // pred_fallthru
        _
      // Predicated region
      $region25: #{transformer_forward.16} parent=11 // pred_check
        %p242 = pneg %p150
      $region26: #{transformer_forward.16} parent=11 // pred_check_branch
        %244 = sbr.rel (%p242) target = $region28
      $region27: #{transformer_forward.16} parent=11 // pred_region
        _
      $region28: #{transformer_forward.16} parent=11 // pred_fallthru
        _
      // Predicated region
      $region29: #{transformer_forward.16} parent=11 // pred_check
        %p245 = pneg %p171
      $region30: #{transformer_forward.16} parent=11 // pred_check_branch
        %247 = sbr.rel (%p245) target = $region32
      $region31: #{transformer_forward.16} parent=11 // pred_region
        _
      $region32: #{transformer_forward.16} parent=11 // pred_fallthru
        _
      // Predicated region
      $region33: #{transformer_forward.16} parent=11 // pred_check
        %p248 = pneg %p192
      $region34: #{transformer_forward.16} parent=11 // pred_check_branch
        %250 = sbr.rel (%p248) target = $region36
      $region35: #{transformer_forward.16} parent=11 // pred_region
        _
      $region36: #{transformer_forward.16} parent=11 // pred_fallthru
        _
    $region12: #{transformer_forward.16} parent=5 // pred_fallthru
      _
    %p251 = scmp.lt.s32.totalorder %s14, 2
    // Predicated region
    $region37: #{transformer_forward.16} parent=5 // pred_check
      %p252 = pneg %p251
    $region38: #{transformer_forward.16} parent=5 // pred_check_branch
      %254 = sbr.rel (%p252) target = $region40
    $region39: #{transformer_forward.16} parent=5 // pred_region
      // Predicated region
      $region41: #{transformer_forward.16} parent=39 // pred_check
        %p255 = pneg %p34
      $region42: #{transformer_forward.16} parent=39 // pred_check_branch
        %257 = sbr.rel (%p255) target = $region44
      $region43: #{transformer_forward.16} parent=39 // pred_region
        %p258 = scmp.lt.s32.totalorder %s14, 1
        %s259 = scalar_select %p258, %s14, 1
        %s260 = smul.addr %s259, 2
        %s261 = scalar_lea.vmem %s0, %s260
      $region44: #{transformer_forward.16} parent=39 // pred_fallthru
        _
      // Predicated region
      $region45: #{transformer_forward.16} parent=39 // pred_check
        %p262 = pneg %p60
      $region46: #{transformer_forward.16} parent=39 // pred_check_branch
        %264 = sbr.rel (%p262) target = $region48
      $region47: #{transformer_forward.16} parent=39 // pred_region
        %p265 = scmp.lt.s32.totalorder %s14, 1
        %s266 = scalar_select %p265, %s14, 1
        %s267 = smul.addr %s266, 4
        %s268 = scalar_lea.vmem %s1, %s267
      $region48: #{transformer_forward.16} parent=39 // pred_fallthru
        _
    $region40: #{transformer_forward.16} parent=5 // pred_fallthru
      _
    %p269 = scmp.le.s32.totalorder 1, %s14
    %p270 = scmp.lt.s32.totalorder %s14, 3
    %p271 = pnand %p269, %p270
    %p272 = pneg %p271
    // Predicated region
    $region49: #{transformer_forward.16} parent=5 // pred_check
      _
    $region50: #{transformer_forward.16} parent=5 // pred_check_branch
      %274 = sbr.rel (%p271) target = $region52
    $region51: #{transformer_forward.16} parent=5 // pred_region
      %s275 = ssub.s32 %s14, 1
      %p276 = scmp.lt.s32.totalorder %s19, 1
      %s277 = scalar_select %p276, %s19, 1
      %s278 = smul.addr %s277, 2
      %s279 = scalar_lea.vmem %s0, %s278
      %p280 = pneg %p40
      %p281 = pneg %p37
      %p282 = scmp.lt.s32.totalorder %s19, 1
      %s283 = scalar_select %p282, %s19, 1
      %s284 = smul.addr %s283, 4
      %s285 = scalar_lea.vmem %s1, %s284
      %p286 = pneg %p66
      %p287 = pneg %p63
      %p288 = pneg %p87
      %p289 = pneg %p84
      %p290 = pneg %p108
      %p291 = pneg %p105
      %p292 = pneg %p129
      %p293 = pneg %p126
      %p294 = pneg %p150
      %p295 = pneg %p147
      %p296 = pneg %p171
      %p297 = pneg %p168
      %p298 = pneg %p192
      %p299 = pneg %p189
      %p300 = pneg %p218
      %p301 = pneg %p215
      %p302 = scmp.lt.s32.totalorder %s19, 1
      %s303 = scalar_select %p302, %s19, 1
      %s304 = smul.addr %s303, 2
      %s305 = scalar_lea.vmem %s8, %s304
      %p306 = scmp.lt.s32.totalorder %s19, 1
      %s307 = scalar_select %p306, %s19, 1
      %s308 = smul.addr %s307, 2
      %s309 = scalar_lea.vmem %s0, %s308
      %p310 = scmp.lt.s32.totalorder %s19, 1
      %s311 = scalar_select %p310, %s19, 1
      %s312 = smul.addr %s311, 4
      %s313 = scalar_lea.vmem %s1, %s312
      %p314 = scmp.lt.s32.totalorder %s19, 1
      %s315 = scalar_select %p314, %s19, 1
      %s316 = smul.addr %s315, 2
      %s317 = scalar_lea.vmem %s8, %s316
      %v319 = vld [vmem:[%s309] sm:$0x3]
      %v320 = vld [vmem:[%s2] sm:$0xf]
      %v321 = vld [vmem:[%s2 + $0x4] sm:$0xf]
      %v322 = vld [vmem:[%s2 + $0x8] sm:$0xf]
      %v323 = vld [vmem:[%s2 + $0xc] sm:$0xf]
      %v324 = vld [vmem:[%s3] sm:$0x1]
      %v326 = vlaneseq
      %v327 = vshrl.u32 %v326, 7
      %v328 = vsub.s32 0, %v327
      %v329 = vrot.slane %v324, %v328
      %v335 = vunpack.c.l.b16 %v320
      %v336 = vunpack.c.l.b16 %v321
      %v337 = vunpack.c.l.b16 %v322
      %v338 = vunpack.c.l.b16 %v323
      %v339 = vpack.c.b16 %v336, %v335
      %v340 = vpack.c.b16 %v338, %v337
      %vm343 = vcmask 261120
      %v345 = vsel %vm343, %v319, 0
      %347 = vmatprep.subr.bf16.mxu0 0
      %348 = vmatpush1.bf16.msra.mxu0 0
      %349 = vmatprep.subr.bf16.mxu0 0
      %350 = vmatpush1.bf16.msra.mxu0 0
      %351 = vmatprep.subr.bf16.mxu0 0
      %352 = vmatpush1.bf16.msra.mxu0 0
      %353 = vmatprep.subr.bf16.mxu0 0
      %354 = vmatpush1.bf16.msra.mxu0 0
      %355 = vmatprep.subr.bf16.mxu0 0
      %356 = vmatpush1.bf16.msra.mxu0 0
      %357 = vmatprep.subr.bf16.mxu0 0
      %358 = vmatpush1.bf16.msra.mxu0 0
      %359 = vmatprep.subr.bf16.mxu0 0
      %360 = vmatpush1.bf16.msra.mxu0 %v340
      %361 = vmatprep.subr.bf16.mxu0 0
      %362 = vmatpush1.bf16.msra.mxu0 %v339
      %363 = vmatprep.subr.bf16.mxu0 0
      %364 = vmatpush2.bf16.msra.mxu0 0
      %365 = vmatprep.subr.bf16.mxu0 0
      %366 = vmatpush2.bf16.msra.mxu0 0
      %367 = vmatprep.subr.bf16.mxu0 0
      %368 = vmatpush2.bf16.msra.mxu0 0
      %369 = vmatprep.subr.bf16.mxu0 0
      %370 = vmatpush2.bf16.msra.mxu0 0
      %371 = vmatprep.subr.bf16.mxu0 0
      %372 = vmatpush2.bf16.msra.mxu0 0
      %373 = vmatprep.subr.bf16.mxu0 0
      %374 = vmatpush2.bf16.msra.mxu0 0
      %375 = vmatprep.subr.bf16.mxu0 0
      %376 = vmatpush2.bf16.msra.mxu0 0
      %377 = vmatprep.subr.bf16.mxu0 0
      %378 = vmatpush2.bf16.msra.mxu0 0
      %379 = vmatprep.mubr.bf16.mxu0 0
      %380 = vmatmul.mubr.bf16.gmra.mxu0 %v345
      %v381 = vpop.f32.mrf.mxu0
      %v382 = vadd.f32 %v329, %v381
      %v383 = vpop.f32.mrf.mxu0
      %v384 = vpop.f32.mrf.mxu0
      %v385 = vpop.f32.mrf.mxu0
      %386 = vdwg.mxu0
      %v387 = vld [vmem:[%s313] sm:$0xf]
      %388 = vrot.lane.b32.xlu0 %v339, 96
      %v389 = vpop.permute.xlu0 %388
      %390 = vrot.lane.b32.xlu0 %v340, 96
      %v391 = vpop.permute.xlu0 %390
      %394 = vrot.lane.b32.xlu0 %v329, 96
      %v395 = vpop.permute.xlu0 %394
      %v398 = vsel %vm343, %v387, 0
      %400 = vmatprep.subr.bf16.mxu0 0
      %401 = vmatpush1.bf16.msra.mxu0 0
      %402 = vmatprep.subr.bf16.mxu0 0
      %403 = vmatpush1.bf16.msra.mxu0 0
      %404 = vmatprep.subr.bf16.mxu0 0
      %405 = vmatpush1.bf16.msra.mxu0 0
      %406 = vmatprep.subr.bf16.mxu0 0
      %407 = vmatpush1.bf16.msra.mxu0 0
      %408 = vmatprep.subr.bf16.mxu0 0
      %409 = vmatpush1.bf16.msra.mxu0 0
      %410 = vmatprep.subr.bf16.mxu0 0
      %411 = vmatpush1.bf16.msra.mxu0 0
      %412 = vmatprep.subr.bf16.mxu0 0
      %413 = vmatpush1.bf16.msra.mxu0 %v391
      %414 = vmatprep.subr.bf16.mxu0 0
      %415 = vmatpush1.bf16.msra.mxu0 %v389
      %416 = vmatprep.subr.bf16.mxu0 0
      %417 = vmatpush2.bf16.msra.mxu0 0
      %418 = vmatprep.subr.bf16.mxu0 0
      %419 = vmatpush2.bf16.msra.mxu0 0
      %420 = vmatprep.subr.bf16.mxu0 0
      %421 = vmatpush2.bf16.msra.mxu0 0
      %422 = vmatprep.subr.bf16.mxu0 0
      %423 = vmatpush2.bf16.msra.mxu0 0
      %424 = vmatprep.subr.bf16.mxu0 0
      %425 = vmatpush2.bf16.msra.mxu0 0
      %426 = vmatprep.subr.bf16.mxu0 0
      %427 = vmatpush2.bf16.msra.mxu0 0
      %428 = vmatprep.subr.bf16.mxu0 0
      %429 = vmatpush2.bf16.msra.mxu0 0
      %430 = vmatprep.subr.bf16.mxu0 0
      %431 = vmatpush2.bf16.msra.mxu0 0
      %432 = vmatprep.mubr.bf16.mxu0 0
      %433 = vmatmul.mubr.bf16.gmra.mxu0 %v398
      %v434 = vpop.f32.mrf.mxu0
      %v435 = vadd.f32 %v395, %v434
      %v436 = vpop.f32.mrf.mxu0
      %v437 = vpop.f32.mrf.mxu0
      %v438 = vpop.f32.mrf.mxu0
      %439 = vdwg.mxu0
      %v440 = vmul.f32 %v382, 0.35355338
      %v441 = vpack.c.bf16 %v440, %v440
      %v442 = vpack.c.bf16 %v435, %v435
      %vm443 = vcmask 64512
      %v445 = vsel %vm443, %v441, 0
      %v448 = vsel %vm443, %v442, 0
      %450 = vmatprep.subr.bf16.mxu0 0
      %451 = vmatpush1.bf16.xpose.msra.mxu0 0
      %452 = vmatprep.subr.bf16.mxu0 0
      %453 = vmatpush1.bf16.xpose.msra.mxu0 0
      %454 = vmatprep.subr.bf16.mxu0 0
      %455 = vmatpush1.bf16.xpose.msra.mxu0 0
      %456 = vmatprep.subr.bf16.mxu0 0
      %457 = vmatpush1.bf16.xpose.msra.mxu0 0
      %458 = vmatprep.subr.bf16.mxu0 0
      %459 = vmatpush1.bf16.xpose.msra.mxu0 0
      %460 = vmatprep.subr.bf16.mxu0 0
      %461 = vmatpush1.bf16.xpose.msra.mxu0 0
      %462 = vmatprep.subr.bf16.mxu0 0
      %463 = vmatpush1.bf16.xpose.msra.mxu0 0
      %464 = vmatprep.subr.bf16.mxu0 0
      %465 = vmatpush1.bf16.xpose.msra.mxu0 %v448
      %466 = vmatprep.subr.bf16.mxu0 0
      %467 = vmatpush2.bf16.xpose.msra.mxu0 0
      %468 = vmatprep.subr.bf16.mxu0 0
      %469 = vmatpush2.bf16.xpose.msra.mxu0 0
      %470 = vmatprep.subr.bf16.mxu0 0
      %471 = vmatpush2.bf16.xpose.msra.mxu0 0
      %472 = vmatprep.subr.bf16.mxu0 0
      %473 = vmatpush2.bf16.xpose.msra.mxu0 0
      %474 = vmatprep.subr.bf16.mxu0 0
      %475 = vmatpush2.bf16.xpose.msra.mxu0 0
      %476 = vmatprep.subr.bf16.mxu0 0
      %477 = vmatpush2.bf16.xpose.msra.mxu0 0
      %478 = vmatprep.subr.bf16.mxu0 0
      %479 = vmatpush2.bf16.xpose.msra.mxu0 0
      %480 = vmatprep.subr.bf16.mxu0 0
      %481 = vmatpush2.bf16.xpose.msra.mxu0 0
      %482 = vmatprep.mubr.bf16.mxu0 0
      %483 = vmatmul.mubr.bf16.gmra.mxu0 %v445
      %v484 = vpop.f32.mrf.mxu0
      %v485 = vadd.f32 0.0, %v484
      %v486 = vpop.f32.mrf.mxu0
      %v487 = vpop.f32.mrf.mxu0
      %v488 = vpop.f32.mrf.mxu0
      %489 = vdwg.mxu0
      %vm490 = vcmask 60416
      %v491 = vsel %vm490, %v485, -inf
      %492 = vmax.xlane.f32.xlu0 %v491
      %v493 = vpop.xlane.xlu0 %492
      %v494 = vsub.f32 %v485, %v493
      %v495 = vmul.f32 %v494, 1.442695
      %v496 = vpow.pop %v495
      %v497 = vsel %vm490, %v496, 0.0
      %498 = vadd.xlane.f32.xlu0 %v497
      %v499 = vpop.xlane.xlu0 %498
      %v500 = vrcp.pop %v499
      %v501 = vmul.f32 %v496, %v500
      %v502 = vpack.c.bf16 %v501, %v501
      %504 = vrot.lane.b32.xlu0 %v442, 96
      %v505 = vpop.permute.xlu0 %504
      %v507 = vsel %vm443, %v502, 0
      %vm509 = vcmask 1043456
      %v511 = vsel %vm509, %v505, 0
      %513 = vmatprep.subr.bf16.mxu0 0
      %514 = vmatpush1.bf16.msra.mxu0 0
      %515 = vmatprep.subr.bf16.mxu0 0
      %516 = vmatpush1.bf16.msra.mxu0 0
      %517 = vmatprep.subr.bf16.mxu0 0
      %518 = vmatpush1.bf16.msra.mxu0 0
      %519 = vmatprep.subr.bf16.mxu0 0
      %520 = vmatpush1.bf16.msra.mxu0 0
      %521 = vmatprep.subr.bf16.mxu0 0
      %522 = vmatpush1.bf16.msra.mxu0 0
      %523 = vmatprep.subr.bf16.mxu0 0
      %524 = vmatpush1.bf16.msra.mxu0 0
      %525 = vmatprep.subr.bf16.mxu0 0
      %526 = vmatpush1.bf16.msra.mxu0 0
      %527 = vmatprep.subr.bf16.mxu0 0
      %528 = vmatpush1.bf16.msra.mxu0 %v511
      %529 = vmatprep.subr.bf16.mxu0 0
      %530 = vmatpush2.bf16.msra.mxu0 0
      %531 = vmatprep.subr.bf16.mxu0 0
      %532 = vmatpush2.bf16.msra.mxu0 0
      %533 = vmatprep.subr.bf16.mxu0 0
      %534 = vmatpush2.bf16.msra.mxu0 0
      %535 = vmatprep.subr.bf16.mxu0 0
      %536 = vmatpush2.bf16.msra.mxu0 0
      %537 = vmatprep.subr.bf16.mxu0 0
      %538 = vmatpush2.bf16.msra.mxu0 0
      %539 = vmatprep.subr.bf16.mxu0 0
      %540 = vmatpush2.bf16.msra.mxu0 0
      %541 = vmatprep.subr.bf16.mxu0 0
      %542 = vmatpush2.bf16.msra.mxu0 0
      %543 = vmatprep.subr.bf16.mxu0 0
      %544 = vmatpush2.bf16.msra.mxu0 0
      %545 = vmatprep.mubr.bf16.mxu0 0
      %546 = vmatmul.mubr.bf16.gmra.mxu0 %v507
      %v547 = vpop.f32.mrf.mxu0
      %v548 = vadd.f32 0.0, %v547
      %v549 = vpop.f32.mrf.mxu0
      %v550 = vpop.f32.mrf.mxu0
      %v551 = vpop.f32.mrf.mxu0
      %552 = vdwg.mxu0
      %v553 = vpack.c.bf16 %v548, %v548
      %555 = vrot.lane.b32.xlu0 %v441, 120
      %v556 = vpop.permute.xlu0 %555
      %557 = vrot.lane.b32.xlu0 %v442, 120
      %v558 = vpop.permute.xlu0 %557
      %v560 = vsel %vm443, %v556, 0
      %v563 = vsel %vm443, %v558, 0
      %565 = vmatprep.subr.bf16.mxu0 0
      %566 = vmatpush1.bf16.xpose.msra.mxu0 0
      %567 = vmatprep.subr.bf16.mxu0 0
      %568 = vmatpush1.bf16.xpose.msra.mxu0 0
      %569 = vmatprep.subr.bf16.mxu0 0
      %570 = vmatpush1.bf16.xpose.msra.mxu0 0
      %571 = vmatprep.subr.bf16.mxu0 0
      %572 = vmatpush1.bf16.xpose.msra.mxu0 0
      %573 = vmatprep.subr.bf16.mxu0 0
      %574 = vmatpush1.bf16.xpose.msra.mxu0 0
      %575 = vmatprep.subr.bf16.mxu0 0
      %576 = vmatpush1.bf16.xpose.msra.mxu0 0
      %577 = vmatprep.subr.bf16.mxu0 0
      %578 = vmatpush1.bf16.xpose.msra.mxu0 0
      %579 = vmatprep.subr.bf16.mxu0 0
      %580 = vmatpush1.bf16.xpose.msra.mxu0 %v563
      %581 = vmatprep.subr.bf16.mxu0 0
      %582 = vmatpush2.bf16.xpose.msra.mxu0 0
      %583 = vmatprep.subr.bf16.mxu0 0
      %584 = vmatpush2.bf16.xpose.msra.mxu0 0
      %585 = vmatprep.subr.bf16.mxu0 0
      %586 = vmatpush2.bf16.xpose.msra.mxu0 0
      %587 = vmatprep.subr.bf16.mxu0 0
      %588 = vmatpush2.bf16.xpose.msra.mxu0 0
      %589 = vmatprep.subr.bf16.mxu0 0
      %590 = vmatpush2.bf16.xpose.msra.mxu0 0
      %591 = vmatprep.subr.bf16.mxu0 0
      %592 = vmatpush2.bf16.xpose.msra.mxu0 0
      %593 = vmatprep.subr.bf16.mxu0 0
      %594 = vmatpush2.bf16.xpose.msra.mxu0 0
      %595 = vmatprep.subr.bf16.mxu0 0
      %596 = vmatpush2.bf16.xpose.msra.mxu0 0
      %597 = vmatprep.mubr.bf16.mxu0 0
      %598 = vmatmul.mubr.bf16.gmra.mxu0 %v560
      %v599 = vpop.f32.mrf.mxu0
      %v600 = vadd.f32 0.0, %v599
      %v601 = vpop.f32.mrf.mxu0
      %v602 = vpop.f32.mrf.mxu0
      %v603 = vpop.f32.mrf.mxu0
      %604 = vdwg.mxu0
      %v605 = vsel %vm490, %v600, -inf
      %606 = vmax.xlane.f32.xlu0 %v605
      %v607 = vpop.xlane.xlu0 %606
      %v608 = vsub.f32 %v600, %v607
      %v609 = vmul.f32 %v608, 1.442695
      %v610 = vpow.pop %v609
      %v611 = vsel %vm490, %v610, 0.0
      %612 = vadd.xlane.f32.xlu0 %v611
      %v613 = vpop.xlane.xlu0 %612
      %v614 = vrcp.pop %v613
      %v615 = vmul.f32 %v610, %v614
      %v616 = vpack.c.bf16 %v615, %v615
      %617 = vrot.lane.b32.xlu0 %v442, 88
      %v618 = vpop.permute.xlu0 %617
      %v620 = vsel %vm443, %v616, 0
      %v623 = vsel %vm509, %v618, 0
      %625 = vmatprep.subr.bf16.mxu0 0
      %626 = vmatpush1.bf16.msra.mxu0 0
      %627 = vmatprep.subr.bf16.mxu0 0
      %628 = vmatpush1.bf16.msra.mxu0 0
      %629 = vmatprep.subr.bf16.mxu0 0
      %630 = vmatpush1.bf16.msra.mxu0 0
      %631 = vmatprep.subr.bf16.mxu0 0
      %632 = vmatpush1.bf16.msra.mxu0 0
      %633 = vmatprep.subr.bf16.mxu0 0
      %634 = vmatpush1.bf16.msra.mxu0 0
      %635 = vmatprep.subr.bf16.mxu0 0
      %636 = vmatpush1.bf16.msra.mxu0 0
      %637 = vmatprep.subr.bf16.mxu0 0
      %638 = vmatpush1.bf16.msra.mxu0 0
      %639 = vmatprep.subr.bf16.mxu0 0
      %640 = vmatpush1.bf16.msra.mxu0 %v623
      %641 = vmatprep.subr.bf16.mxu0 0
      %642 = vmatpush2.bf16.msra.mxu0 0
      %643 = vmatprep.subr.bf16.mxu0 0
      %644 = vmatpush2.bf16.msra.mxu0 0
      %645 = vmatprep.subr.bf16.mxu0 0
      %646 = vmatpush2.bf16.msra.mxu0 0
      %647 = vmatprep.subr.bf16.mxu0 0
      %648 = vmatpush2.bf16.msra.mxu0 0
      %649 = vmatprep.subr.bf16.mxu0 0
      %650 = vmatpush2.bf16.msra.mxu0 0
      %651 = vmatprep.subr.bf16.mxu0 0
      %652 = vmatpush2.bf16.msra.mxu0 0
      %653 = vmatprep.subr.bf16.mxu0 0
      %654 = vmatpush2.bf16.msra.mxu0 0
      %655 = vmatprep.subr.bf16.mxu0 0
      %656 = vmatpush2.bf16.msra.mxu0 0
      %657 = vmatprep.mubr.bf16.mxu0 0
      %658 = vmatmul.mubr.bf16.gmra.mxu0 %v620
      %v659 = vpop.f32.mrf.mxu0
      %v660 = vadd.f32 0.0, %v659
      %v661 = vpop.f32.mrf.mxu0
      %v662 = vpop.f32.mrf.mxu0
      %v663 = vpop.f32.mrf.mxu0
      %664 = vdwg.mxu0
      %v665 = vpack.c.bf16 %v660, %v660
      %666 = vrot.lane.b32.xlu0 %v441, 112
      %v667 = vpop.permute.xlu0 %666
      %668 = vrot.lane.b32.xlu0 %v442, 112
      %v669 = vpop.permute.xlu0 %668
      %v671 = vsel %vm443, %v667, 0
      %v674 = vsel %vm443, %v669, 0
      %676 = vmatprep.subr.bf16.mxu0 0
      %677 = vmatpush1.bf16.xpose.msra.mxu0 0
      %678 = vmatprep.subr.bf16.mxu0 0
      %679 = vmatpush1.bf16.xpose.msra.mxu0 0
      %680 = vmatprep.subr.bf16.mxu0 0
      %681 = vmatpush1.bf16.xpose.msra.mxu0 0
      %682 = vmatprep.subr.bf16.mxu0 0
      %683 = vmatpush1.bf16.xpose.msra.mxu0 0
      %684 = vmatprep.subr.bf16.mxu0 0
      %685 = vmatpush1.bf16.xpose.msra.mxu0 0
      %686 = vmatprep.subr.bf16.mxu0 0
      %687 = vmatpush1.bf16.xpose.msra.mxu0 0
      %688 = vmatprep.subr.bf16.mxu0 0
      %689 = vmatpush1.bf16.xpose.msra.mxu0 0
      %690 = vmatprep.subr.bf16.mxu0 0
      %691 = vmatpush1.bf16.xpose.msra.mxu0 %v674
      %692 = vmatprep.subr.bf16.mxu0 0
      %693 = vmatpush2.bf16.xpose.msra.mxu0 0
      %694 = vmatprep.subr.bf16.mxu0 0
      %695 = vmatpush2.bf16.xpose.msra.mxu0 0
      %696 = vmatprep.subr.bf16.mxu0 0
      %697 = vmatpush2.bf16.xpose.msra.mxu0 0
      %698 = vmatprep.subr.bf16.mxu0 0
      %699 = vmatpush2.bf16.xpose.msra.mxu0 0
      %700 = vmatprep.subr.bf16.mxu0 0
      %701 = vmatpush2.bf16.xpose.msra.mxu0 0
      %702 = vmatprep.subr.bf16.mxu0 0
      %703 = vmatpush2.bf16.xpose.msra.mxu0 0
      %704 = vmatprep.subr.bf16.mxu0 0
      %705 = vmatpush2.bf16.xpose.msra.mxu0 0
      %706 = vmatprep.subr.bf16.mxu0 0
      %707 = vmatpush2.bf16.xpose.msra.mxu0 0
      %708 = vmatprep.mubr.bf16.mxu0 0
      %709 = vmatmul.mubr.bf16.gmra.mxu0 %v671
      %v710 = vpop.f32.mrf.mxu0
      %v711 = vadd.f32 0.0, %v710
      %v712 = vpop.f32.mrf.mxu0
      %v713 = vpop.f32.mrf.mxu0
      %v714 = vpop.f32.mrf.mxu0
      %715 = vdwg.mxu0
      %v716 = vsel %vm490, %v711, -inf
      %717 = vmax.xlane.f32.xlu0 %v716
      %v718 = vpop.xlane.xlu0 %717
      %v719 = vsub.f32 %v711, %v718
      %v720 = vmul.f32 %v719, 1.442695
      %v721 = vpow.pop %v720
      %v722 = vsel %vm490, %v721, 0.0
      %723 = vadd.xlane.f32.xlu0 %v722
      %v724 = vpop.xlane.xlu0 %723
      %v725 = vrcp.pop %v724
      %v726 = vmul.f32 %v721, %v725
      %v727 = vpack.c.bf16 %v726, %v726
      %728 = vrot.lane.b32.xlu0 %v442, 80
      %v729 = vpop.permute.xlu0 %728
      %v731 = vsel %vm443, %v727, 0
      %v734 = vsel %vm509, %v729, 0
      %736 = vmatprep.subr.bf16.mxu0 0
      %737 = vmatpush1.bf16.msra.mxu0 0
      %738 = vmatprep.subr.bf16.mxu0 0
      %739 = vmatpush1.bf16.msra.mxu0 0
      %740 = vmatprep.subr.bf16.mxu0 0
      %741 = vmatpush1.bf16.msra.mxu0 0
      %742 = vmatprep.subr.bf16.mxu0 0
      %743 = vmatpush1.bf16.msra.mxu0 0
      %744 = vmatprep.subr.bf16.mxu0 0
      %745 = vmatpush1.bf16.msra.mxu0 0
      %746 = vmatprep.subr.bf16.mxu0 0
      %747 = vmatpush1.bf16.msra.mxu0 0
      %748 = vmatprep.subr.bf16.mxu0 0
      %749 = vmatpush1.bf16.msra.mxu0 0
      %750 = vmatprep.subr.bf16.mxu0 0
      %751 = vmatpush1.bf16.msra.mxu0 %v734
      %752 = vmatprep.subr.bf16.mxu0 0
      %753 = vmatpush2.bf16.msra.mxu0 0
      %754 = vmatprep.subr.bf16.mxu0 0
      %755 = vmatpush2.bf16.msra.mxu0 0
      %756 = vmatprep.subr.bf16.mxu0 0
      %757 = vmatpush2.bf16.msra.mxu0 0
      %758 = vmatprep.subr.bf16.mxu0 0
      %759 = vmatpush2.bf16.msra.mxu0 0
      %760 = vmatprep.subr.bf16.mxu0 0
      %761 = vmatpush2.bf16.msra.mxu0 0
      %762 = vmatprep.subr.bf16.mxu0 0
      %763 = vmatpush2.bf16.msra.mxu0 0
      %764 = vmatprep.subr.bf16.mxu0 0
      %765 = vmatpush2.bf16.msra.mxu0 0
      %766 = vmatprep.subr.bf16.mxu0 0
      %767 = vmatpush2.bf16.msra.mxu0 0
      %768 = vmatprep.mubr.bf16.mxu0 0
      %769 = vmatmul.mubr.bf16.gmra.mxu0 %v731
      %v770 = vpop.f32.mrf.mxu0
      %v771 = vadd.f32 0.0, %v770
      %v772 = vpop.f32.mrf.mxu0
      %v773 = vpop.f32.mrf.mxu0
      %v774 = vpop.f32.mrf.mxu0
      %775 = vdwg.mxu0
      %v776 = vpack.c.bf16 %v771, %v771
      %777 = vrot.lane.b32.xlu0 %v441, 104
      %v778 = vpop.permute.xlu0 %777
      %779 = vrot.lane.b32.xlu0 %v442, 104
      %v780 = vpop.permute.xlu0 %779
      %v782 = vsel %vm443, %v778, 0
      %v785 = vsel %vm443, %v780, 0
      %787 = vmatprep.subr.bf16.mxu0 0
      %788 = vmatpush1.bf16.xpose.msra.mxu0 0
      %789 = vmatprep.subr.bf16.mxu0 0
      %790 = vmatpush1.bf16.xpose.msra.mxu0 0
      %791 = vmatprep.subr.bf16.mxu0 0
      %792 = vmatpush1.bf16.xpose.msra.mxu0 0
      %793 = vmatprep.subr.bf16.mxu0 0
      %794 = vmatpush1.bf16.xpose.msra.mxu0 0
      %795 = vmatprep.subr.bf16.mxu0 0
      %796 = vmatpush1.bf16.xpose.msra.mxu0 0
      %797 = vmatprep.subr.bf16.mxu0 0
      %798 = vmatpush1.bf16.xpose.msra.mxu0 0
      %799 = vmatprep.subr.bf16.mxu0 0
      %800 = vmatpush1.bf16.xpose.msra.mxu0 0
      %801 = vmatprep.subr.bf16.mxu0 0
      %802 = vmatpush1.bf16.xpose.msra.mxu0 %v785
      %803 = vmatprep.subr.bf16.mxu0 0
      %804 = vmatpush2.bf16.xpose.msra.mxu0 0
      %805 = vmatprep.subr.bf16.mxu0 0
      %806 = vmatpush2.bf16.xpose.msra.mxu0 0
      %807 = vmatprep.subr.bf16.mxu0 0
      %808 = vmatpush2.bf16.xpose.msra.mxu0 0
      %809 = vmatprep.subr.bf16.mxu0 0
      %810 = vmatpush2.bf16.xpose.msra.mxu0 0
      %811 = vmatprep.subr.bf16.mxu0 0
      %812 = vmatpush2.bf16.xpose.msra.mxu0 0
      %813 = vmatprep.subr.bf16.mxu0 0
      %814 = vmatpush2.bf16.xpose.msra.mxu0 0
      %815 = vmatprep.subr.bf16.mxu0 0
      %816 = vmatpush2.bf16.xpose.msra.mxu0 0
      %817 = vmatprep.subr.bf16.mxu0 0
      %818 = vmatpush2.bf16.xpose.msra.mxu0 0
      %819 = vmatprep.mubr.bf16.mxu0 0
      %820 = vmatmul.mubr.bf16.gmra.mxu0 %v782
      %v821 = vpop.f32.mrf.mxu0
      %v822 = vadd.f32 0.0, %v821
      %v823 = vpop.f32.mrf.mxu0
      %v824 = vpop.f32.mrf.mxu0
      %v825 = vpop.f32.mrf.mxu0
      %826 = vdwg.mxu0
      %v827 = vsel %vm490, %v822, -inf
      %828 = vmax.xlane.f32.xlu0 %v827
      %v829 = vpop.xlane.xlu0 %828
      %v830 = vsub.f32 %v822, %v829
      %v831 = vmul.f32 %v830, 1.442695
      %v832 = vpow.pop %v831
      %v833 = vsel %vm490, %v832, 0.0
      %834 = vadd.xlane.f32.xlu0 %v833
      %v835 = vpop.xlane.xlu0 %834
      %v836 = vrcp.pop %v835
      %v837 = vmul.f32 %v832, %v836
      %v838 = vpack.c.bf16 %v837, %v837
      %839 = vrot.lane.b32.xlu0 %v442, 72
      %v840 = vpop.permute.xlu0 %839
      %v842 = vsel %vm443, %v838, 0
      %v845 = vsel %vm509, %v840, 0
      %847 = vmatprep.subr.bf16.mxu0 0
      %848 = vmatpush1.bf16.msra.mxu0 0
      %849 = vmatprep.subr.bf16.mxu0 0
      %850 = vmatpush1.bf16.msra.mxu0 0
      %851 = vmatprep.subr.bf16.mxu0 0
      %852 = vmatpush1.bf16.msra.mxu0 0
      %853 = vmatprep.subr.bf16.mxu0 0
      %854 = vmatpush1.bf16.msra.mxu0 0
      %855 = vmatprep.subr.bf16.mxu0 0
      %856 = vmatpush1.bf16.msra.mxu0 0
      %857 = vmatprep.subr.bf16.mxu0 0
      %858 = vmatpush1.bf16.msra.mxu0 0
      %859 = vmatprep.subr.bf16.mxu0 0
      %860 = vmatpush1.bf16.msra.mxu0 0
      %861 = vmatprep.subr.bf16.mxu0 0
      %862 = vmatpush1.bf16.msra.mxu0 %v845
      %863 = vmatprep.subr.bf16.mxu0 0
      %864 = vmatpush2.bf16.msra.mxu0 0
      %865 = vmatprep.subr.bf16.mxu0 0
      %866 = vmatpush2.bf16.msra.mxu0 0
      %867 = vmatprep.subr.bf16.mxu0 0
      %868 = vmatpush2.bf16.msra.mxu0 0
      %869 = vmatprep.subr.bf16.mxu0 0
      %870 = vmatpush2.bf16.msra.mxu0 0
      %871 = vmatprep.subr.bf16.mxu0 0
      %872 = vmatpush2.bf16.msra.mxu0 0
      %873 = vmatprep.subr.bf16.mxu0 0
      %874 = vmatpush2.bf16.msra.mxu0 0
      %875 = vmatprep.subr.bf16.mxu0 0
      %876 = vmatpush2.bf16.msra.mxu0 0
      %877 = vmatprep.subr.bf16.mxu0 0
      %878 = vmatpush2.bf16.msra.mxu0 0
      %879 = vmatprep.mubr.bf16.mxu0 0
      %880 = vmatmul.mubr.bf16.gmra.mxu0 %v842
      %v881 = vpop.f32.mrf.mxu0
      %v882 = vadd.f32 0.0, %v881
      %v883 = vpop.f32.mrf.mxu0
      %v884 = vpop.f32.mrf.mxu0
      %v885 = vpop.f32.mrf.mxu0
      %886 = vdwg.mxu0
      %v887 = vpack.c.bf16 %v882, %v882
      %889 = vrot.lane.b32.xlu0 %v665, 8
      %v890 = vpop.permute.xlu0 %889
      %892 = vrot.lane.b32.xlu0 %v776, 16
      %v893 = vpop.permute.xlu0 %892
      %895 = vrot.lane.b32.xlu0 %v887, 24
      %v896 = vpop.permute.xlu0 %895
      %v899 = vsel %vm443, %v553, %v890
      %vm900 = vcmask 130048
      %v902 = vsel %vm900, %v899, %v893
      %vm903 = vcmask 195584
      %v905 = vsel %vm903, %v902, %v896
      %v906 = vld [vmem:[%s4] sm:$0xf]
      %v907 = vld [vmem:[%s4 + $0x4] sm:$0xf]
      %v908 = vld [vmem:[%s4 + $0x8] sm:$0xf]
      %v909 = vld [vmem:[%s4 + $0xc] sm:$0xf]
      %v910 = vld [vmem:[%s5] sm:$0x1]
      %v912 = vlaneseq
      %v913 = vshrl.u32 %v912, 7
      %v914 = vsub.s32 0, %v913
      %v915 = vrot.slane %v910, %v914
      %v921 = vunpack.c.l.b16 %v906
      %v922 = vunpack.c.l.b16 %v907
      %v923 = vunpack.c.l.b16 %v908
      %v924 = vunpack.c.l.b16 %v909
      %v925 = vpack.c.b16 %v922, %v921
      %v926 = vpack.c.b16 %v924, %v923
      %v929 = vsel %vm343, %v905, 0
      %931 = vmatprep.subr.bf16.mxu0 0
      %932 = vmatpush1.bf16.msra.mxu0 0
      %933 = vmatprep.subr.bf16.mxu0 0
      %934 = vmatpush1.bf16.msra.mxu0 0
      %935 = vmatprep.subr.bf16.mxu0 0
      %936 = vmatpush1.bf16.msra.mxu0 0
      %937 = vmatprep.subr.bf16.mxu0 0
      %938 = vmatpush1.bf16.msra.mxu0 0
      %939 = vmatprep.subr.bf16.mxu0 0
      %940 = vmatpush1.bf16.msra.mxu0 0
      %941 = vmatprep.subr.bf16.mxu0 0
      %942 = vmatpush1.bf16.msra.mxu0 0
      %943 = vmatprep.subr.bf16.mxu0 0
      %944 = vmatpush1.bf16.msra.mxu0 %v926
      %945 = vmatprep.subr.bf16.mxu0 0
      %946 = vmatpush1.bf16.msra.mxu0 %v925
      %947 = vmatprep.subr.bf16.mxu0 0
      %948 = vmatpush2.bf16.msra.mxu0 0
      %949 = vmatprep.subr.bf16.mxu0 0
      %950 = vmatpush2.bf16.msra.mxu0 0
      %951 = vmatprep.subr.bf16.mxu0 0
      %952 = vmatpush2.bf16.msra.mxu0 0
      %953 = vmatprep.subr.bf16.mxu0 0
      %954 = vmatpush2.bf16.msra.mxu0 0
      %955 = vmatprep.subr.bf16.mxu0 0
      %956 = vmatpush2.bf16.msra.mxu0 0
      %957 = vmatprep.subr.bf16.mxu0 0
      %958 = vmatpush2.bf16.msra.mxu0 0
      %959 = vmatprep.subr.bf16.mxu0 0
      %960 = vmatpush2.bf16.msra.mxu0 0
      %961 = vmatprep.subr.bf16.mxu0 0
      %962 = vmatpush2.bf16.msra.mxu0 0
      %963 = vmatprep.mubr.bf16.mxu0 0
      %964 = vmatmul.mubr.bf16.gmra.mxu0 %v929
      %v965 = vpop.f32.mrf.mxu0
      %v966 = vadd.f32 %v915, %v965
      %v967 = vpop.f32.mrf.mxu0
      %v968 = vpop.f32.mrf.mxu0
      %v969 = vpop.f32.mrf.mxu0
      %970 = vdwg.mxu0
      %v971 = vunpack.c.l.bf16 %v319
      %v972 = vadd.f32 %v971, %v966
      %vm973 = vcmask 257024
      %v974 = vsel %vm973, %v972, 0.0
      %975 = vadd.xlane.f32.xlu0 %v974
      %v976 = vpop.xlane.xlu0 %975
      %v977 = vrcp.pop 32.0
      %v978 = vmul.f32 %v976, %v977
      %v979 = vsub.f32 %v972, %v978
      %v980 = vmul.f32 %v979, %v979
      %v981 = vsel %vm973, %v980, 0.0
      %982 = vadd.xlane.f32.xlu0 %v981
      %v983 = vpop.xlane.xlu0 %982
      %v984 = vmul.f32 %v983, %v977
      %v985 = vadd.f32 %v984, 1e-05
      %v986 = vrsqrt.pop %v985
      %v987 = vmul.f32 %v979, %v986
      %v988 = vld [vmem:[%s6] sm:$0x1]
      %v990 = vlaneseq
      %v991 = vshrl.u32 %v990, 7
      %v992 = vsub.s32 0, %v991
      %v993 = vrot.slane %v988, %v992
      %v995 = vmul.f32 %v987, %v993
      %v996 = vld [vmem:[%s7] sm:$0x1]
      %v998 = vlaneseq
      %v999 = vshrl.u32 %v998, 7
      %v1000 = vsub.s32 0, %v999
      %v1001 = vrot.slane %v996, %v1000
      %v1003 = vadd.f32 %v995, %v1001
      %v1004 = vpack.c.bf16 %v1003, %v1003
      %vm1005 = vcmask 254976
      %1006 = vst.msk [vmem:[%s317] sm:$0x3] %vm1005, %v1004
      %p1007 = scmp.lt.s32.totalorder %s19, 1
      %s1008 = scalar_select %p1007, %s19, 1
      %s1009 = smul.addr %s1008, 2
      %s1010 = scalar_lea.vmem %s8, %s1009
      // Predicated region
      $region53: #{transformer_forward.16} parent=51 // pred_check
        %p1011 = pneg %p215
      $region54: #{transformer_forward.16} parent=51 // pred_check_branch
        %1013 = sbr.rel (%p1011) target = $region56
      $region55: #{transformer_forward.16} parent=51 // pred_region
        _
      $region56: #{transformer_forward.16} parent=51 // pred_fallthru
        _
    $region52: #{transformer_forward.16} parent=5 // pred_fallthru
      _
    %p1014 = scmp.le.s32.totalorder 2, %s14
    // Predicated region
    $region57: #{transformer_forward.16} parent=5 // pred_check
      %p1015 = pneg %p1014
    $region58: #{transformer_forward.16} parent=5 // pred_check_branch
      %1017 = sbr.rel (%p1015) target = $region60
    $region59: #{transformer_forward.16} parent=5 // pred_region
      %s1018 = ssub.s32 %s14, 2
      // Predicated region
      $region61: #{transformer_forward.16} parent=59 // pred_check
        %p1019 = pneg %p221
      $region62: #{transformer_forward.16} parent=59 // pred_check_branch
        %1021 = sbr.rel (%p1019) target = $region64
      $region63: #{transformer_forward.16} parent=59 // pred_region
        %p1022 = scmp.lt.s32.totalorder %s20, 1
        %s1023 = scalar_select %p1022, %s20, 1
        %s1024 = smul.addr %s1023, 2
        %s1025 = scalar_lea.vmem %s8, %s1024
      $region64: #{transformer_forward.16} parent=59 // pred_fallthru
        _
    $region60: #{transformer_forward.16} parent=5 // pred_fallthru
      _
  $region6: #{transformer_forward.16} parent=0 // loop_footer
    %s18 = sadd.s32 1, %s14
  $region7: #{transformer_forward.16} parent=0 // loop_footer_branch
    %13 = sbr.rel target = $region3
  $region8: #{transformer_forward.16} parent=0 // loop_exit
    _

// kernel: transformer_forward.17
$region0: #{transformer_forward.17}
  #allocation0 [shape = 'u32[]', space=smem, size = 0x4, offset = 0x4, fixed_abs, tag = 'smem constant byte address 0x4 - core index']
  #allocation1 [shape = 'u32[144,128]{1,0:T(1,128)}', space=vmem, size = 0x12000, scoped, tag = 'internal scratch']
  %s0 = inlined_call_operand.vmem [shape: bf16[8,32], index: 0, kind: input, shape index: {}]
  %s1 = inlined_call_operand.vmem [shape: bf16[32,64], index: 1, kind: input, shape index: {}]
  %s2 = inlined_call_operand.vmem [shape: f32[1,64], index: 2, kind: input, shape index: {}]
  %s3 = inlined_call_operand.vmem [shape: bf16[64,32], index: 3, kind: input, shape index: {}]
  %s4 = inlined_call_operand.vmem [shape: f32[1,32], index: 4, kind: input, shape index: {}]
  %s5 = inlined_call_operand.vmem [shape: f32[1,32], index: 5, kind: input, shape index: {}]
  %s6 = inlined_call_operand.vmem [shape: f32[1,32], index: 6, kind: input, shape index: {}]
  %s7 = inlined_call_operand.vmem [shape: bf16[8,32], index: 7, kind: output, shape index: {}]
  %s8 = sld [smem:[#allocation0]]
  $region38: #{transformer_forward.17} parent=0
    _
  %s10 = ssub.s32 1, %s8
  %s11 = scalar_select 0, %s10, %s8
  // Predicated region
  $region2: #{transformer_forward.17} parent=0 // pred_check
    _
  $region3: #{transformer_forward.17} parent=0 // pred_check_branch
    %13 = sbr.rel (0) target = $region5
  $region4: #{transformer_forward.17} parent=0 // pred_region
    _
  $region5: #{transformer_forward.17} parent=0 // pred_fallthru
    _
  // Predicated region
  $region6: #{transformer_forward.17} parent=0 // pred_check
    _
  $region7: #{transformer_forward.17} parent=0 // pred_check_branch
    %15 = sbr.rel (0) target = $region9
  $region8: #{transformer_forward.17} parent=0 // pred_region
    _
  $region9: #{transformer_forward.17} parent=0 // pred_fallthru
    _
  // Predicated region
  $region10: #{transformer_forward.17} parent=0 // pred_check
    _
  $region11: #{transformer_forward.17} parent=0 // pred_check_branch
    %17 = sbr.rel (0) target = $region13
  $region12: #{transformer_forward.17} parent=0 // pred_region
    _
  $region13: #{transformer_forward.17} parent=0 // pred_fallthru
    _
  // Predicated region
  $region14: #{transformer_forward.17} parent=0 // pred_check
    _
  $region15: #{transformer_forward.17} parent=0 // pred_check_branch
    %19 = sbr.rel (0) target = $region17
  $region16: #{transformer_forward.17} parent=0 // pred_region
    _
  $region17: #{transformer_forward.17} parent=0 // pred_fallthru
    _
  // Predicated region
  $region18: #{transformer_forward.17} parent=0 // pred_check
    _
  $region19: #{transformer_forward.17} parent=0 // pred_check_branch
    %21 = sbr.rel (0) target = $region21
  $region20: #{transformer_forward.17} parent=0 // pred_region
    _
  $region21: #{transformer_forward.17} parent=0 // pred_fallthru
    _
  // Predicated region
  $region22: #{transformer_forward.17} parent=0 // pred_check
    _
  $region23: #{transformer_forward.17} parent=0 // pred_check_branch
    %23 = sbr.rel (0) target = $region25
  $region24: #{transformer_forward.17} parent=0 // pred_region
    _
  $region25: #{transformer_forward.17} parent=0 // pred_fallthru
    _
  // Predicated region
  $region26: #{transformer_forward.17} parent=0 // pred_check
    _
  $region27: #{transformer_forward.17} parent=0 // pred_check_branch
    %25 = sbr.rel (0) target = $region29
  $region28: #{transformer_forward.17} parent=0 // pred_region
    _
  $region29: #{transformer_forward.17} parent=0 // pred_fallthru
    _
  %v27 = vld [vmem:[%s0] sm:$0xf]
  %v28 = vld [vmem:[%s1] sm:$0xf]
  %v29 = vld [vmem:[%s1 + $0x4] sm:$0xf]
  %v30 = vld [vmem:[%s1 + $0x8] sm:$0xf]
  %v31 = vld [vmem:[%s1 + $0xc] sm:$0xf]
  %v32 = vld [vmem:[%s2] sm:$0x1]
  %v34 = vlaneseq
  %v35 = vshrl.u32 %v34, 7
  %v36 = vsub.s32 0, %v35
  %v37 = vrot.slane %v32, %v36
  %v43 = vunpack.c.l.b16 %v28
  %v44 = vunpack.c.l.b16 %v29
  %v45 = vunpack.c.l.b16 %v30
  %v46 = vunpack.c.l.b16 %v31
  %v47 = vpack.c.b16 %v44, %v43
  %v48 = vpack.c.b16 %v46, %v45
  %vm51 = vcmask 261120
  %v53 = vsel %vm51, %v27, 0
  %55 = vmatprep.subr.bf16.mxu0 0
  %56 = vmatpush1.bf16.msra.mxu0 0
  %57 = vmatprep.subr.bf16.mxu0 0
  %58 = vmatpush1.bf16.msra.mxu0 0
  %59 = vmatprep.subr.bf16.mxu0 0
  %60 = vmatpush1.bf16.msra.mxu0 0
  %61 = vmatprep.subr.bf16.mxu0 0
  %62 = vmatpush1.bf16.msra.mxu0 0
  %63 = vmatprep.subr.bf16.mxu0 0
  %64 = vmatpush1.bf16.msra.mxu0 0
  %65 = vmatprep.subr.bf16.mxu0 0
  %66 = vmatpush1.bf16.msra.mxu0 0
  %67 = vmatprep.subr.bf16.mxu0 0
  %68 = vmatpush1.bf16.msra.mxu0 %v48
  %69 = vmatprep.subr.bf16.mxu0 0
  %70 = vmatpush1.bf16.msra.mxu0 %v47
  %71 = vmatprep.subr.bf16.mxu0 0
  %72 = vmatpush2.bf16.msra.mxu0 0
  %73 = vmatprep.subr.bf16.mxu0 0
  %74 = vmatpush2.bf16.msra.mxu0 0
  %75 = vmatprep.subr.bf16.mxu0 0
  %76 = vmatpush2.bf16.msra.mxu0 0
  %77 = vmatprep.subr.bf16.mxu0 0
  %78 = vmatpush2.bf16.msra.mxu0 0
  %79 = vmatprep.subr.bf16.mxu0 0
  %80 = vmatpush2.bf16.msra.mxu0 0
  %81 = vmatprep.subr.bf16.mxu0 0
  %82 = vmatpush2.bf16.msra.mxu0 0
  %83 = vmatprep.subr.bf16.mxu0 0
  %84 = vmatpush2.bf16.msra.mxu0 0
  %85 = vmatprep.subr.bf16.mxu0 0
  %86 = vmatpush2.bf16.msra.mxu0 0
  %87 = vmatprep.mubr.bf16.mxu0 0
  %88 = vmatmul.mubr.bf16.gmra.mxu0 %v53
  %v89 = vpop.f32.mrf.mxu0
  %v90 = vadd.f32 %v37, %v89
  %v91 = vpop.f32.mrf.mxu0
  %v92 = vpop.f32.mrf.mxu0
  %v93 = vpop.f32.mrf.mxu0
  %94 = vdwg.mxu0
  %v95 = vmax.f32 %v90, 0.0
  %v96 = vpack.c.bf16 %v95, %v95
  %v97 = vld [vmem:[%s3] sm:$0xf]
  %v98 = vld [vmem:[%s3 + $0x4] sm:$0xf]
  %v99 = vld [vmem:[%s3 + $0x8] sm:$0xf]
  %v100 = vld [vmem:[%s3 + $0xc] sm:$0xf]
  %v101 = vld [vmem:[%s3 + $0x10] sm:$0xf]
  %v102 = vld [vmem:[%s3 + $0x14] sm:$0xf]
  %v103 = vld [vmem:[%s3 + $0x18] sm:$0xf]
  %v104 = vld [vmem:[%s3 + $0x1c] sm:$0xf]
  %v105 = vld [vmem:[%s4] sm:$0x1]
  %v107 = vlaneseq
  %v108 = vshrl.u32 %v107, 7
  %v109 = vsub.s32 0, %v108
  %v110 = vrot.slane %v105, %v109
  %v120 = vunpack.c.l.b16 %v97
  %v121 = vunpack.c.l.b16 %v98
  %v122 = vunpack.c.l.b16 %v99
  %v123 = vunpack.c.l.b16 %v100
  %v124 = vunpack.c.l.b16 %v101
  %v125 = vunpack.c.l.b16 %v102
  %v126 = vunpack.c.l.b16 %v103
  %v127 = vunpack.c.l.b16 %v104
  %v128 = vpack.c.b16 %v121, %v120
  %v129 = vpack.c.b16 %v123, %v122
  %v130 = vpack.c.b16 %v125, %v124
  %v131 = vpack.c.b16 %v127, %v126
  %vm136 = vcmask 523264
  %v138 = vsel %vm136, %v96, 0
  %140 = vmatprep.subr.bf16.mxu0 0
  %141 = vmatpush1.bf16.msra.mxu0 0
  %142 = vmatprep.subr.bf16.mxu0 0
  %143 = vmatpush1.bf16.msra.mxu0 0
  %144 = vmatprep.subr.bf16.mxu0 0
  %145 = vmatpush1.bf16.msra.mxu0 0
  %146 = vmatprep.subr.bf16.mxu0 0
  %147 = vmatpush1.bf16.msra.mxu0 0
  %148 = vmatprep.subr.bf16.mxu0 0
  %149 = vmatpush1.bf16.msra.mxu0 %v131
  %150 = vmatprep.subr.bf16.mxu0 0
  %151 = vmatpush1.bf16.msra.mxu0 %v130
  %152 = vmatprep.subr.bf16.mxu0 0
  %153 = vmatpush1.bf16.msra.mxu0 %v129
  %154 = vmatprep.subr.bf16.mxu0 0
  %155 = vmatpush1.bf16.msra.mxu0 %v128
  %156 = vmatprep.subr.bf16.mxu0 0
  %157 = vmatpush2.bf16.msra.mxu0 0
  %158 = vmatprep.subr.bf16.mxu0 0
  %159 = vmatpush2.bf16.msra.mxu0 0
  %160 = vmatprep.subr.bf16.mxu0 0
  %161 = vmatpush2.bf16.msra.mxu0 0
  %162 = vmatprep.subr.bf16.mxu0 0
  %163 = vmatpush2.bf16.msra.mxu0 0
  %164 = vmatprep.subr.bf16.mxu0 0
  %165 = vmatpush2.bf16.msra.mxu0 0
  %166 = vmatprep.subr.bf16.mxu0 0
  %167 = vmatpush2.bf16.msra.mxu0 0
  %168 = vmatprep.subr.bf16.mxu0 0
  %169 = vmatpush2.bf16.msra.mxu0 0
  %170 = vmatprep.subr.bf16.mxu0 0
  %171 = vmatpush2.bf16.msra.mxu0 0
  %172 = vmatprep.mubr.bf16.mxu0 0
  %173 = vmatmul.mubr.bf16.gmra.mxu0 %v138
  %v174 = vpop.f32.mrf.mxu0
  %v175 = vadd.f32 %v110, %v174
  %v176 = vpop.f32.mrf.mxu0
  %v177 = vpop.f32.mrf.mxu0
  %v178 = vpop.f32.mrf.mxu0
  %179 = vdwg.mxu0
  %v180 = vunpack.c.l.bf16 %v27
  %v181 = vadd.f32 %v180, %v175
  %v182 = vsel %vm51, %v181, 0.0
  %183 = vadd.xlane.f32.xlu0 %v182
  %v184 = vpop.xlane.xlu0 %183
  %v185 = vrcp.pop 32.0
  %v186 = vmul.f32 %v184, %v185
  %v187 = vsub.f32 %v181, %v186
  %v188 = vmul.f32 %v187, %v187
  %v189 = vsel %vm51, %v188, 0.0
  %190 = vadd.xlane.f32.xlu0 %v189
  %v191 = vpop.xlane.xlu0 %190
  %v192 = vmul.f32 %v191, %v185
  %v193 = vadd.f32 %v192, 1e-05
  %v194 = vrsqrt.pop %v193
  %v195 = vmul.f32 %v187, %v194
  %v196 = vld [vmem:[%s5] sm:$0x1]
  %v198 = vlaneseq
  %v199 = vshrl.u32 %v198, 7
  %v200 = vsub.s32 0, %v199
  %v201 = vrot.slane %v196, %v200
  %v203 = vmul.f32 %v195, %v201
  %v204 = vld [vmem:[%s6] sm:$0x1]
  %v206 = vlaneseq
  %v207 = vshrl.u32 %v206, 7
  %v208 = vsub.s32 0, %v207
  %v209 = vrot.slane %v204, %v208
  %v211 = vadd.f32 %v203, %v209
  %v212 = vpack.c.bf16 %v211, %v211
  %vm213 = vcmask 257024
  %214 = vst.msk [vmem:[%s7] sm:$0xf] %vm213, %v212
  // Predicated region
  $region30: #{transformer_forward.17} parent=0 // pred_check
    _
  $region31: #{transformer_forward.17} parent=0 // pred_check_branch
    %216 = sbr.rel (0) target = $region33
  $region32: #{transformer_forward.17} parent=0 // pred_region
    _
  $region33: #{transformer_forward.17} parent=0 // pred_fallthru
    _
  // Predicated region
  $region34: #{transformer_forward.17} parent=0 // pred_check
    _
  $region35: #{transformer_forward.17} parent=0 // pred_check_branch
    %218 = sbr.rel (0) target = $region37
  $region36: #{transformer_forward.17} parent=0 // pred_region
    _
  $region37: #{transformer_forward.17} parent=0 // pred_fallthru
    _

// kernel: transformer_forward.21
$region0: #{transformer_forward.21}
  #allocation0 [shape = 'u32[]', space=smem, size = 0x4, offset = 0x4, fixed_abs, tag = 'smem constant byte address 0x4 - core index']
  #allocation1 [shape = 'u32[144,128]{1,0:T(1,128)}', space=vmem, size = 0x12000, scoped, tag = 'internal scratch']
  %s0 = inlined_call_operand.vmem [shape: bf16[8,32], index: 0, kind: input, shape index: {}]
  %s1 = inlined_call_operand.vmem [shape: bf16[32,32], index: 1, kind: input, shape index: {}]
  %s2 = inlined_call_operand.vmem [shape: f32[1,32], index: 2, kind: input, shape index: {}]
  %s3 = inlined_call_operand.hbm [shape: f32[8,32], index: 3, kind: output, shape index: {}]
  %s4 = sld [smem:[#allocation0]]
  $region22: #{transformer_forward.21} parent=0
    _
  %s6 = ssub.s32 1, %s4
  %s7 = scalar_select 0, %s6, %s4
  $region1: #{transformer_forward.21} parent=0
    #allocation2 [shape = 'u8[4096]{0}', space=vmem, size = 0x1000, scoped, tag = 'output window, operand 0, single buffered']
    #allocation3 [shape = 's32[1]{0}', space=sflag, size = 0x4, scoped, tag = 'scoped memory for transformer_forward.21']
    %8 = vsyncpa [#allocation3], 0
    // Predicated region
    $region2: #{transformer_forward.21} parent=1 // pred_check
      _
    $region3: #{transformer_forward.21} parent=1 // pred_check_branch
      %10 = sbr.rel (0) target = $region5
    $region4: #{transformer_forward.21} parent=1 // pred_region
      _
    $region5: #{transformer_forward.21} parent=1 // pred_fallthru
      _
    // Predicated region
    $region6: #{transformer_forward.21} parent=1 // pred_check
      _
    $region7: #{transformer_forward.21} parent=1 // pred_check_branch
      %12 = sbr.rel (0) target = $region9
    $region8: #{transformer_forward.21} parent=1 // pred_region
      _
    $region9: #{transformer_forward.21} parent=1 // pred_fallthru
      _
    // Predicated region
    $region10: #{transformer_forward.21} parent=1 // pred_check
      _
    $region11: #{transformer_forward.21} parent=1 // pred_check_branch
      %14 = sbr.rel (0) target = $region13
    $region12: #{transformer_forward.21} parent=1 // pred_region
      _
    $region13: #{transformer_forward.21} parent=1 // pred_fallthru
      _
    %v16 = vld [vmem:[%s0] sm:$0xf]
    %v17 = vld [vmem:[%s1] sm:$0xf]
    %v18 = vld [vmem:[%s1 + $0x4] sm:$0xf]
    %v19 = vld [vmem:[%s1 + $0x8] sm:$0xf]
    %v20 = vld [vmem:[%s1 + $0xc] sm:$0xf]
    %v21 = vld [vmem:[%s2] sm:$0x1]
    %v23 = vlaneseq
    %v24 = vshrl.u32 %v23, 7
    %v25 = vsub.s32 0, %v24
    %v26 = vrot.slane %v21, %v25
    %v32 = vunpack.c.l.b16 %v17
    %v33 = vunpack.c.l.b16 %v18
    %v34 = vunpack.c.l.b16 %v19
    %v35 = vunpack.c.l.b16 %v20
    %v36 = vpack.c.b16 %v33, %v32
    %v37 = vpack.c.b16 %v35, %v34
    %vm40 = vcmask 261120
    %v42 = vsel %vm40, %v16, 0
    %44 = vmatprep.subr.bf16.mxu0 0
    %45 = vmatpush1.bf16.msra.mxu0 0
    %46 = vmatprep.subr.bf16.mxu0 0
    %47 = vmatpush1.bf16.msra.mxu0 0
    %48 = vmatprep.subr.bf16.mxu0 0
    %49 = vmatpush1.bf16.msra.mxu0 0
    %50 = vmatprep.subr.bf16.mxu0 0
    %51 = vmatpush1.bf16.msra.mxu0 0
    %52 = vmatprep.subr.bf16.mxu0 0
    %53 = vmatpush1.bf16.msra.mxu0 0
    %54 = vmatprep.subr.bf16.mxu0 0
    %55 = vmatpush1.bf16.msra.mxu0 0
    %56 = vmatprep.subr.bf16.mxu0 0
    %57 = vmatpush1.bf16.msra.mxu0 %v37
    %58 = vmatprep.subr.bf16.mxu0 0
    %59 = vmatpush1.bf16.msra.mxu0 %v36
    %60 = vmatprep.subr.bf16.mxu0 0
    %61 = vmatpush2.bf16.msra.mxu0 0
    %62 = vmatprep.subr.bf16.mxu0 0
    %63 = vmatpush2.bf16.msra.mxu0 0
    %64 = vmatprep.subr.bf16.mxu0 0
    %65 = vmatpush2.bf16.msra.mxu0 0
    %66 = vmatprep.subr.bf16.mxu0 0
    %67 = vmatpush2.bf16.msra.mxu0 0
    %68 = vmatprep.subr.bf16.mxu0 0
    %69 = vmatpush2.bf16.msra.mxu0 0
    %70 = vmatprep.subr.bf16.mxu0 0
    %71 = vmatpush2.bf16.msra.mxu0 0
    %72 = vmatprep.subr.bf16.mxu0 0
    %73 = vmatpush2.bf16.msra.mxu0 0
    %74 = vmatprep.subr.bf16.mxu0 0
    %75 = vmatpush2.bf16.msra.mxu0 0
    %76 = vmatprep.mubr.bf16.mxu0 0
    %77 = vmatmul.mubr.bf16.gmra.mxu0 %v42
    %v78 = vpop.f32.mrf.mxu0
    %v79 = vadd.f32 %v26, %v78
    %v80 = vpop.f32.mrf.mxu0
    %v81 = vpop.f32.mrf.mxu0
    %v82 = vpop.f32.mrf.mxu0
    %83 = vdwg.mxu0
    %v84 = vsel %vm40, %v79, -inf
    %85 = vmax.xlane.f32.xlu0 %v84
    %v86 = vpop.xlane.xlu0 %85
    %v87 = vsub.f32 %v79, %v86
    %v88 = vmul.f32 %v87, 1.442695
    %v89 = vpow.pop %v88
    %v90 = vsel %vm40, %v89, 0.0
    %91 = vadd.xlane.f32.xlu0 %v90
    %v92 = vpop.xlane.xlu0 %91
    %v93 = vrcp.pop %v92
    %v94 = vmul.f32 %v89, %v93
    %95 = vst.msk [vmem:[#allocation2] sm:$0xff] %vm40, %v94
    // Predicated region
    $region14: #{transformer_forward.21} parent=1 // pred_check
      _
    $region15: #{transformer_forward.21} parent=1 // pred_check_branch
      %97 = sbr.rel (0) target = $region17
    $region16: #{transformer_forward.21} parent=1 // pred_region
      %s99 = ssub.s32 128, 128
      %100 = vsyncadd [#allocation3], %s99
      %s102 = sshll.u32 [#allocation2], 4
      %s103 = int_to_ptr.vmem [resolvable:$true] %s102
      %105 = dma.vmem_to_hbm [thread:$0]  %s103, 128, %s3, [#allocation3]
    $region17: #{transformer_forward.21} parent=1 // pred_fallthru
      _
    // Predicated region
    $region18: #{transformer_forward.21} parent=1 // pred_check
      _
    $region19: #{transformer_forward.21} parent=1 // pred_check_branch
      %107 = sbr.rel (0) target = $region21
    $region20: #{transformer_forward.21} parent=1 // pred_region
      %108 = dma.done [#allocation3], 128
    $region21: #{transformer_forward.21} parent=1 // pred_fallthru
      _
    %109 = vsyncpa [#allocation3], 1

</llo_original>
